<compile_context>
chip_gen: v7x
topology: tpu7x:2x2x1
jax: 0.10.0
libtpu: 0.0.40
codegen_flags: <defaults>
</compile_context>

<pallas_src>
import functools

import jax
import jax.numpy as jnp
from jax import lax
from jax.experimental import pallas as pl
from jax.experimental.pallas import tpu as pltpu


# -----------------------------------------------------------------------------
# Single fused kernel: whole Separation.forward for one batch element
# -----------------------------------------------------------------------------
def _separation_kernel(alphas_ref,                       # SMEM (2*dilate_X + 1,)
                       x_ref,                            # (1, B, L)
                       lnw_ref, lnb_ref,                 # (B, L), (B, L)
                       win_ref, bin_ref,                 # (B, B), (B, 1)
                       w1_ref, b1_ref,                   # (dX, H, B), (dX, H, 1)
                       dw_ref, db_ref,                   # (dX, H, P), (dX, H, 1)
                       wout_ref, bout_ref,               # (dX, B, H), (dX, B, 1)
                       wskip_ref, bskip_ref,             # (dX, Sc, H), (dX, Sc, 1)
                       whead_ref, bhead_ref,             # (B, Sc), (B, 1)
                       tri_ref, invcnt_ref,              # (L, L), (1, L)
                       o_ref,                            # (1, B, L)
                       *, dilate_X, P):
    f32 = jnp.float32
    org = x_ref[0]                                       # (B, L)
    B, L = org.shape
    H = w1_ref.shape[1]

    # ---- LayerNorm([B, L]) + Conv1d(B, B, 1) (input projection) ----------------
    inv_n = 1.0 / float(B * L)
    mean = jnp.sum(jnp.sum(org, axis=1, keepdims=True), axis=0, keepdims=True) * inv_n
    xc = org - mean
    var = jnp.sum(jnp.sum(xc * xc, axis=1, keepdims=True), axis=0, keepdims=True) * inv_n
    xn = xc * lax.rsqrt(var + 1e-5) * lnw_ref[...] + lnb_ref[...]
    y = jnp.dot(win_ref[...], xn, preferred_element_type=f32) + bin_ref[...]

    tri = tri_ref[...]                                   # tri[t, k] = [t <= k]
    inv_cnt = invcnt_ref[...]                            # 1 / (H * (k + 1))
    pos = lax.broadcasted_iota(jnp.int32, (1, L), 1)

    def prelu(v, a):
        return jnp.where(v >= 0.0, v, a * v)

    def cum_norm(v):                                     # cumulative (H x prefix) norm
        # Reduce over channels first (VPU), then a cheap (1,L)@(L,L) prefix matmul.
        s0 = jnp.sum(v, axis=0, keepdims=True)           # (1, L)
        s1 = jnp.sum(v * v, axis=0, keepdims=True)       # (1, L)
        cs = jnp.dot(s0, tri, preferred_element_type=f32)
        cs2 = jnp.dot(s1, tri, preferred_element_type=f32)
        m = cs * inv_cnt
        v_c = cs2 * inv_cnt - m * m
        return (v - m) * lax.rsqrt(v_c)                  # eps=0, gamma=1, beta=0

    def depthwise(v, dwj, dbj, d):
        # Per-channel dilated conv, zero 'same' padding, via lane rotations + masks.
        left_pad = (d * (P - 1)) // 2
        acc = None
        for p in range(P):
            off = p * d - left_pad                       # static Python int
            if off == 0:
                tap = v
            else:
                tap = pltpu.roll(v, shift=(-off) % L, axis=1)   # tap[:, l] = v[:, (l+off) % L]
                if off > 0:
                    valid = pos < (L - off)
                else:
                    valid = pos >= (-off)
                tap = jnp.where(valid, tap, 0.0)
            term = tap * dwj[:, p:p + 1]
            acc = term if acc is None else acc + term
        return acc + dbj

    # ---- dilate_X applications of the (shared-weight) OneDStack -----------------
    skip_sum = None
    for rep in range(dilate_X):
        last_rep = rep == dilate_X - 1
        for j in range(dilate_X):                        # block j, dilation 2**j
            d = 2 ** j
            a1 = alphas_ref[2 * j]
            a2 = alphas_ref[2 * j + 1]
            h = jnp.dot(w1_ref[j], y, preferred_element_type=f32) + b1_ref[j]
            h = cum_norm(prelu(h, a1))
            h = depthwise(h, dw_ref[j], db_ref[j], d)
            h = cum_norm(prelu(h, a2))
            y = jnp.dot(wout_ref[j], h, preferred_element_type=f32) + bout_ref[j] + y
            if last_rep:                                 # only the last repeat's skips are used
                sk = jnp.dot(wskip_ref[j], h, preferred_element_type=f32) + bskip_ref[j]
                skip_sum = sk if skip_sum is None else skip_sum + sk

    # ---- head: PReLU -> Conv1d(Sc, B, 1) -> sigmoid -> gate ----------------------
    s = prelu(skip_sum, alphas_ref[2 * dilate_X])
    g = jnp.dot(whead_ref[...], s, preferred_element_type=f32) + bhead_ref[...]
    o_ref[0] = (org * (1.0 / (1.0 + jnp.exp(-g)))).astype(o_ref.dtype)


# -----------------------------------------------------------------------------
# pallas_call wrapper
# -----------------------------------------------------------------------------
def separation_forward(x, params, *, dilate_X, P):
    """x: (batch, B, L) f32 -> (batch, B, L) f32, matching Separation.forward."""
    batch, B, L = x.shape
    blocks = params["blocks"]
    H = blocks[0]["w1"].shape[0]
    Sc = blocks[0]["wskip"].shape[0]

    def stack(name):
        return jnp.stack([bp[name] for bp in blocks])

    w1, b1 = stack("w1"), stack("b1")
    dw, db = stack("dw"), stack("db")
    wout, bout = stack("wout"), stack("bout")
    wskip, bskip = stack("wskip"), stack("bskip")

    alpha_list = []
    for bp in blocks:
        alpha_list += [bp["a1"], bp["a2"]]
    alpha_list.append(params["prelu_a"])
    alphas = jnp.stack([jnp.asarray(a, jnp.float32) for a in alpha_list])   # (2*dX+1,)

    t = jnp.arange(L, dtype=jnp.int32)
    tri = (t[:, None] <= t[None, :]).astype(jnp.float32)                    # (L, L)
    inv_cnt = (1.0 / (H * jnp.arange(1, L + 1, dtype=jnp.float32)))[None, :]  # (1, L)

    kernel = functools.partial(_separation_kernel, dilate_X=dilate_X, P=P)
    n_alpha = 2 * dilate_X + 1

    grid_spec = pltpu.PrefetchScalarGridSpec(
        num_scalar_prefetch=0,
        grid=(batch,),
        in_specs=[
            pl.BlockSpec((n_alpha,), lambda i: (0,),
                         memory_space=pltpu.MemorySpace.SMEM),       # alphas (scalars)
            pl.BlockSpec((1, B, L), lambda i: (i, 0, 0)),            # x
            pl.BlockSpec((B, L), lambda i: (0, 0)),                  # ln_w
            pl.BlockSpec((B, L), lambda i: (0, 0)),                  # ln_b
            pl.BlockSpec((B, B), lambda i: (0, 0)),                  # w_in
            pl.BlockSpec((B, 1), lambda i: (0, 0)),                  # b_in
            pl.BlockSpec((dilate_X, H, B), lambda i: (0, 0, 0)),     # w1  (stacked)
            pl.BlockSpec((dilate_X, H, 1), lambda i: (0, 0, 0)),     # b1
            pl.BlockSpec((dilate_X, H, P), lambda i: (0, 0, 0)),     # dw
            pl.BlockSpec((dilate_X, H, 1), lambda i: (0, 0, 0)),     # db
            pl.BlockSpec((dilate_X, B, H), lambda i: (0, 0, 0)),     # wout
            pl.BlockSpec((dilate_X, B, 1), lambda i: (0, 0, 0)),     # bout
            pl.BlockSpec((dilate_X, Sc, H), lambda i: (0, 0, 0)),    # wskip
            pl.BlockSpec((dilate_X, Sc, 1), lambda i: (0, 0, 0)),    # bskip
            pl.BlockSpec((B, Sc), lambda i: (0, 0)),                 # head weight
            pl.BlockSpec((B, 1), lambda i: (0, 0)),                  # head bias
            pl.BlockSpec((L, L), lambda i: (0, 0)),                  # tri (hoisted)
            pl.BlockSpec((1, L), lambda i: (0, 0)),                  # inv_cnt (hoisted)
        ],
        out_specs=pl.BlockSpec((1, B, L), lambda i: (i, 0, 0)),
    )
    return pl.pallas_call(
        kernel,
        out_shape=jax.ShapeDtypeStruct((batch, B, L), x.dtype),
        grid_spec=grid_spec,
        compiler_params=pltpu.CompilerParams(dimension_semantics=("parallel",)),
    )(alphas, x, params["ln_w"], params["ln_b"], params["w_in"], params["b_in"],
      w1, b1, dw, db, wout, bout, wskip, bskip,
      params["w_out"], params["b_out"], tri, inv_cnt)


# -----------------------------------------------------------------------------
# Pure-JAX reference (mirrors the PyTorch module math)
# -----------------------------------------------------------------------------
def _shift_time(v, off):
    """out[..., l] = v[..., l + off], zero padded outside [0, L)."""
    L = v.shape[-1]
    if off == 0:
        return v
    if abs(off) >= L:
        return jnp.zeros_like(v)
    if off > 0:
        return jnp.pad(v[..., off:], ((0, 0), (0, 0), (0, off)))
    return jnp.pad(v[..., :L + off], ((0, 0), (0, 0), (-off, 0)))


def ref_forward(x, params, *, dilate_X, P):
    hp = jax.lax.Precision.HIGHEST

    def pconv(w, v, b):
        return jnp.einsum("oi,bil->bol", w, v, precision=hp) + b[None]

    def prelu(v, a):
        return jnp.where(v >= 0, v, a * v)

    def cum_norm(v):
        C, L = v.shape[1], v.shape[2]
        cnt = C * jnp.arange(1, L + 1, dtype=v.dtype)
        cs = jnp.cumsum(jnp.sum(v, axis=1), axis=-1)
        cs2 = jnp.cumsum(jnp.sum(v * v, axis=1), axis=-1)
        mean = cs / cnt
        var = cs2 / cnt - mean * mean
        return (v - mean[:, None, :]) / jnp.sqrt(var)[:, None, :]

    org_x = x
    mean = jnp.mean(x, axis=(1, 2), keepdims=True)
    var = jnp.mean((x - mean) ** 2, axis=(1, 2), keepdims=True)
    y = (x - mean) / jnp.sqrt(var + 1e-5) * params["ln_w"][None] + params["ln_b"][None]
    y = pconv(params["w_in"], y, params["b_in"])

    skip_sum = None
    for _ in range(dilate_X):
        skip_sum = None
        for j in range(dilate_X):
            bp = params["blocks"][j]
            d = 2 ** j
            res = y
            h = cum_norm(prelu(pconv(bp["w1"], y, bp["b1"]), bp["a1"]))
            left_pad = (d * (P - 1)) // 2
            acc = jnp.zeros_like(h)
            for p in range(P):
                acc = acc + _shift_time(h, p * d - left_pad) * bp["dw"][None, :, p:p + 1]
            h = cum_norm(prelu(acc + bp["db"][None], bp["a2"]))
            y = pconv(bp["wout"], h, bp["bout"]) + res
            skip = pconv(bp["wskip"], h, bp["bskip"])
            skip_sum = skip if skip_sum is None else skip_sum + skip
    s = prelu(skip_sum, params["prelu_a"])
    return org_x * jax.nn.sigmoid(pconv(params["w_out"], s, params["b_out"]))


# -----------------------------------------------------------------------------
# Deterministic parameter init (shapes match the nn.Module's conv/norm weights)
# -----------------------------------------------------------------------------
def init_params(key, *, B, H, P, Sc, L, dilate_X):
    n_keys = 6 + 8 * dilate_X
    it = iter(jax.random.split(key, n_keys))

    def nrm(shape, scale):
        return scale * jax.random.normal(next(it), shape, jnp.float32)

    params = {
        "ln_w": 1.0 + 0.1 * jax.random.normal(next(it), (B, L), jnp.float32),
        "ln_b": 0.1 * jax.random.normal(next(it), (B, L), jnp.float32),
        "w_in": nrm((B, B), B ** -0.5),
        "b_in": nrm((B, 1), 0.1),
        "prelu_a": jnp.float32(0.25),
        "w_out": nrm((B, Sc), Sc ** -0.5),
        "b_out": nrm((B, 1), 0.1),
        "blocks": [],
    }
    for _ in range(dilate_X):
        params["blocks"].append({
            "w1": nrm((H, B), B ** -0.5),
            "b1": nrm((H, 1), 0.1),
            "a1": jnp.float32(0.25),
            "dw": nrm((H, P), P ** -0.5),
            "db": nrm((H, 1), 0.1),
            "a2": jnp.float32(0.25),
            "wout": nrm((B, H), H ** -0.5),
            "bout": nrm((B, 1), 0.1),
            "wskip": nrm((Sc, H), H ** -0.5),
            "bskip": nrm((Sc, 1), 0.1),
        })
    return params


if __name__ == "__main__":
    # Small shapes consistent with the module; L is a multiple of 128 so the
    # time/lane dimension is dense (unmasked vector stores).
    batch, B, H, P, Sc, L, dilate_X = 2, 8, 16, 3, 8, 128, 2

    key = jax.random.PRNGKey(0)
    kp, kx = jax.random.split(key)
    params = init_params(kp, B=B, H=H, P=P, Sc=Sc, L=L, dilate_X=dilate_X)
    x = jax.random.normal(kx, (batch, B, L), jnp.float32)

    fwd = jax.jit(functools.partial(separation_forward, dilate_X=dilate_X, P=P))
    y = jax.block_until_ready(fwd(x, params))

    y_ref = ref_forward(x, params, dilate_X=dilate_X, P=P)
    assert y.shape == (batch, B, L)
    err = float(jnp.max(jnp.abs(y - y_ref)))
    assert jnp.allclose(y, y_ref, atol=2e-2, rtol=2e-2), err

    print("KERNEL_OK")
</pallas_src>

<mosaic_0001>
module attributes {stable_mosaic.version = 11 : i64} {
  func.func @_separation_kernel(%arg0: i32, %arg1: memref<5xf32, #tpu.memory_space<smem>>, %arg2: memref<1x8x128xf32, #tpu.memory_space<vmem>>, %arg3: memref<8x128xf32, #tpu.memory_space<vmem>>, %arg4: memref<8x128xf32, #tpu.memory_space<vmem>>, %arg5: memref<8x8xf32, #tpu.memory_space<vmem>>, %arg6: memref<8x1xf32, #tpu.memory_space<vmem>>, %arg7: memref<2x16x8xf32, #tpu.memory_space<vmem>>, %arg8: memref<2x16x1xf32, #tpu.memory_space<vmem>>, %arg9: memref<2x16x3xf32, #tpu.memory_space<vmem>>, %arg10: memref<2x16x1xf32, #tpu.memory_space<vmem>>, %arg11: memref<2x8x16xf32, #tpu.memory_space<vmem>>, %arg12: memref<2x8x1xf32, #tpu.memory_space<vmem>>, %arg13: memref<2x8x16xf32, #tpu.memory_space<vmem>>, %arg14: memref<2x8x1xf32, #tpu.memory_space<vmem>>, %arg15: memref<8x8xf32, #tpu.memory_space<vmem>>, %arg16: memref<8x1xf32, #tpu.memory_space<vmem>>, %arg17: memref<128x128xf32, #tpu.memory_space<vmem>>, %arg18: memref<1x128xf32, #tpu.memory_space<vmem>>, %arg19: memref<1x8x128xf32, #tpu.memory_space<vmem>>) attributes {dimension_semantics = [#tpu.dimension_semantics<parallel>], iteration_bounds = array<i64: 2>, scalar_prefetch = 0 : i64, scratch_operands = 0 : i64, tpu.core_type = #tpu.core_type<tc>, window_params = [{transform_indices = @transform_0, window_bounds = array<i64: 5>}, {transform_indices = @transform_1, window_bounds = array<i64: 1, 8, 128>}, {pipeline_mode = #tpu.pipeline_mode<synchronous>, transform_indices = @transform_2, window_bounds = array<i64: 8, 128>}, {pipeline_mode = #tpu.pipeline_mode<synchronous>, transform_indices = @transform_3, window_bounds = array<i64: 8, 128>}, {pipeline_mode = #tpu.pipeline_mode<synchronous>, transform_indices = @transform_4, window_bounds = array<i64: 8, 8>}, {pipeline_mode = #tpu.pipeline_mode<synchronous>, transform_indices = @transform_5, window_bounds = array<i64: 8, 1>}, {pipeline_mode = #tpu.pipeline_mode<synchronous>, transform_indices = @transform_6, window_bounds = array<i64: 2, 16, 8>}, {pipeline_mode = #tpu.pipeline_mode<synchronous>, transform_indices = @transform_7, window_bounds = array<i64: 2, 16, 1>}, {pipeline_mode = #tpu.pipeline_mode<synchronous>, transform_indices = @transform_8, window_bounds = array<i64: 2, 16, 3>}, {pipeline_mode = #tpu.pipeline_mode<synchronous>, transform_indices = @transform_9, window_bounds = array<i64: 2, 16, 1>}, {pipeline_mode = #tpu.pipeline_mode<synchronous>, transform_indices = @transform_10, window_bounds = array<i64: 2, 8, 16>}, {pipeline_mode = #tpu.pipeline_mode<synchronous>, transform_indices = @transform_11, window_bounds = array<i64: 2, 8, 1>}, {pipeline_mode = #tpu.pipeline_mode<synchronous>, transform_indices = @transform_12, window_bounds = array<i64: 2, 8, 16>}, {pipeline_mode = #tpu.pipeline_mode<synchronous>, transform_indices = @transform_13, window_bounds = array<i64: 2, 8, 1>}, {pipeline_mode = #tpu.pipeline_mode<synchronous>, transform_indices = @transform_14, window_bounds = array<i64: 8, 8>}, {pipeline_mode = #tpu.pipeline_mode<synchronous>, transform_indices = @transform_15, window_bounds = array<i64: 8, 1>}, {pipeline_mode = #tpu.pipeline_mode<synchronous>, transform_indices = @transform_16, window_bounds = array<i64: 128, 128>}, {pipeline_mode = #tpu.pipeline_mode<synchronous>, transform_indices = @transform_17, window_bounds = array<i64: 1, 128>}, {transform_indices = @transform_18, window_bounds = array<i64: 1, 8, 128>}]} {
    %c0 = arith.constant 0 : index
    %c0_0 = arith.constant 0 : index
    %c0_1 = arith.constant 0 : index
    %0 = vector.load %arg2[%c0, %c0_0, %c0_1] : memref<1x8x128xf32, #tpu.memory_space<vmem>>, vector<1x8x128xf32>
    %1 = vector.shape_cast %0 : vector<1x8x128xf32> to vector<8x128xf32>
    %cst = arith.constant dense<0.000000e+00> : vector<8xf32>
    %2 = vector.multi_reduction <add>, %1, %cst [1] : vector<8x128xf32> to vector<8xf32>
    %3 = vector.shape_cast %2 : vector<8xf32> to vector<8x1xf32>
    %cst_2 = arith.constant dense<0.000000e+00> : vector<1xf32>
    %4 = vector.multi_reduction <add>, %3, %cst_2 [0] : vector<8x1xf32> to vector<1xf32>
    %5 = vector.shape_cast %4 : vector<1xf32> to vector<1x1xf32>
    %cst_3 = arith.constant 9.765625E-4 : f32
    %6 = vector.broadcast %cst_3 : f32 to vector<1x1xf32>
    %7 = arith.mulf %5, %6 : vector<1x1xf32>
    %8 = vector.broadcast %7 : vector<1x1xf32> to vector<8x128xf32>
    %9 = arith.subf %1, %8 : vector<8x128xf32>
    %10 = arith.mulf %9, %9 : vector<8x128xf32>
    %cst_4 = arith.constant dense<0.000000e+00> : vector<8xf32>
    %11 = vector.multi_reduction <add>, %10, %cst_4 [1] : vector<8x128xf32> to vector<8xf32>
    %12 = vector.shape_cast %11 : vector<8xf32> to vector<8x1xf32>
    %cst_5 = arith.constant dense<0.000000e+00> : vector<1xf32>
    %13 = vector.multi_reduction <add>, %12, %cst_5 [0] : vector<8x1xf32> to vector<1xf32>
    %14 = vector.shape_cast %13 : vector<1xf32> to vector<1x1xf32>
    %cst_6 = arith.constant 9.765625E-4 : f32
    %15 = vector.broadcast %cst_6 : f32 to vector<1x1xf32>
    %16 = arith.mulf %14, %15 : vector<1x1xf32>
    %cst_7 = arith.constant 9.99999974E-6 : f32
    %17 = vector.broadcast %cst_7 : f32 to vector<1x1xf32>
    %18 = arith.addf %16, %17 : vector<1x1xf32>
    %19 = math.rsqrt %18 : vector<1x1xf32>
    %20 = vector.broadcast %19 : vector<1x1xf32> to vector<8x128xf32>
    %21 = arith.mulf %9, %20 : vector<8x128xf32>
    %c0_8 = arith.constant 0 : index
    %c0_9 = arith.constant 0 : index
    %22 = vector.load %arg3[%c0_8, %c0_9] : memref<8x128xf32, #tpu.memory_space<vmem>>, vector<8x128xf32>
    %23 = arith.mulf %21, %22 : vector<8x128xf32>
    %c0_10 = arith.constant 0 : index
    %c0_11 = arith.constant 0 : index
    %24 = vector.load %arg4[%c0_10, %c0_11] : memref<8x128xf32, #tpu.memory_space<vmem>>, vector<8x128xf32>
    %25 = arith.addf %23, %24 : vector<8x128xf32>
    %c0_12 = arith.constant 0 : index
    %c0_13 = arith.constant 0 : index
    %26 = vector.load %arg5[%c0_12, %c0_13] : memref<8x8xf32, #tpu.memory_space<vmem>>, vector<8x8xf32>
    %cst_14 = arith.constant dense<0.000000e+00> : vector<8x128xf32>
    %27 = tpu.matmul %26, %25, %cst_14 {dimension_numbers = #tpu.dot_dimension_numbers<[1], [0], [0], [1], [0, 0, 1, 1], [], []>} : vector<8x8xf32>, vector<8x128xf32>, vector<8x128xf32> -> vector<8x128xf32>
    %c0_15 = arith.constant 0 : index
    %c0_16 = arith.constant 0 : index
    %28 = vector.load %arg6[%c0_15, %c0_16] : memref<8x1xf32, #tpu.memory_space<vmem>>, vector<8x1xf32>
    %29 = vector.broadcast %28 : vector<8x1xf32> to vector<8x128xf32>
    %30 = arith.addf %27, %29 : vector<8x128xf32>
    %c0_17 = arith.constant 0 : index
    %c0_18 = arith.constant 0 : index
    %31 = vector.load %arg17[%c0_17, %c0_18] : memref<128x128xf32, #tpu.memory_space<vmem>>, vector<128x128xf32>
    %c0_19 = arith.constant 0 : index
    %c0_20 = arith.constant 0 : index
    %32 = vector.load %arg18[%c0_19, %c0_20] : memref<1x128xf32, #tpu.memory_space<vmem>>, vector<1x128xf32>
    %33 = tpu.iota {dimensions = array<i32: 1>} : vector<1x128xi32>
    %c0_21 = arith.constant 0 : index
    %34 = memref.load %arg1[%c0_21] : memref<5xf32, #tpu.memory_space<smem>>
    %c1 = arith.constant 1 : index
    %35 = memref.load %arg1[%c1] : memref<5xf32, #tpu.memory_space<smem>>
    %c0_22 = arith.constant 0 : index
    %c0_23 = arith.constant 0 : index
    %c0_24 = arith.constant 0 : index
    %36 = vector.load %arg7[%c0_22, %c0_23, %c0_24] : memref<2x16x8xf32, #tpu.memory_space<vmem>>, vector<1x16x8xf32>
    %37 = vector.shape_cast %36 : vector<1x16x8xf32> to vector<16x8xf32>
    %cst_25 = arith.constant dense<0.000000e+00> : vector<16x128xf32>
    %38 = tpu.matmul %37, %30, %cst_25 {dimension_numbers = #tpu.dot_dimension_numbers<[1], [0], [0], [1], [0, 0, 1, 1], [], []>} : vector<16x8xf32>, vector<8x128xf32>, vector<16x128xf32> -> vector<16x128xf32>
    %c0_26 = arith.constant 0 : index
    %c0_27 = arith.constant 0 : index
    %c0_28 = arith.constant 0 : index
    %39 = vector.load %arg8[%c0_26, %c0_27, %c0_28] : memref<2x16x1xf32, #tpu.memory_space<vmem>>, vector<1x16x1xf32>
    %40 = vector.shape_cast %39 : vector<1x16x1xf32> to vector<16x1xf32>
    %41 = vector.broadcast %40 : vector<16x1xf32> to vector<16x128xf32>
    %42 = arith.addf %38, %41 : vector<16x128xf32>
    %cst_29 = arith.constant 0.000000e+00 : f32
    %43 = vector.broadcast %cst_29 : f32 to vector<16x128xf32>
    %44 = arith.cmpf oge, %42, %43 : vector<16x128xf32>
    %45 = vector.broadcast %34 : f32 to vector<16x128xf32>
    %46 = arith.mulf %45, %42 : vector<16x128xf32>
    %47 = arith.select %44, %42, %46 : vector<16x128xi1>, vector<16x128xf32>
    %cst_30 = arith.constant dense<0.000000e+00> : vector<128xf32>
    %48 = vector.multi_reduction <add>, %47, %cst_30 [0] : vector<16x128xf32> to vector<128xf32>
    %49 = vector.shape_cast %48 : vector<128xf32> to vector<1x128xf32>
    %50 = arith.mulf %47, %47 : vector<16x128xf32>
    %cst_31 = arith.constant dense<0.000000e+00> : vector<128xf32>
    %51 = vector.multi_reduction <add>, %50, %cst_31 [0] : vector<16x128xf32> to vector<128xf32>
    %52 = vector.shape_cast %51 : vector<128xf32> to vector<1x128xf32>
    %cst_32 = arith.constant dense<0.000000e+00> : vector<1x128xf32>
    %53 = tpu.matmul %49, %31, %cst_32 {dimension_numbers = #tpu.dot_dimension_numbers<[1], [0], [0], [1], [0, 0, 1, 1], [], []>} : vector<1x128xf32>, vector<128x128xf32>, vector<1x128xf32> -> vector<1x128xf32>
    %cst_33 = arith.constant dense<0.000000e+00> : vector<1x128xf32>
    %54 = tpu.matmul %52, %31, %cst_33 {dimension_numbers = #tpu.dot_dimension_numbers<[1], [0], [0], [1], [0, 0, 1, 1], [], []>} : vector<1x128xf32>, vector<128x128xf32>, vector<1x128xf32> -> vector<1x128xf32>
    %55 = arith.mulf %53, %32 : vector<1x128xf32>
    %56 = arith.mulf %54, %32 : vector<1x128xf32>
    %57 = arith.mulf %55, %55 : vector<1x128xf32>
    %58 = arith.subf %56, %57 : vector<1x128xf32>
    %59 = vector.broadcast %55 : vector<1x128xf32> to vector<16x128xf32>
    %60 = arith.subf %47, %59 : vector<16x128xf32>
    %61 = math.rsqrt %58 : vector<1x128xf32>
    %62 = vector.broadcast %61 : vector<1x128xf32> to vector<16x128xf32>
    %63 = arith.mulf %60, %62 : vector<16x128xf32>
    %c0_34 = arith.constant 0 : index
    %c0_35 = arith.constant 0 : index
    %c0_36 = arith.constant 0 : index
    %64 = vector.load %arg9[%c0_34, %c0_35, %c0_36] : memref<2x16x3xf32, #tpu.memory_space<vmem>>, vector<1x16x3xf32>
    %65 = vector.shape_cast %64 : vector<1x16x3xf32> to vector<16x3xf32>
    %c0_37 = arith.constant 0 : index
    %c0_38 = arith.constant 0 : index
    %c0_39 = arith.constant 0 : index
    %66 = vector.load %arg10[%c0_37, %c0_38, %c0_39] : memref<2x16x1xf32, #tpu.memory_space<vmem>>, vector<1x16x1xf32>
    %67 = vector.shape_cast %66 : vector<1x16x1xf32> to vector<16x1xf32>
    %c1_i32 = arith.constant 1 : i32
    %68 = tpu.dynamic_rotate %63 by %c1_i32 dim 1 : vector<16x128xf32>, i32 -> vector<16x128xf32>
    %c1_i32_40 = arith.constant 1 : i32
    %69 = vector.broadcast %c1_i32_40 : i32 to vector<1x128xi32>
    %70 = arith.cmpi sge, %33, %69 : vector<1x128xi32>
    %cst_41 = arith.constant 0.000000e+00 : f32
    %71 = vector.shape_cast %70 : vector<1x128xi1> to vector<1x128xi1>
    %72 = vector.broadcast %71 : vector<1x128xi1> to vector<16x128xi1>
    %73 = vector.broadcast %cst_41 : f32 to vector<16x128xf32>
    %74 = arith.select %72, %68, %73 : vector<16x128xi1>, vector<16x128xf32>
    %75 = vector.extract_strided_slice %65 {offsets = [0, 0], sizes = [16, 1], strides = [1, 1]} : vector<16x3xf32> to vector<16x1xf32>
    %76 = vector.broadcast %75 : vector<16x1xf32> to vector<16x128xf32>
    %77 = arith.mulf %74, %76 : vector<16x128xf32>
    %78 = vector.extract_strided_slice %65 {offsets = [0, 1], sizes = [16, 1], strides = [1, 1]} : vector<16x3xf32> to vector<16x1xf32>
    %79 = vector.broadcast %78 : vector<16x1xf32> to vector<16x128xf32>
    %80 = arith.mulf %63, %79 : vector<16x128xf32>
    %81 = arith.addf %77, %80 : vector<16x128xf32>
    %c127_i32 = arith.constant 127 : i32
    %82 = tpu.dynamic_rotate %63 by %c127_i32 dim 1 : vector<16x128xf32>, i32 -> vector<16x128xf32>
    %c127_i32_42 = arith.constant 127 : i32
    %83 = vector.broadcast %c127_i32_42 : i32 to vector<1x128xi32>
    %84 = arith.cmpi slt, %33, %83 : vector<1x128xi32>
    %cst_43 = arith.constant 0.000000e+00 : f32
    %85 = vector.shape_cast %84 : vector<1x128xi1> to vector<1x128xi1>
    %86 = vector.broadcast %85 : vector<1x128xi1> to vector<16x128xi1>
    %87 = vector.broadcast %cst_43 : f32 to vector<16x128xf32>
    %88 = arith.select %86, %82, %87 : vector<16x128xi1>, vector<16x128xf32>
    %89 = vector.extract_strided_slice %65 {offsets = [0, 2], sizes = [16, 1], strides = [1, 1]} : vector<16x3xf32> to vector<16x1xf32>
    %90 = vector.broadcast %89 : vector<16x1xf32> to vector<16x128xf32>
    %91 = arith.mulf %88, %90 : vector<16x128xf32>
    %92 = arith.addf %81, %91 : vector<16x128xf32>
    %93 = vector.broadcast %67 : vector<16x1xf32> to vector<16x128xf32>
    %94 = arith.addf %92, %93 : vector<16x128xf32>
    %cst_44 = arith.constant 0.000000e+00 : f32
    %95 = vector.broadcast %cst_44 : f32 to vector<16x128xf32>
    %96 = arith.cmpf oge, %94, %95 : vector<16x128xf32>
    %97 = vector.broadcast %35 : f32 to vector<16x128xf32>
    %98 = arith.mulf %97, %94 : vector<16x128xf32>
    %99 = arith.select %96, %94, %98 : vector<16x128xi1>, vector<16x128xf32>
    %cst_45 = arith.constant dense<0.000000e+00> : vector<128xf32>
    %100 = vector.multi_reduction <add>, %99, %cst_45 [0] : vector<16x128xf32> to vector<128xf32>
    %101 = vector.shape_cast %100 : vector<128xf32> to vector<1x128xf32>
    %102 = arith.mulf %99, %99 : vector<16x128xf32>
    %cst_46 = arith.constant dense<0.000000e+00> : vector<128xf32>
    %103 = vector.multi_reduction <add>, %102, %cst_46 [0] : vector<16x128xf32> to vector<128xf32>
    %104 = vector.shape_cast %103 : vector<128xf32> to vector<1x128xf32>
    %cst_47 = arith.constant dense<0.000000e+00> : vector<1x128xf32>
    %105 = tpu.matmul %101, %31, %cst_47 {dimension_numbers = #tpu.dot_dimension_numbers<[1], [0], [0], [1], [0, 0, 1, 1], [], []>} : vector<1x128xf32>, vector<128x128xf32>, vector<1x128xf32> -> vector<1x128xf32>
    %cst_48 = arith.constant dense<0.000000e+00> : vector<1x128xf32>
    %106 = tpu.matmul %104, %31, %cst_48 {dimension_numbers = #tpu.dot_dimension_numbers<[1], [0], [0], [1], [0, 0, 1, 1], [], []>} : vector<1x128xf32>, vector<128x128xf32>, vector<1x128xf32> -> vector<1x128xf32>
    %107 = arith.mulf %105, %32 : vector<1x128xf32>
    %108 = arith.mulf %106, %32 : vector<1x128xf32>
    %109 = arith.mulf %107, %107 : vector<1x128xf32>
    %110 = arith.subf %108, %109 : vector<1x128xf32>
    %111 = vector.broadcast %107 : vector<1x128xf32> to vector<16x128xf32>
    %112 = arith.subf %99, %111 : vector<16x128xf32>
    %113 = math.rsqrt %110 : vector<1x128xf32>
    %114 = vector.broadcast %113 : vector<1x128xf32> to vector<16x128xf32>
    %115 = arith.mulf %112, %114 : vector<16x128xf32>
    %c0_49 = arith.constant 0 : index
    %c0_50 = arith.constant 0 : index
    %c0_51 = arith.constant 0 : index
    %116 = vector.load %arg11[%c0_49, %c0_50, %c0_51] : memref<2x8x16xf32, #tpu.memory_space<vmem>>, vector<1x8x16xf32>
    %117 = vector.shape_cast %116 : vector<1x8x16xf32> to vector<8x16xf32>
    %cst_52 = arith.constant dense<0.000000e+00> : vector<8x128xf32>
    %118 = tpu.matmul %117, %115, %cst_52 {dimension_numbers = #tpu.dot_dimension_numbers<[1], [0], [0], [1], [0, 0, 1, 1], [], []>} : vector<8x16xf32>, vector<16x128xf32>, vector<8x128xf32> -> vector<8x128xf32>
    %c0_53 = arith.constant 0 : index
    %c0_54 = arith.constant 0 : index
    %c0_55 = arith.constant 0 : index
    %119 = vector.load %arg12[%c0_53, %c0_54, %c0_55] : memref<2x8x1xf32, #tpu.memory_space<vmem>>, vector<1x8x1xf32>
    %120 = vector.shape_cast %119 : vector<1x8x1xf32> to vector<8x1xf32>
    %121 = vector.broadcast %120 : vector<8x1xf32> to vector<8x128xf32>
    %122 = arith.addf %118, %121 : vector<8x128xf32>
    %123 = arith.addf %122, %30 : vector<8x128xf32>
    %c2 = arith.constant 2 : index
    %124 = memref.load %arg1[%c2] : memref<5xf32, #tpu.memory_space<smem>>
    %c3 = arith.constant 3 : index
    %125 = memref.load %arg1[%c3] : memref<5xf32, #tpu.memory_space<smem>>
    %c1_56 = arith.constant 1 : index
    %c0_57 = arith.constant 0 : index
    %c0_58 = arith.constant 0 : index
    %126 = vector.load %arg7[%c1_56, %c0_57, %c0_58] : memref<2x16x8xf32, #tpu.memory_space<vmem>>, vector<1x16x8xf32>
    %127 = vector.shape_cast %126 : vector<1x16x8xf32> to vector<16x8xf32>
    %cst_59 = arith.constant dense<0.000000e+00> : vector<16x128xf32>
    %128 = tpu.matmul %127, %123, %cst_59 {dimension_numbers = #tpu.dot_dimension_numbers<[1], [0], [0], [1], [0, 0, 1, 1], [], []>} : vector<16x8xf32>, vector<8x128xf32>, vector<16x128xf32> -> vector<16x128xf32>
    %c1_60 = arith.constant 1 : index
    %c0_61 = arith.constant 0 : index
    %c0_62 = arith.constant 0 : index
    %129 = vector.load %arg8[%c1_60, %c0_61, %c0_62] : memref<2x16x1xf32, #tpu.memory_space<vmem>>, vector<1x16x1xf32>
    %130 = vector.shape_cast %129 : vector<1x16x1xf32> to vector<16x1xf32>
    %131 = vector.broadcast %130 : vector<16x1xf32> to vector<16x128xf32>
    %132 = arith.addf %128, %131 : vector<16x128xf32>
    %cst_63 = arith.constant 0.000000e+00 : f32
    %133 = vector.broadcast %cst_63 : f32 to vector<16x128xf32>
    %134 = arith.cmpf oge, %132, %133 : vector<16x128xf32>
    %135 = vector.broadcast %124 : f32 to vector<16x128xf32>
    %136 = arith.mulf %135, %132 : vector<16x128xf32>
    %137 = arith.select %134, %132, %136 : vector<16x128xi1>, vector<16x128xf32>
    %cst_64 = arith.constant dense<0.000000e+00> : vector<128xf32>
    %138 = vector.multi_reduction <add>, %137, %cst_64 [0] : vector<16x128xf32> to vector<128xf32>
    %139 = vector.shape_cast %138 : vector<128xf32> to vector<1x128xf32>
    %140 = arith.mulf %137, %137 : vector<16x128xf32>
    %cst_65 = arith.constant dense<0.000000e+00> : vector<128xf32>
    %141 = vector.multi_reduction <add>, %140, %cst_65 [0] : vector<16x128xf32> to vector<128xf32>
    %142 = vector.shape_cast %141 : vector<128xf32> to vector<1x128xf32>
    %cst_66 = arith.constant dense<0.000000e+00> : vector<1x128xf32>
    %143 = tpu.matmul %139, %31, %cst_66 {dimension_numbers = #tpu.dot_dimension_numbers<[1], [0], [0], [1], [0, 0, 1, 1], [], []>} : vector<1x128xf32>, vector<128x128xf32>, vector<1x128xf32> -> vector<1x128xf32>
    %cst_67 = arith.constant dense<0.000000e+00> : vector<1x128xf32>
    %144 = tpu.matmul %142, %31, %cst_67 {dimension_numbers = #tpu.dot_dimension_numbers<[1], [0], [0], [1], [0, 0, 1, 1], [], []>} : vector<1x128xf32>, vector<128x128xf32>, vector<1x128xf32> -> vector<1x128xf32>
    %145 = arith.mulf %143, %32 : vector<1x128xf32>
    %146 = arith.mulf %144, %32 : vector<1x128xf32>
    %147 = arith.mulf %145, %145 : vector<1x128xf32>
    %148 = arith.subf %146, %147 : vector<1x128xf32>
    %149 = vector.broadcast %145 : vector<1x128xf32> to vector<16x128xf32>
    %150 = arith.subf %137, %149 : vector<16x128xf32>
    %151 = math.rsqrt %148 : vector<1x128xf32>
    %152 = vector.broadcast %151 : vector<1x128xf32> to vector<16x128xf32>
    %153 = arith.mulf %150, %152 : vector<16x128xf32>
    %c1_68 = arith.constant 1 : index
    %c0_69 = arith.constant 0 : index
    %c0_70 = arith.constant 0 : index
    %154 = vector.load %arg9[%c1_68, %c0_69, %c0_70] : memref<2x16x3xf32, #tpu.memory_space<vmem>>, vector<1x16x3xf32>
    %155 = vector.shape_cast %154 : vector<1x16x3xf32> to vector<16x3xf32>
    %c1_71 = arith.constant 1 : index
    %c0_72 = arith.constant 0 : index
    %c0_73 = arith.constant 0 : index
    %156 = vector.load %arg10[%c1_71, %c0_72, %c0_73] : memref<2x16x1xf32, #tpu.memory_space<vmem>>, vector<1x16x1xf32>
    %157 = vector.shape_cast %156 : vector<1x16x1xf32> to vector<16x1xf32>
    %c2_i32 = arith.constant 2 : i32
    %158 = tpu.dynamic_rotate %153 by %c2_i32 dim 1 : vector<16x128xf32>, i32 -> vector<16x128xf32>
    %c2_i32_74 = arith.constant 2 : i32
    %159 = vector.broadcast %c2_i32_74 : i32 to vector<1x128xi32>
    %160 = arith.cmpi sge, %33, %159 : vector<1x128xi32>
    %cst_75 = arith.constant 0.000000e+00 : f32
    %161 = vector.shape_cast %160 : vector<1x128xi1> to vector<1x128xi1>
    %162 = vector.broadcast %161 : vector<1x128xi1> to vector<16x128xi1>
    %163 = vector.broadcast %cst_75 : f32 to vector<16x128xf32>
    %164 = arith.select %162, %158, %163 : vector<16x128xi1>, vector<16x128xf32>
    %165 = vector.extract_strided_slice %155 {offsets = [0, 0], sizes = [16, 1], strides = [1, 1]} : vector<16x3xf32> to vector<16x1xf32>
    %166 = vector.broadcast %165 : vector<16x1xf32> to vector<16x128xf32>
    %167 = arith.mulf %164, %166 : vector<16x128xf32>
    %168 = vector.extract_strided_slice %155 {offsets = [0, 1], sizes = [16, 1], strides = [1, 1]} : vector<16x3xf32> to vector<16x1xf32>
    %169 = vector.broadcast %168 : vector<16x1xf32> to vector<16x128xf32>
    %170 = arith.mulf %153, %169 : vector<16x128xf32>
    %171 = arith.addf %167, %170 : vector<16x128xf32>
    %c126_i32 = arith.constant 126 : i32
    %172 = tpu.dynamic_rotate %153 by %c126_i32 dim 1 : vector<16x128xf32>, i32 -> vector<16x128xf32>
    %c126_i32_76 = arith.constant 126 : i32
    %173 = vector.broadcast %c126_i32_76 : i32 to vector<1x128xi32>
    %174 = arith.cmpi slt, %33, %173 : vector<1x128xi32>
    %cst_77 = arith.constant 0.000000e+00 : f32
    %175 = vector.shape_cast %174 : vector<1x128xi1> to vector<1x128xi1>
    %176 = vector.broadcast %175 : vector<1x128xi1> to vector<16x128xi1>
    %177 = vector.broadcast %cst_77 : f32 to vector<16x128xf32>
    %178 = arith.select %176, %172, %177 : vector<16x128xi1>, vector<16x128xf32>
    %179 = vector.extract_strided_slice %155 {offsets = [0, 2], sizes = [16, 1], strides = [1, 1]} : vector<16x3xf32> to vector<16x1xf32>
    %180 = vector.broadcast %179 : vector<16x1xf32> to vector<16x128xf32>
    %181 = arith.mulf %178, %180 : vector<16x128xf32>
    %182 = arith.addf %171, %181 : vector<16x128xf32>
    %183 = vector.broadcast %157 : vector<16x1xf32> to vector<16x128xf32>
    %184 = arith.addf %182, %183 : vector<16x128xf32>
    %cst_78 = arith.constant 0.000000e+00 : f32
    %185 = vector.broadcast %cst_78 : f32 to vector<16x128xf32>
    %186 = arith.cmpf oge, %184, %185 : vector<16x128xf32>
    %187 = vector.broadcast %125 : f32 to vector<16x128xf32>
    %188 = arith.mulf %187, %184 : vector<16x128xf32>
    %189 = arith.select %186, %184, %188 : vector<16x128xi1>, vector<16x128xf32>
    %cst_79 = arith.constant dense<0.000000e+00> : vector<128xf32>
    %190 = vector.multi_reduction <add>, %189, %cst_79 [0] : vector<16x128xf32> to vector<128xf32>
    %191 = vector.shape_cast %190 : vector<128xf32> to vector<1x128xf32>
    %192 = arith.mulf %189, %189 : vector<16x128xf32>
    %cst_80 = arith.constant dense<0.000000e+00> : vector<128xf32>
    %193 = vector.multi_reduction <add>, %192, %cst_80 [0] : vector<16x128xf32> to vector<128xf32>
    %194 = vector.shape_cast %193 : vector<128xf32> to vector<1x128xf32>
    %cst_81 = arith.constant dense<0.000000e+00> : vector<1x128xf32>
    %195 = tpu.matmul %191, %31, %cst_81 {dimension_numbers = #tpu.dot_dimension_numbers<[1], [0], [0], [1], [0, 0, 1, 1], [], []>} : vector<1x128xf32>, vector<128x128xf32>, vector<1x128xf32> -> vector<1x128xf32>
    %cst_82 = arith.constant dense<0.000000e+00> : vector<1x128xf32>
    %196 = tpu.matmul %194, %31, %cst_82 {dimension_numbers = #tpu.dot_dimension_numbers<[1], [0], [0], [1], [0, 0, 1, 1], [], []>} : vector<1x128xf32>, vector<128x128xf32>, vector<1x128xf32> -> vector<1x128xf32>
    %197 = arith.mulf %195, %32 : vector<1x128xf32>
    %198 = arith.mulf %196, %32 : vector<1x128xf32>
    %199 = arith.mulf %197, %197 : vector<1x128xf32>
    %200 = arith.subf %198, %199 : vector<1x128xf32>
    %201 = vector.broadcast %197 : vector<1x128xf32> to vector<16x128xf32>
    %202 = arith.subf %189, %201 : vector<16x128xf32>
    %203 = math.rsqrt %200 : vector<1x128xf32>
    %204 = vector.broadcast %203 : vector<1x128xf32> to vector<16x128xf32>
    %205 = arith.mulf %202, %204 : vector<16x128xf32>
    %c1_83 = arith.constant 1 : index
    %c0_84 = arith.constant 0 : index
    %c0_85 = arith.constant 0 : index
    %206 = vector.load %arg11[%c1_83, %c0_84, %c0_85] : memref<2x8x16xf32, #tpu.memory_space<vmem>>, vector<1x8x16xf32>
    %207 = vector.shape_cast %206 : vector<1x8x16xf32> to vector<8x16xf32>
    %cst_86 = arith.constant dense<0.000000e+00> : vector<8x128xf32>
    %208 = tpu.matmul %207, %205, %cst_86 {dimension_numbers = #tpu.dot_dimension_numbers<[1], [0], [0], [1], [0, 0, 1, 1], [], []>} : vector<8x16xf32>, vector<16x128xf32>, vector<8x128xf32> -> vector<8x128xf32>
    %c1_87 = arith.constant 1 : index
    %c0_88 = arith.constant 0 : index
    %c0_89 = arith.constant 0 : index
    %209 = vector.load %arg12[%c1_87, %c0_88, %c0_89] : memref<2x8x1xf32, #tpu.memory_space<vmem>>, vector<1x8x1xf32>
    %210 = vector.shape_cast %209 : vector<1x8x1xf32> to vector<8x1xf32>
    %211 = vector.broadcast %210 : vector<8x1xf32> to vector<8x128xf32>
    %212 = arith.addf %208, %211 : vector<8x128xf32>
    %213 = arith.addf %212, %123 : vector<8x128xf32>
    %c0_90 = arith.constant 0 : index
    %214 = memref.load %arg1[%c0_90] : memref<5xf32, #tpu.memory_space<smem>>
    %c1_91 = arith.constant 1 : index
    %215 = memref.load %arg1[%c1_91] : memref<5xf32, #tpu.memory_space<smem>>
    %c0_92 = arith.constant 0 : index
    %c0_93 = arith.constant 0 : index
    %c0_94 = arith.constant 0 : index
    %216 = vector.load %arg7[%c0_92, %c0_93, %c0_94] : memref<2x16x8xf32, #tpu.memory_space<vmem>>, vector<1x16x8xf32>
    %217 = vector.shape_cast %216 : vector<1x16x8xf32> to vector<16x8xf32>
    %cst_95 = arith.constant dense<0.000000e+00> : vector<16x128xf32>
    %218 = tpu.matmul %217, %213, %cst_95 {dimension_numbers = #tpu.dot_dimension_numbers<[1], [0], [0], [1], [0, 0, 1, 1], [], []>} : vector<16x8xf32>, vector<8x128xf32>, vector<16x128xf32> -> vector<16x128xf32>
    %c0_96 = arith.constant 0 : index
    %c0_97 = arith.constant 0 : index
    %c0_98 = arith.constant 0 : index
    %219 = vector.load %arg8[%c0_96, %c0_97, %c0_98] : memref<2x16x1xf32, #tpu.memory_space<vmem>>, vector<1x16x1xf32>
    %220 = vector.shape_cast %219 : vector<1x16x1xf32> to vector<16x1xf32>
    %221 = vector.broadcast %220 : vector<16x1xf32> to vector<16x128xf32>
    %222 = arith.addf %218, %221 : vector<16x128xf32>
    %cst_99 = arith.constant 0.000000e+00 : f32
    %223 = vector.broadcast %cst_99 : f32 to vector<16x128xf32>
    %224 = arith.cmpf oge, %222, %223 : vector<16x128xf32>
    %225 = vector.broadcast %214 : f32 to vector<16x128xf32>
    %226 = arith.mulf %225, %222 : vector<16x128xf32>
    %227 = arith.select %224, %222, %226 : vector<16x128xi1>, vector<16x128xf32>
    %cst_100 = arith.constant dense<0.000000e+00> : vector<128xf32>
    %228 = vector.multi_reduction <add>, %227, %cst_100 [0] : vector<16x128xf32> to vector<128xf32>
    %229 = vector.shape_cast %228 : vector<128xf32> to vector<1x128xf32>
    %230 = arith.mulf %227, %227 : vector<16x128xf32>
    %cst_101 = arith.constant dense<0.000000e+00> : vector<128xf32>
    %231 = vector.multi_reduction <add>, %230, %cst_101 [0] : vector<16x128xf32> to vector<128xf32>
    %232 = vector.shape_cast %231 : vector<128xf32> to vector<1x128xf32>
    %cst_102 = arith.constant dense<0.000000e+00> : vector<1x128xf32>
    %233 = tpu.matmul %229, %31, %cst_102 {dimension_numbers = #tpu.dot_dimension_numbers<[1], [0], [0], [1], [0, 0, 1, 1], [], []>} : vector<1x128xf32>, vector<128x128xf32>, vector<1x128xf32> -> vector<1x128xf32>
    %cst_103 = arith.constant dense<0.000000e+00> : vector<1x128xf32>
    %234 = tpu.matmul %232, %31, %cst_103 {dimension_numbers = #tpu.dot_dimension_numbers<[1], [0], [0], [1], [0, 0, 1, 1], [], []>} : vector<1x128xf32>, vector<128x128xf32>, vector<1x128xf32> -> vector<1x128xf32>
    %235 = arith.mulf %233, %32 : vector<1x128xf32>
    %236 = arith.mulf %234, %32 : vector<1x128xf32>
    %237 = arith.mulf %235, %235 : vector<1x128xf32>
    %238 = arith.subf %236, %237 : vector<1x128xf32>
    %239 = vector.broadcast %235 : vector<1x128xf32> to vector<16x128xf32>
    %240 = arith.subf %227, %239 : vector<16x128xf32>
    %241 = math.rsqrt %238 : vector<1x128xf32>
    %242 = vector.broadcast %241 : vector<1x128xf32> to vector<16x128xf32>
    %243 = arith.mulf %240, %242 : vector<16x128xf32>
    %c0_104 = arith.constant 0 : index
    %c0_105 = arith.constant 0 : index
    %c0_106 = arith.constant 0 : index
    %244 = vector.load %arg9[%c0_104, %c0_105, %c0_106] : memref<2x16x3xf32, #tpu.memory_space<vmem>>, vector<1x16x3xf32>
    %245 = vector.shape_cast %244 : vector<1x16x3xf32> to vector<16x3xf32>
    %c0_107 = arith.constant 0 : index
    %c0_108 = arith.constant 0 : index
    %c0_109 = arith.constant 0 : index
    %246 = vector.load %arg10[%c0_107, %c0_108, %c0_109] : memref<2x16x1xf32, #tpu.memory_space<vmem>>, vector<1x16x1xf32>
    %247 = vector.shape_cast %246 : vector<1x16x1xf32> to vector<16x1xf32>
    %c1_i32_110 = arith.constant 1 : i32
    %248 = tpu.dynamic_rotate %243 by %c1_i32_110 dim 1 : vector<16x128xf32>, i32 -> vector<16x128xf32>
    %c1_i32_111 = arith.constant 1 : i32
    %249 = vector.broadcast %c1_i32_111 : i32 to vector<1x128xi32>
    %250 = arith.cmpi sge, %33, %249 : vector<1x128xi32>
    %cst_112 = arith.constant 0.000000e+00 : f32
    %251 = vector.shape_cast %250 : vector<1x128xi1> to vector<1x128xi1>
    %252 = vector.broadcast %251 : vector<1x128xi1> to vector<16x128xi1>
    %253 = vector.broadcast %cst_112 : f32 to vector<16x128xf32>
    %254 = arith.select %252, %248, %253 : vector<16x128xi1>, vector<16x128xf32>
    %255 = vector.extract_strided_slice %245 {offsets = [0, 0], sizes = [16, 1], strides = [1, 1]} : vector<16x3xf32> to vector<16x1xf32>
    %256 = vector.broadcast %255 : vector<16x1xf32> to vector<16x128xf32>
    %257 = arith.mulf %254, %256 : vector<16x128xf32>
    %258 = vector.extract_strided_slice %245 {offsets = [0, 1], sizes = [16, 1], strides = [1, 1]} : vector<16x3xf32> to vector<16x1xf32>
    %259 = vector.broadcast %258 : vector<16x1xf32> to vector<16x128xf32>
    %260 = arith.mulf %243, %259 : vector<16x128xf32>
    %261 = arith.addf %257, %260 : vector<16x128xf32>
    %c127_i32_113 = arith.constant 127 : i32
    %262 = tpu.dynamic_rotate %243 by %c127_i32_113 dim 1 : vector<16x128xf32>, i32 -> vector<16x128xf32>
    %c127_i32_114 = arith.constant 127 : i32
    %263 = vector.broadcast %c127_i32_114 : i32 to vector<1x128xi32>
    %264 = arith.cmpi slt, %33, %263 : vector<1x128xi32>
    %cst_115 = arith.constant 0.000000e+00 : f32
    %265 = vector.shape_cast %264 : vector<1x128xi1> to vector<1x128xi1>
    %266 = vector.broadcast %265 : vector<1x128xi1> to vector<16x128xi1>
    %267 = vector.broadcast %cst_115 : f32 to vector<16x128xf32>
    %268 = arith.select %266, %262, %267 : vector<16x128xi1>, vector<16x128xf32>
    %269 = vector.extract_strided_slice %245 {offsets = [0, 2], sizes = [16, 1], strides = [1, 1]} : vector<16x3xf32> to vector<16x1xf32>
    %270 = vector.broadcast %269 : vector<16x1xf32> to vector<16x128xf32>
    %271 = arith.mulf %268, %270 : vector<16x128xf32>
    %272 = arith.addf %261, %271 : vector<16x128xf32>
    %273 = vector.broadcast %247 : vector<16x1xf32> to vector<16x128xf32>
    %274 = arith.addf %272, %273 : vector<16x128xf32>
    %cst_116 = arith.constant 0.000000e+00 : f32
    %275 = vector.broadcast %cst_116 : f32 to vector<16x128xf32>
    %276 = arith.cmpf oge, %274, %275 : vector<16x128xf32>
    %277 = vector.broadcast %215 : f32 to vector<16x128xf32>
    %278 = arith.mulf %277, %274 : vector<16x128xf32>
    %279 = arith.select %276, %274, %278 : vector<16x128xi1>, vector<16x128xf32>
    %cst_117 = arith.constant dense<0.000000e+00> : vector<128xf32>
    %280 = vector.multi_reduction <add>, %279, %cst_117 [0] : vector<16x128xf32> to vector<128xf32>
    %281 = vector.shape_cast %280 : vector<128xf32> to vector<1x128xf32>
    %282 = arith.mulf %279, %279 : vector<16x128xf32>
    %cst_118 = arith.constant dense<0.000000e+00> : vector<128xf32>
    %283 = vector.multi_reduction <add>, %282, %cst_118 [0] : vector<16x128xf32> to vector<128xf32>
    %284 = vector.shape_cast %283 : vector<128xf32> to vector<1x128xf32>
    %cst_119 = arith.constant dense<0.000000e+00> : vector<1x128xf32>
    %285 = tpu.matmul %281, %31, %cst_119 {dimension_numbers = #tpu.dot_dimension_numbers<[1], [0], [0], [1], [0, 0, 1, 1], [], []>} : vector<1x128xf32>, vector<128x128xf32>, vector<1x128xf32> -> vector<1x128xf32>
    %cst_120 = arith.constant dense<0.000000e+00> : vector<1x128xf32>
    %286 = tpu.matmul %284, %31, %cst_120 {dimension_numbers = #tpu.dot_dimension_numbers<[1], [0], [0], [1], [0, 0, 1, 1], [], []>} : vector<1x128xf32>, vector<128x128xf32>, vector<1x128xf32> -> vector<1x128xf32>
    %287 = arith.mulf %285, %32 : vector<1x128xf32>
    %288 = arith.mulf %286, %32 : vector<1x128xf32>
    %289 = arith.mulf %287, %287 : vector<1x128xf32>
    %290 = arith.subf %288, %289 : vector<1x128xf32>
    %291 = vector.broadcast %287 : vector<1x128xf32> to vector<16x128xf32>
    %292 = arith.subf %279, %291 : vector<16x128xf32>
    %293 = math.rsqrt %290 : vector<1x128xf32>
    %294 = vector.broadcast %293 : vector<1x128xf32> to vector<16x128xf32>
    %295 = arith.mulf %292, %294 : vector<16x128xf32>
    %c0_121 = arith.constant 0 : index
    %c0_122 = arith.constant 0 : index
    %c0_123 = arith.constant 0 : index
    %296 = vector.load %arg11[%c0_121, %c0_122, %c0_123] : memref<2x8x16xf32, #tpu.memory_space<vmem>>, vector<1x8x16xf32>
    %297 = vector.shape_cast %296 : vector<1x8x16xf32> to vector<8x16xf32>
    %cst_124 = arith.constant dense<0.000000e+00> : vector<8x128xf32>
    %298 = tpu.matmul %297, %295, %cst_124 {dimension_numbers = #tpu.dot_dimension_numbers<[1], [0], [0], [1], [0, 0, 1, 1], [], []>} : vector<8x16xf32>, vector<16x128xf32>, vector<8x128xf32> -> vector<8x128xf32>
    %c0_125 = arith.constant 0 : index
    %c0_126 = arith.constant 0 : index
    %c0_127 = arith.constant 0 : index
    %299 = vector.load %arg12[%c0_125, %c0_126, %c0_127] : memref<2x8x1xf32, #tpu.memory_space<vmem>>, vector<1x8x1xf32>
    %300 = vector.shape_cast %299 : vector<1x8x1xf32> to vector<8x1xf32>
    %301 = vector.broadcast %300 : vector<8x1xf32> to vector<8x128xf32>
    %302 = arith.addf %298, %301 : vector<8x128xf32>
    %303 = arith.addf %302, %213 : vector<8x128xf32>
    %c0_128 = arith.constant 0 : index
    %c0_129 = arith.constant 0 : index
    %c0_130 = arith.constant 0 : index
    %304 = vector.load %arg13[%c0_128, %c0_129, %c0_130] : memref<2x8x16xf32, #tpu.memory_space<vmem>>, vector<1x8x16xf32>
    %305 = vector.shape_cast %304 : vector<1x8x16xf32> to vector<8x16xf32>
    %cst_131 = arith.constant dense<0.000000e+00> : vector<8x128xf32>
    %306 = tpu.matmul %305, %295, %cst_131 {dimension_numbers = #tpu.dot_dimension_numbers<[1], [0], [0], [1], [0, 0, 1, 1], [], []>} : vector<8x16xf32>, vector<16x128xf32>, vector<8x128xf32> -> vector<8x128xf32>
    %c0_132 = arith.constant 0 : index
    %c0_133 = arith.constant 0 : index
    %c0_134 = arith.constant 0 : index
    %307 = vector.load %arg14[%c0_132, %c0_133, %c0_134] : memref<2x8x1xf32, #tpu.memory_space<vmem>>, vector<1x8x1xf32>
    %308 = vector.shape_cast %307 : vector<1x8x1xf32> to vector<8x1xf32>
    %309 = vector.broadcast %308 : vector<8x1xf32> to vector<8x128xf32>
    %310 = arith.addf %306, %309 : vector<8x128xf32>
    %c2_135 = arith.constant 2 : index
    %311 = memref.load %arg1[%c2_135] : memref<5xf32, #tpu.memory_space<smem>>
    %c3_136 = arith.constant 3 : index
    %312 = memref.load %arg1[%c3_136] : memref<5xf32, #tpu.memory_space<smem>>
    %c1_137 = arith.constant 1 : index
    %c0_138 = arith.constant 0 : index
    %c0_139 = arith.constant 0 : index
    %313 = vector.load %arg7[%c1_137, %c0_138, %c0_139] : memref<2x16x8xf32, #tpu.memory_space<vmem>>, vector<1x16x8xf32>
    %314 = vector.shape_cast %313 : vector<1x16x8xf32> to vector<16x8xf32>
    %cst_140 = arith.constant dense<0.000000e+00> : vector<16x128xf32>
    %315 = tpu.matmul %314, %303, %cst_140 {dimension_numbers = #tpu.dot_dimension_numbers<[1], [0], [0], [1], [0, 0, 1, 1], [], []>} : vector<16x8xf32>, vector<8x128xf32>, vector<16x128xf32> -> vector<16x128xf32>
    %c1_141 = arith.constant 1 : index
    %c0_142 = arith.constant 0 : index
    %c0_143 = arith.constant 0 : index
    %316 = vector.load %arg8[%c1_141, %c0_142, %c0_143] : memref<2x16x1xf32, #tpu.memory_space<vmem>>, vector<1x16x1xf32>
    %317 = vector.shape_cast %316 : vector<1x16x1xf32> to vector<16x1xf32>
    %318 = vector.broadcast %317 : vector<16x1xf32> to vector<16x128xf32>
    %319 = arith.addf %315, %318 : vector<16x128xf32>
    %cst_144 = arith.constant 0.000000e+00 : f32
    %320 = vector.broadcast %cst_144 : f32 to vector<16x128xf32>
    %321 = arith.cmpf oge, %319, %320 : vector<16x128xf32>
    %322 = vector.broadcast %311 : f32 to vector<16x128xf32>
    %323 = arith.mulf %322, %319 : vector<16x128xf32>
    %324 = arith.select %321, %319, %323 : vector<16x128xi1>, vector<16x128xf32>
    %cst_145 = arith.constant dense<0.000000e+00> : vector<128xf32>
    %325 = vector.multi_reduction <add>, %324, %cst_145 [0] : vector<16x128xf32> to vector<128xf32>
    %326 = vector.shape_cast %325 : vector<128xf32> to vector<1x128xf32>
    %327 = arith.mulf %324, %324 : vector<16x128xf32>
    %cst_146 = arith.constant dense<0.000000e+00> : vector<128xf32>
    %328 = vector.multi_reduction <add>, %327, %cst_146 [0] : vector<16x128xf32> to vector<128xf32>
    %329 = vector.shape_cast %328 : vector<128xf32> to vector<1x128xf32>
    %cst_147 = arith.constant dense<0.000000e+00> : vector<1x128xf32>
    %330 = tpu.matmul %326, %31, %cst_147 {dimension_numbers = #tpu.dot_dimension_numbers<[1], [0], [0], [1], [0, 0, 1, 1], [], []>} : vector<1x128xf32>, vector<128x128xf32>, vector<1x128xf32> -> vector<1x128xf32>
    %cst_148 = arith.constant dense<0.000000e+00> : vector<1x128xf32>
    %331 = tpu.matmul %329, %31, %cst_148 {dimension_numbers = #tpu.dot_dimension_numbers<[1], [0], [0], [1], [0, 0, 1, 1], [], []>} : vector<1x128xf32>, vector<128x128xf32>, vector<1x128xf32> -> vector<1x128xf32>
    %332 = arith.mulf %330, %32 : vector<1x128xf32>
    %333 = arith.mulf %331, %32 : vector<1x128xf32>
    %334 = arith.mulf %332, %332 : vector<1x128xf32>
    %335 = arith.subf %333, %334 : vector<1x128xf32>
    %336 = vector.broadcast %332 : vector<1x128xf32> to vector<16x128xf32>
    %337 = arith.subf %324, %336 : vector<16x128xf32>
    %338 = math.rsqrt %335 : vector<1x128xf32>
    %339 = vector.broadcast %338 : vector<1x128xf32> to vector<16x128xf32>
    %340 = arith.mulf %337, %339 : vector<16x128xf32>
    %c1_149 = arith.constant 1 : index
    %c0_150 = arith.constant 0 : index
    %c0_151 = arith.constant 0 : index
    %341 = vector.load %arg9[%c1_149, %c0_150, %c0_151] : memref<2x16x3xf32, #tpu.memory_space<vmem>>, vector<1x16x3xf32>
    %342 = vector.shape_cast %341 : vector<1x16x3xf32> to vector<16x3xf32>
    %c1_152 = arith.constant 1 : index
    %c0_153 = arith.constant 0 : index
    %c0_154 = arith.constant 0 : index
    %343 = vector.load %arg10[%c1_152, %c0_153, %c0_154] : memref<2x16x1xf32, #tpu.memory_space<vmem>>, vector<1x16x1xf32>
    %344 = vector.shape_cast %343 : vector<1x16x1xf32> to vector<16x1xf32>
    %c2_i32_155 = arith.constant 2 : i32
    %345 = tpu.dynamic_rotate %340 by %c2_i32_155 dim 1 : vector<16x128xf32>, i32 -> vector<16x128xf32>
    %c2_i32_156 = arith.constant 2 : i32
    %346 = vector.broadcast %c2_i32_156 : i32 to vector<1x128xi32>
    %347 = arith.cmpi sge, %33, %346 : vector<1x128xi32>
    %cst_157 = arith.constant 0.000000e+00 : f32
    %348 = vector.shape_cast %347 : vector<1x128xi1> to vector<1x128xi1>
    %349 = vector.broadcast %348 : vector<1x128xi1> to vector<16x128xi1>
    %350 = vector.broadcast %cst_157 : f32 to vector<16x128xf32>
    %351 = arith.select %349, %345, %350 : vector<16x128xi1>, vector<16x128xf32>
    %352 = vector.extract_strided_slice %342 {offsets = [0, 0], sizes = [16, 1], strides = [1, 1]} : vector<16x3xf32> to vector<16x1xf32>
    %353 = vector.broadcast %352 : vector<16x1xf32> to vector<16x128xf32>
    %354 = arith.mulf %351, %353 : vector<16x128xf32>
    %355 = vector.extract_strided_slice %342 {offsets = [0, 1], sizes = [16, 1], strides = [1, 1]} : vector<16x3xf32> to vector<16x1xf32>
    %356 = vector.broadcast %355 : vector<16x1xf32> to vector<16x128xf32>
    %357 = arith.mulf %340, %356 : vector<16x128xf32>
    %358 = arith.addf %354, %357 : vector<16x128xf32>
    %c126_i32_158 = arith.constant 126 : i32
    %359 = tpu.dynamic_rotate %340 by %c126_i32_158 dim 1 : vector<16x128xf32>, i32 -> vector<16x128xf32>
    %c126_i32_159 = arith.constant 126 : i32
    %360 = vector.broadcast %c126_i32_159 : i32 to vector<1x128xi32>
    %361 = arith.cmpi slt, %33, %360 : vector<1x128xi32>
    %cst_160 = arith.constant 0.000000e+00 : f32
    %362 = vector.shape_cast %361 : vector<1x128xi1> to vector<1x128xi1>
    %363 = vector.broadcast %362 : vector<1x128xi1> to vector<16x128xi1>
    %364 = vector.broadcast %cst_160 : f32 to vector<16x128xf32>
    %365 = arith.select %363, %359, %364 : vector<16x128xi1>, vector<16x128xf32>
    %366 = vector.extract_strided_slice %342 {offsets = [0, 2], sizes = [16, 1], strides = [1, 1]} : vector<16x3xf32> to vector<16x1xf32>
    %367 = vector.broadcast %366 : vector<16x1xf32> to vector<16x128xf32>
    %368 = arith.mulf %365, %367 : vector<16x128xf32>
    %369 = arith.addf %358, %368 : vector<16x128xf32>
    %370 = vector.broadcast %344 : vector<16x1xf32> to vector<16x128xf32>
    %371 = arith.addf %369, %370 : vector<16x128xf32>
    %cst_161 = arith.constant 0.000000e+00 : f32
    %372 = vector.broadcast %cst_161 : f32 to vector<16x128xf32>
    %373 = arith.cmpf oge, %371, %372 : vector<16x128xf32>
    %374 = vector.broadcast %312 : f32 to vector<16x128xf32>
    %375 = arith.mulf %374, %371 : vector<16x128xf32>
    %376 = arith.select %373, %371, %375 : vector<16x128xi1>, vector<16x128xf32>
    %cst_162 = arith.constant dense<0.000000e+00> : vector<128xf32>
    %377 = vector.multi_reduction <add>, %376, %cst_162 [0] : vector<16x128xf32> to vector<128xf32>
    %378 = vector.shape_cast %377 : vector<128xf32> to vector<1x128xf32>
    %379 = arith.mulf %376, %376 : vector<16x128xf32>
    %cst_163 = arith.constant dense<0.000000e+00> : vector<128xf32>
    %380 = vector.multi_reduction <add>, %379, %cst_163 [0] : vector<16x128xf32> to vector<128xf32>
    %381 = vector.shape_cast %380 : vector<128xf32> to vector<1x128xf32>
    %cst_164 = arith.constant dense<0.000000e+00> : vector<1x128xf32>
    %382 = tpu.matmul %378, %31, %cst_164 {dimension_numbers = #tpu.dot_dimension_numbers<[1], [0], [0], [1], [0, 0, 1, 1], [], []>} : vector<1x128xf32>, vector<128x128xf32>, vector<1x128xf32> -> vector<1x128xf32>
    %cst_165 = arith.constant dense<0.000000e+00> : vector<1x128xf32>
    %383 = tpu.matmul %381, %31, %cst_165 {dimension_numbers = #tpu.dot_dimension_numbers<[1], [0], [0], [1], [0, 0, 1, 1], [], []>} : vector<1x128xf32>, vector<128x128xf32>, vector<1x128xf32> -> vector<1x128xf32>
    %384 = arith.mulf %382, %32 : vector<1x128xf32>
    %385 = arith.mulf %383, %32 : vector<1x128xf32>
    %386 = arith.mulf %384, %384 : vector<1x128xf32>
    %387 = arith.subf %385, %386 : vector<1x128xf32>
    %388 = vector.broadcast %384 : vector<1x128xf32> to vector<16x128xf32>
    %389 = arith.subf %376, %388 : vector<16x128xf32>
    %390 = math.rsqrt %387 : vector<1x128xf32>
    %391 = vector.broadcast %390 : vector<1x128xf32> to vector<16x128xf32>
    %392 = arith.mulf %389, %391 : vector<16x128xf32>
    %c1_166 = arith.constant 1 : index
    %c0_167 = arith.constant 0 : index
    %c0_168 = arith.constant 0 : index
    %393 = vector.load %arg13[%c1_166, %c0_167, %c0_168] : memref<2x8x16xf32, #tpu.memory_space<vmem>>, vector<1x8x16xf32>
    %394 = vector.shape_cast %393 : vector<1x8x16xf32> to vector<8x16xf32>
    %cst_169 = arith.constant dense<0.000000e+00> : vector<8x128xf32>
    %395 = tpu.matmul %394, %392, %cst_169 {dimension_numbers = #tpu.dot_dimension_numbers<[1], [0], [0], [1], [0, 0, 1, 1], [], []>} : vector<8x16xf32>, vector<16x128xf32>, vector<8x128xf32> -> vector<8x128xf32>
    %c1_170 = arith.constant 1 : index
    %c0_171 = arith.constant 0 : index
    %c0_172 = arith.constant 0 : index
    %396 = vector.load %arg14[%c1_170, %c0_171, %c0_172] : memref<2x8x1xf32, #tpu.memory_space<vmem>>, vector<1x8x1xf32>
    %397 = vector.shape_cast %396 : vector<1x8x1xf32> to vector<8x1xf32>
    %398 = vector.broadcast %397 : vector<8x1xf32> to vector<8x128xf32>
    %399 = arith.addf %395, %398 : vector<8x128xf32>
    %400 = arith.addf %310, %399 : vector<8x128xf32>
    %c4 = arith.constant 4 : index
    %401 = memref.load %arg1[%c4] : memref<5xf32, #tpu.memory_space<smem>>
    %cst_173 = arith.constant 0.000000e+00 : f32
    %402 = vector.broadcast %cst_173 : f32 to vector<8x128xf32>
    %403 = arith.cmpf oge, %400, %402 : vector<8x128xf32>
    %404 = vector.broadcast %401 : f32 to vector<8x128xf32>
    %405 = arith.mulf %404, %400 : vector<8x128xf32>
    %406 = arith.select %403, %400, %405 : vector<8x128xi1>, vector<8x128xf32>
    %c0_174 = arith.constant 0 : index
    %c0_175 = arith.constant 0 : index
    %407 = vector.load %arg15[%c0_174, %c0_175] : memref<8x8xf32, #tpu.memory_space<vmem>>, vector<8x8xf32>
    %cst_176 = arith.constant dense<0.000000e+00> : vector<8x128xf32>
    %408 = tpu.matmul %407, %406, %cst_176 {dimension_numbers = #tpu.dot_dimension_numbers<[1], [0], [0], [1], [0, 0, 1, 1], [], []>} : vector<8x8xf32>, vector<8x128xf32>, vector<8x128xf32> -> vector<8x128xf32>
    %c0_177 = arith.constant 0 : index
    %c0_178 = arith.constant 0 : index
    %409 = vector.load %arg16[%c0_177, %c0_178] : memref<8x1xf32, #tpu.memory_space<vmem>>, vector<8x1xf32>
    %410 = vector.broadcast %409 : vector<8x1xf32> to vector<8x128xf32>
    %411 = arith.addf %408, %410 : vector<8x128xf32>
    %cst_179 = arith.constant 0.000000e+00 : f32
    %412 = vector.broadcast %cst_179 : f32 to vector<8x128xf32>
    %413 = arith.subf %412, %411 : vector<8x128xf32>
    %414 = math.exp %413 : vector<8x128xf32>
    %cst_180 = arith.constant 1.000000e+00 : f32
    %415 = vector.broadcast %cst_180 : f32 to vector<8x128xf32>
    %416 = arith.addf %415, %414 : vector<8x128xf32>
    %cst_181 = arith.constant 1.000000e+00 : f32
    %417 = vector.broadcast %cst_181 : f32 to vector<8x128xf32>
    %418 = arith.divf %417, %416 : vector<8x128xf32>
    %419 = arith.mulf %1, %418 : vector<8x128xf32>
    %c0_182 = arith.constant 0 : index
    %c0_183 = arith.constant 0 : index
    %c0_184 = arith.constant 0 : index
    %420 = vector.load %arg19[%c0_182, %c0_183, %c0_184] : memref<1x8x128xf32, #tpu.memory_space<vmem>>, vector<1x8x128xf32>
    %421 = vector.shape_cast %420 : vector<1x8x128xf32> to vector<8x128xf32>
    %422 = vector.shape_cast %419 : vector<8x128xf32> to vector<1x8x128xf32>
    tpu.vector_store %arg19[%c0_182, %c0_183, %c0_184], %422 {strides = array<i32>} : memref<1x8x128xf32, #tpu.memory_space<vmem>>, vector<1x8x128xf32>,
    return
  }
  func.func @transform_0(%arg0: i32) -> i32 {
    %c0_i32 = arith.constant 0 : i32
    %c0_i32_0 = arith.constant 0 : i32
    return %c0_i32 : i32
  }
  func.func @transform_1(%arg0: i32) -> (i32, i32, i32) {
    %c0_i32 = arith.constant 0 : i32
    %c0_i32_0 = arith.constant 0 : i32
    %c0_i32_1 = arith.constant 0 : i32
    return %arg0, %c0_i32, %c0_i32_0 : i32, i32, i32
  }
  func.func @transform_2(%arg0: i32) -> (i32, i32) {
    %c0_i32 = arith.constant 0 : i32
    %c0_i32_0 = arith.constant 0 : i32
    %c0_i32_1 = arith.constant 0 : i32
    return %c0_i32, %c0_i32_0 : i32, i32
  }
  func.func @transform_3(%arg0: i32) -> (i32, i32) {
    %c0_i32 = arith.constant 0 : i32
    %c0_i32_0 = arith.constant 0 : i32
    %c0_i32_1 = arith.constant 0 : i32
    return %c0_i32, %c0_i32_0 : i32, i32
  }
  func.func @transform_4(%arg0: i32) -> (i32, i32) {
    %c0_i32 = arith.constant 0 : i32
    %c0_i32_0 = arith.constant 0 : i32
    %c0_i32_1 = arith.constant 0 : i32
    return %c0_i32, %c0_i32_0 : i32, i32
  }
  func.func @transform_5(%arg0: i32) -> (i32, i32) {
    %c0_i32 = arith.constant 0 : i32
    %c0_i32_0 = arith.constant 0 : i32
    %c0_i32_1 = arith.constant 0 : i32
    return %c0_i32, %c0_i32_0 : i32, i32
  }
  func.func @transform_6(%arg0: i32) -> (i32, i32, i32) {
    %c0_i32 = arith.constant 0 : i32
    %c0_i32_0 = arith.constant 0 : i32
    %c0_i32_1 = arith.constant 0 : i32
    %c0_i32_2 = arith.constant 0 : i32
    return %c0_i32, %c0_i32_0, %c0_i32_1 : i32, i32, i32
  }
  func.func @transform_7(%arg0: i32) -> (i32, i32, i32) {
    %c0_i32 = arith.constant 0 : i32
    %c0_i32_0 = arith.constant 0 : i32
    %c0_i32_1 = arith.constant 0 : i32
    %c0_i32_2 = arith.constant 0 : i32
    return %c0_i32, %c0_i32_0, %c0_i32_1 : i32, i32, i32
  }
  func.func @transform_8(%arg0: i32) -> (i32, i32, i32) {
    %c0_i32 = arith.constant 0 : i32
    %c0_i32_0 = arith.constant 0 : i32
    %c0_i32_1 = arith.constant 0 : i32
    %c0_i32_2 = arith.constant 0 : i32
    return %c0_i32, %c0_i32_0, %c0_i32_1 : i32, i32, i32
  }
  func.func @transform_9(%arg0: i32) -> (i32, i32, i32) {
    %c0_i32 = arith.constant 0 : i32
    %c0_i32_0 = arith.constant 0 : i32
    %c0_i32_1 = arith.constant 0 : i32
    %c0_i32_2 = arith.constant 0 : i32
    return %c0_i32, %c0_i32_0, %c0_i32_1 : i32, i32, i32
  }
  func.func @transform_10(%arg0: i32) -> (i32, i32, i32) {
    %c0_i32 = arith.constant 0 : i32
    %c0_i32_0 = arith.constant 0 : i32
    %c0_i32_1 = arith.constant 0 : i32
    %c0_i32_2 = arith.constant 0 : i32
    return %c0_i32, %c0_i32_0, %c0_i32_1 : i32, i32, i32
  }
  func.func @transform_11(%arg0: i32) -> (i32, i32, i32) {
    %c0_i32 = arith.constant 0 : i32
    %c0_i32_0 = arith.constant 0 : i32
    %c0_i32_1 = arith.constant 0 : i32
    %c0_i32_2 = arith.constant 0 : i32
    return %c0_i32, %c0_i32_0, %c0_i32_1 : i32, i32, i32
  }
  func.func @transform_12(%arg0: i32) -> (i32, i32, i32) {
    %c0_i32 = arith.constant 0 : i32
    %c0_i32_0 = arith.constant 0 : i32
    %c0_i32_1 = arith.constant 0 : i32
    %c0_i32_2 = arith.constant 0 : i32
    return %c0_i32, %c0_i32_0, %c0_i32_1 : i32, i32, i32
  }
  func.func @transform_13(%arg0: i32) -> (i32, i32, i32) {
    %c0_i32 = arith.constant 0 : i32
    %c0_i32_0 = arith.constant 0 : i32
    %c0_i32_1 = arith.constant 0 : i32
    %c0_i32_2 = arith.constant 0 : i32
    return %c0_i32, %c0_i32_0, %c0_i32_1 : i32, i32, i32
  }
  func.func @transform_14(%arg0: i32) -> (i32, i32) {
    %c0_i32 = arith.constant 0 : i32
    %c0_i32_0 = arith.constant 0 : i32
    %c0_i32_1 = arith.constant 0 : i32
    return %c0_i32, %c0_i32_0 : i32, i32
  }
  func.func @transform_15(%arg0: i32) -> (i32, i32) {
    %c0_i32 = arith.constant 0 : i32
    %c0_i32_0 = arith.constant 0 : i32
    %c0_i32_1 = arith.constant 0 : i32
    return %c0_i32, %c0_i32_0 : i32, i32
  }
  func.func @transform_16(%arg0: i32) -> (i32, i32) {
    %c0_i32 = arith.constant 0 : i32
    %c0_i32_0 = arith.constant 0 : i32
    %c0_i32_1 = arith.constant 0 : i32
    return %c0_i32, %c0_i32_0 : i32, i32
  }
  func.func @transform_17(%arg0: i32) -> (i32, i32) {
    %c0_i32 = arith.constant 0 : i32
    %c0_i32_0 = arith.constant 0 : i32
    %c0_i32_1 = arith.constant 0 : i32
    return %c0_i32, %c0_i32_0 : i32, i32
  }
  func.func @transform_18(%arg0: i32) -> (i32, i32, i32) {
    %c0_i32 = arith.constant 0 : i32
    %c0_i32_0 = arith.constant 0 : i32
    %c0_i32_1 = arith.constant 0 : i32
    return %arg0, %c0_i32, %c0_i32_0 : i32, i32, i32
  }
}

</mosaic_0001>

<llo_original>
// kernel: separation_forward.1
$region0: #{separation_forward.1}
  #allocation0 [shape = 'u32[]', space=smem, size = 0x4, offset = 0x4, fixed_abs, tag = 'smem constant byte address 0x4 - core index']
  #allocation1 [shape = 'u32[144,128]{1,0:T(1,128)}', space=vmem, size = 0x12000, scoped, tag = 'internal scratch']
  %s0 = inlined_call_operand.vmem [shape: f32[5], index: 0, kind: input, shape index: {}]
  %s1 = inlined_call_operand.vmem [shape: f32[2,8,128], index: 1, kind: input, shape index: {}]
  %s2 = inlined_call_operand.vmem [shape: f32[8,128], index: 2, kind: input, shape index: {}]
  %s3 = inlined_call_operand.vmem [shape: f32[8,128], index: 3, kind: input, shape index: {}]
  %s4 = inlined_call_operand.vmem [shape: f32[8,8], index: 4, kind: input, shape index: {}]
  %s5 = inlined_call_operand.vmem [shape: f32[8,1], index: 5, kind: input, shape index: {}]
  %s6 = inlined_call_operand.vmem [shape: f32[2,16,8], index: 6, kind: input, shape index: {}]
  %s7 = inlined_call_operand.vmem [shape: f32[2,16,1], index: 7, kind: input, shape index: {}]
  %s8 = inlined_call_operand.vmem [shape: f32[2,16,3], index: 8, kind: input, shape index: {}]
  %s9 = inlined_call_operand.vmem [shape: f32[2,16,1], index: 9, kind: input, shape index: {}]
  %s10 = inlined_call_operand.vmem [shape: f32[2,8,16], index: 10, kind: input, shape index: {}]
  %s11 = inlined_call_operand.vmem [shape: f32[2,8,1], index: 11, kind: input, shape index: {}]
  %s12 = inlined_call_operand.vmem [shape: f32[2,8,16], index: 12, kind: input, shape index: {}]
  %s13 = inlined_call_operand.vmem [shape: f32[2,8,1], index: 13, kind: input, shape index: {}]
  %s14 = inlined_call_operand.vmem [shape: f32[8,8], index: 14, kind: input, shape index: {}]
  %s15 = inlined_call_operand.vmem [shape: f32[8,1], index: 15, kind: input, shape index: {}]
  %s16 = inlined_call_operand.vmem [shape: f32[128,128], index: 16, kind: input, shape index: {}]
  %s17 = inlined_call_operand.vmem [shape: f32[1,128], index: 17, kind: input, shape index: {}]
  %s18 = inlined_call_operand.hbm [shape: f32[2,8,128], index: 18, kind: output, shape index: {}]
  %s19 = sld [smem:[#allocation0]]
  $region109: #{separation_forward.1} parent=0
    _
  %s21 = ssub.s32 1, %s19
  %s22 = scalar_select 0, %s21, %s19
  $region1: #{separation_forward.1} parent=0
    #allocation2 [shape = 'u8[512]{0}', space=smem, size = 0x200, scoped, tag = 'input window, operand 0, single buffered']
    #allocation3 [shape = 's32[2]{0}', space=sflag, size = 0x8, scoped, tag = 'scoped memory for separation_forward.1']
    #allocation4 [shape = 's32[2]{0}', space=sflag, size = 0x8, scoped, tag = 'scoped memory for separation_forward.1']
    #allocation5 [shape = 'u8[8192]{0}', space=vmem, size = 0x2000, scoped, tag = 'output window, operand 0']
    %23 = vsyncpa [#allocation4], 0
    %24 = vsyncpa [#allocation3], 0
    %s25 = scalar_lea.sflag [#allocation3], 1
    %26 = vsyncpa %s25, 0
    loop: start=0, step=1, limit=4
    $region2: #{separation_forward.1} parent=1 // loop_pre_header
      _
    $region3: #{separation_forward.1} parent=1 // loop_header
      %s28 = sphi 0, %s32
      %p29 = scmp.ge.s32.totalorder %s28, 4
      %s36 = sphi 0, %s36
      %s38 = sphi 0, %s36
      %s39 = sphi 0, %s38
      %s53 = sphi 0, %s39
      %s59 = sphi 0, %s61
      %s62 = sphi 0, %s59
      %s63 = sphi 0, %s62
      %s79 = sphi 0, %s63
      %s83 = sphi 0, %s83
      %s85 = sphi 0, %s83
      %s86 = sphi 0, %s85
      %s100 = sphi 0, %s86
      %s104 = sphi 0, %s104
      %s106 = sphi 0, %s104
      %s107 = sphi 0, %s106
      %s121 = sphi 0, %s107
      %s125 = sphi 0, %s125
      %s127 = sphi 0, %s125
      %s128 = sphi 0, %s127
      %s142 = sphi 0, %s128
      %s146 = sphi 0, %s146
      %s148 = sphi 0, %s146
      %s149 = sphi 0, %s148
      %s163 = sphi 0, %s149
      %s167 = sphi 0, %s167
      %s169 = sphi 0, %s167
      %s170 = sphi 0, %s169
      %s184 = sphi 0, %s170
      %s188 = sphi 0, %s188
      %s190 = sphi 0, %s188
      %s191 = sphi 0, %s190
      %s205 = sphi 0, %s191
      %s209 = sphi 0, %s209
      %s211 = sphi 0, %s209
      %s212 = sphi 0, %s211
      %s226 = sphi 0, %s212
      %s230 = sphi 0, %s230
      %s232 = sphi 0, %s230
      %s233 = sphi 0, %s232
      %s247 = sphi 0, %s233
      %s251 = sphi 0, %s251
      %s253 = sphi 0, %s251
      %s254 = sphi 0, %s253
      %s268 = sphi 0, %s254
      %s272 = sphi 0, %s272
      %s274 = sphi 0, %s272
      %s275 = sphi 0, %s274
      %s289 = sphi 0, %s275
      %s293 = sphi 0, %s293
      %s295 = sphi 0, %s293
      %s296 = sphi 0, %s295
      %s310 = sphi 0, %s296
      %s314 = sphi 0, %s314
      %s316 = sphi 0, %s314
      %s317 = sphi 0, %s316
      %s331 = sphi 0, %s317
      %s335 = sphi 0, %s335
      %s337 = sphi 0, %s335
      %s338 = sphi 0, %s337
      %s352 = sphi 0, %s338
      %s356 = sphi 0, %s356
      %s358 = sphi 0, %s356
      %s359 = sphi 0, %s358
      %s373 = sphi 0, %s359
      %s377 = sphi 0, %s377
      %s379 = sphi 0, %s377
      %s380 = sphi 0, %s379
      %s394 = sphi 0, %s380
      %s398 = sphi 0, %s398
      %s400 = sphi 0, %s398
      %s401 = sphi 0, %s400
      %s415 = sphi 0, %s401
      %s421 = sphi 0, %s423
      %s424 = sphi 0, %s421
      %s425 = sphi 0, %s424
      %s441 = sphi 0, %s425
    $region4: #{separation_forward.1} parent=1 // loop_header_branch
      %31 = sbr.rel (%p29) target = $region8
    $region5: #{separation_forward.1} parent=1 // loop_body
      %s33 = ssub.s32 %s28, 1
      %s34 = ssub.s32 %s28, 2
      %s35 = sadd.s32 %s28, 1
      %s37 = sadd.s32 %s36, 1
      %p40 = scmp.eq.s32.totalorder %s28, 1
      %p41 = scmp.ne.s32.totalorder %s36, %s38
      %p42 = scmp.eq.s32.totalorder %s28, 0
      %p43 = por %p41, %p42
      %p44 = scmp.ne.s32.totalorder %s36, %s38
      %p45 = scmp.eq.s32.totalorder %s33, 1
      %p46 = por %p44, %p45
      %p47 = scmp.ne.s32.totalorder %s38, %s39
      %p48 = scmp.eq.s32.totalorder %s33, 0
      %p49 = por %p47, %p48
      %p50 = scmp.ne.s32.totalorder %s38, %s39
      %p51 = scmp.eq.s32.totalorder %s34, 1
      %p52 = por %p50, %p51
      %p54 = scmp.ne.s32.totalorder %s39, %s53
      %p55 = scmp.eq.s32.totalorder %s34, 0
      %p56 = por %p54, %p55
      %s57 = ssub.s32 %s28, %s35
      %p58 = scmp.eq.s32.totalorder %s57, 0
      %s60 = sadd.s32 %s59, 1
      %s61 = scalar_select %p58, %s59, %s60
      %p64 = pneg %p58
      %p65 = scmp.eq.s32.totalorder %s28, 1
      %p66 = por %p64, %p65
      %p67 = scmp.ne.s32.totalorder %s59, %s62
      %p68 = scmp.eq.s32.totalorder %s28, 0
      %p69 = por %p67, %p68
      %p70 = scmp.ne.s32.totalorder %s59, %s62
      %p71 = scmp.eq.s32.totalorder %s33, 1
      %p72 = por %p70, %p71
      %p73 = scmp.ne.s32.totalorder %s62, %s63
      %p74 = scmp.eq.s32.totalorder %s33, 0
      %p75 = por %p73, %p74
      %p76 = scmp.ne.s32.totalorder %s62, %s63
      %p77 = scmp.eq.s32.totalorder %s34, 1
      %p78 = por %p76, %p77
      %p80 = scmp.ne.s32.totalorder %s63, %s79
      %p81 = scmp.eq.s32.totalorder %s34, 0
      %p82 = por %p80, %p81
      %s84 = sadd.s32 %s83, 1
      %p87 = scmp.eq.s32.totalorder %s28, 1
      %p88 = scmp.ne.s32.totalorder %s83, %s85
      %p89 = scmp.eq.s32.totalorder %s28, 0
      %p90 = por %p88, %p89
      %p91 = scmp.ne.s32.totalorder %s83, %s85
      %p92 = scmp.eq.s32.totalorder %s33, 1
      %p93 = por %p91, %p92
      %p94 = scmp.ne.s32.totalorder %s85, %s86
      %p95 = scmp.eq.s32.totalorder %s33, 0
      %p96 = por %p94, %p95
      %p97 = scmp.ne.s32.totalorder %s85, %s86
      %p98 = scmp.eq.s32.totalorder %s34, 1
      %p99 = por %p97, %p98
      %p101 = scmp.ne.s32.totalorder %s86, %s100
      %p102 = scmp.eq.s32.totalorder %s34, 0
      %p103 = por %p101, %p102
      %s105 = sadd.s32 %s104, 1
      %p108 = scmp.eq.s32.totalorder %s28, 1
      %p109 = scmp.ne.s32.totalorder %s104, %s106
      %p110 = scmp.eq.s32.totalorder %s28, 0
      %p111 = por %p109, %p110
      %p112 = scmp.ne.s32.totalorder %s104, %s106
      %p113 = scmp.eq.s32.totalorder %s33, 1
      %p114 = por %p112, %p113
      %p115 = scmp.ne.s32.totalorder %s106, %s107
      %p116 = scmp.eq.s32.totalorder %s33, 0
      %p117 = por %p115, %p116
      %p118 = scmp.ne.s32.totalorder %s106, %s107
      %p119 = scmp.eq.s32.totalorder %s34, 1
      %p120 = por %p118, %p119
      %p122 = scmp.ne.s32.totalorder %s107, %s121
      %p123 = scmp.eq.s32.totalorder %s34, 0
      %p124 = por %p122, %p123
      %s126 = sadd.s32 %s125, 1
      %p129 = scmp.eq.s32.totalorder %s28, 1
      %p130 = scmp.ne.s32.totalorder %s125, %s127
      %p131 = scmp.eq.s32.totalorder %s28, 0
      %p132 = por %p130, %p131
      %p133 = scmp.ne.s32.totalorder %s125, %s127
      %p134 = scmp.eq.s32.totalorder %s33, 1
      %p135 = por %p133, %p134
      %p136 = scmp.ne.s32.totalorder %s127, %s128
      %p137 = scmp.eq.s32.totalorder %s33, 0
      %p138 = por %p136, %p137
      %p139 = scmp.ne.s32.totalorder %s127, %s128
      %p140 = scmp.eq.s32.totalorder %s34, 1
      %p141 = por %p139, %p140
      %p143 = scmp.ne.s32.totalorder %s128, %s142
      %p144 = scmp.eq.s32.totalorder %s34, 0
      %p145 = por %p143, %p144
      %s147 = sadd.s32 %s146, 1
      %p150 = scmp.eq.s32.totalorder %s28, 1
      %p151 = scmp.ne.s32.totalorder %s146, %s148
      %p152 = scmp.eq.s32.totalorder %s28, 0
      %p153 = por %p151, %p152
      %p154 = scmp.ne.s32.totalorder %s146, %s148
      %p155 = scmp.eq.s32.totalorder %s33, 1
      %p156 = por %p154, %p155
      %p157 = scmp.ne.s32.totalorder %s148, %s149
      %p158 = scmp.eq.s32.totalorder %s33, 0
      %p159 = por %p157, %p158
      %p160 = scmp.ne.s32.totalorder %s148, %s149
      %p161 = scmp.eq.s32.totalorder %s34, 1
      %p162 = por %p160, %p161
      %p164 = scmp.ne.s32.totalorder %s149, %s163
      %p165 = scmp.eq.s32.totalorder %s34, 0
      %p166 = por %p164, %p165
      %s168 = sadd.s32 %s167, 1
      %p171 = scmp.eq.s32.totalorder %s28, 1
      %p172 = scmp.ne.s32.totalorder %s167, %s169
      %p173 = scmp.eq.s32.totalorder %s28, 0
      %p174 = por %p172, %p173
      %p175 = scmp.ne.s32.totalorder %s167, %s169
      %p176 = scmp.eq.s32.totalorder %s33, 1
      %p177 = por %p175, %p176
      %p178 = scmp.ne.s32.totalorder %s169, %s170
      %p179 = scmp.eq.s32.totalorder %s33, 0
      %p180 = por %p178, %p179
      %p181 = scmp.ne.s32.totalorder %s169, %s170
      %p182 = scmp.eq.s32.totalorder %s34, 1
      %p183 = por %p181, %p182
      %p185 = scmp.ne.s32.totalorder %s170, %s184
      %p186 = scmp.eq.s32.totalorder %s34, 0
      %p187 = por %p185, %p186
      %s189 = sadd.s32 %s188, 1
      %p192 = scmp.eq.s32.totalorder %s28, 1
      %p193 = scmp.ne.s32.totalorder %s188, %s190
      %p194 = scmp.eq.s32.totalorder %s28, 0
      %p195 = por %p193, %p194
      %p196 = scmp.ne.s32.totalorder %s188, %s190
      %p197 = scmp.eq.s32.totalorder %s33, 1
      %p198 = por %p196, %p197
      %p199 = scmp.ne.s32.totalorder %s190, %s191
      %p200 = scmp.eq.s32.totalorder %s33, 0
      %p201 = por %p199, %p200
      %p202 = scmp.ne.s32.totalorder %s190, %s191
      %p203 = scmp.eq.s32.totalorder %s34, 1
      %p204 = por %p202, %p203
      %p206 = scmp.ne.s32.totalorder %s191, %s205
      %p207 = scmp.eq.s32.totalorder %s34, 0
      %p208 = por %p206, %p207
      %s210 = sadd.s32 %s209, 1
      %p213 = scmp.eq.s32.totalorder %s28, 1
      %p214 = scmp.ne.s32.totalorder %s209, %s211
      %p215 = scmp.eq.s32.totalorder %s28, 0
      %p216 = por %p214, %p215
      %p217 = scmp.ne.s32.totalorder %s209, %s211
      %p218 = scmp.eq.s32.totalorder %s33, 1
      %p219 = por %p217, %p218
      %p220 = scmp.ne.s32.totalorder %s211, %s212
      %p221 = scmp.eq.s32.totalorder %s33, 0
      %p222 = por %p220, %p221
      %p223 = scmp.ne.s32.totalorder %s211, %s212
      %p224 = scmp.eq.s32.totalorder %s34, 1
      %p225 = por %p223, %p224
      %p227 = scmp.ne.s32.totalorder %s212, %s226
      %p228 = scmp.eq.s32.totalorder %s34, 0
      %p229 = por %p227, %p228
      %s231 = sadd.s32 %s230, 1
      %p234 = scmp.eq.s32.totalorder %s28, 1
      %p235 = scmp.ne.s32.totalorder %s230, %s232
      %p236 = scmp.eq.s32.totalorder %s28, 0
      %p237 = por %p235, %p236
      %p238 = scmp.ne.s32.totalorder %s230, %s232
      %p239 = scmp.eq.s32.totalorder %s33, 1
      %p240 = por %p238, %p239
      %p241 = scmp.ne.s32.totalorder %s232, %s233
      %p242 = scmp.eq.s32.totalorder %s33, 0
      %p243 = por %p241, %p242
      %p244 = scmp.ne.s32.totalorder %s232, %s233
      %p245 = scmp.eq.s32.totalorder %s34, 1
      %p246 = por %p244, %p245
      %p248 = scmp.ne.s32.totalorder %s233, %s247
      %p249 = scmp.eq.s32.totalorder %s34, 0
      %p250 = por %p248, %p249
      %s252 = sadd.s32 %s251, 1
      %p255 = scmp.eq.s32.totalorder %s28, 1
      %p256 = scmp.ne.s32.totalorder %s251, %s253
      %p257 = scmp.eq.s32.totalorder %s28, 0
      %p258 = por %p256, %p257
      %p259 = scmp.ne.s32.totalorder %s251, %s253
      %p260 = scmp.eq.s32.totalorder %s33, 1
      %p261 = por %p259, %p260
      %p262 = scmp.ne.s32.totalorder %s253, %s254
      %p263 = scmp.eq.s32.totalorder %s33, 0
      %p264 = por %p262, %p263
      %p265 = scmp.ne.s32.totalorder %s253, %s254
      %p266 = scmp.eq.s32.totalorder %s34, 1
      %p267 = por %p265, %p266
      %p269 = scmp.ne.s32.totalorder %s254, %s268
      %p270 = scmp.eq.s32.totalorder %s34, 0
      %p271 = por %p269, %p270
      %s273 = sadd.s32 %s272, 1
      %p276 = scmp.eq.s32.totalorder %s28, 1
      %p277 = scmp.ne.s32.totalorder %s272, %s274
      %p278 = scmp.eq.s32.totalorder %s28, 0
      %p279 = por %p277, %p278
      %p280 = scmp.ne.s32.totalorder %s272, %s274
      %p281 = scmp.eq.s32.totalorder %s33, 1
      %p282 = por %p280, %p281
      %p283 = scmp.ne.s32.totalorder %s274, %s275
      %p284 = scmp.eq.s32.totalorder %s33, 0
      %p285 = por %p283, %p284
      %p286 = scmp.ne.s32.totalorder %s274, %s275
      %p287 = scmp.eq.s32.totalorder %s34, 1
      %p288 = por %p286, %p287
      %p290 = scmp.ne.s32.totalorder %s275, %s289
      %p291 = scmp.eq.s32.totalorder %s34, 0
      %p292 = por %p290, %p291
      %s294 = sadd.s32 %s293, 1
      %p297 = scmp.eq.s32.totalorder %s28, 1
      %p298 = scmp.ne.s32.totalorder %s293, %s295
      %p299 = scmp.eq.s32.totalorder %s28, 0
      %p300 = por %p298, %p299
      %p301 = scmp.ne.s32.totalorder %s293, %s295
      %p302 = scmp.eq.s32.totalorder %s33, 1
      %p303 = por %p301, %p302
      %p304 = scmp.ne.s32.totalorder %s295, %s296
      %p305 = scmp.eq.s32.totalorder %s33, 0
      %p306 = por %p304, %p305
      %p307 = scmp.ne.s32.totalorder %s295, %s296
      %p308 = scmp.eq.s32.totalorder %s34, 1
      %p309 = por %p307, %p308
      %p311 = scmp.ne.s32.totalorder %s296, %s310
      %p312 = scmp.eq.s32.totalorder %s34, 0
      %p313 = por %p311, %p312
      %s315 = sadd.s32 %s314, 1
      %p318 = scmp.eq.s32.totalorder %s28, 1
      %p319 = scmp.ne.s32.totalorder %s314, %s316
      %p320 = scmp.eq.s32.totalorder %s28, 0
      %p321 = por %p319, %p320
      %p322 = scmp.ne.s32.totalorder %s314, %s316
      %p323 = scmp.eq.s32.totalorder %s33, 1
      %p324 = por %p322, %p323
      %p325 = scmp.ne.s32.totalorder %s316, %s317
      %p326 = scmp.eq.s32.totalorder %s33, 0
      %p327 = por %p325, %p326
      %p328 = scmp.ne.s32.totalorder %s316, %s317
      %p329 = scmp.eq.s32.totalorder %s34, 1
      %p330 = por %p328, %p329
      %p332 = scmp.ne.s32.totalorder %s317, %s331
      %p333 = scmp.eq.s32.totalorder %s34, 0
      %p334 = por %p332, %p333
      %s336 = sadd.s32 %s335, 1
      %p339 = scmp.eq.s32.totalorder %s28, 1
      %p340 = scmp.ne.s32.totalorder %s335, %s337
      %p341 = scmp.eq.s32.totalorder %s28, 0
      %p342 = por %p340, %p341
      %p343 = scmp.ne.s32.totalorder %s335, %s337
      %p344 = scmp.eq.s32.totalorder %s33, 1
      %p345 = por %p343, %p344
      %p346 = scmp.ne.s32.totalorder %s337, %s338
      %p347 = scmp.eq.s32.totalorder %s33, 0
      %p348 = por %p346, %p347
      %p349 = scmp.ne.s32.totalorder %s337, %s338
      %p350 = scmp.eq.s32.totalorder %s34, 1
      %p351 = por %p349, %p350
      %p353 = scmp.ne.s32.totalorder %s338, %s352
      %p354 = scmp.eq.s32.totalorder %s34, 0
      %p355 = por %p353, %p354
      %s357 = sadd.s32 %s356, 1
      %p360 = scmp.eq.s32.totalorder %s28, 1
      %p361 = scmp.ne.s32.totalorder %s356, %s358
      %p362 = scmp.eq.s32.totalorder %s28, 0
      %p363 = por %p361, %p362
      %p364 = scmp.ne.s32.totalorder %s356, %s358
      %p365 = scmp.eq.s32.totalorder %s33, 1
      %p366 = por %p364, %p365
      %p367 = scmp.ne.s32.totalorder %s358, %s359
      %p368 = scmp.eq.s32.totalorder %s33, 0
      %p369 = por %p367, %p368
      %p370 = scmp.ne.s32.totalorder %s358, %s359
      %p371 = scmp.eq.s32.totalorder %s34, 1
      %p372 = por %p370, %p371
      %p374 = scmp.ne.s32.totalorder %s359, %s373
      %p375 = scmp.eq.s32.totalorder %s34, 0
      %p376 = por %p374, %p375
      %s378 = sadd.s32 %s377, 1
      %p381 = scmp.eq.s32.totalorder %s28, 1
      %p382 = scmp.ne.s32.totalorder %s377, %s379
      %p383 = scmp.eq.s32.totalorder %s28, 0
      %p384 = por %p382, %p383
      %p385 = scmp.ne.s32.totalorder %s377, %s379
      %p386 = scmp.eq.s32.totalorder %s33, 1
      %p387 = por %p385, %p386
      %p388 = scmp.ne.s32.totalorder %s379, %s380
      %p389 = scmp.eq.s32.totalorder %s33, 0
      %p390 = por %p388, %p389
      %p391 = scmp.ne.s32.totalorder %s379, %s380
      %p392 = scmp.eq.s32.totalorder %s34, 1
      %p393 = por %p391, %p392
      %p395 = scmp.ne.s32.totalorder %s380, %s394
      %p396 = scmp.eq.s32.totalorder %s34, 0
      %p397 = por %p395, %p396
      %s399 = sadd.s32 %s398, 1
      %p402 = scmp.eq.s32.totalorder %s28, 1
      %p403 = scmp.ne.s32.totalorder %s398, %s400
      %p404 = scmp.eq.s32.totalorder %s28, 0
      %p405 = por %p403, %p404
      %p406 = scmp.ne.s32.totalorder %s398, %s400
      %p407 = scmp.eq.s32.totalorder %s33, 1
      %p408 = por %p406, %p407
      %p409 = scmp.ne.s32.totalorder %s400, %s401
      %p410 = scmp.eq.s32.totalorder %s33, 0
      %p411 = por %p409, %p410
      %p412 = scmp.ne.s32.totalorder %s400, %s401
      %p413 = scmp.eq.s32.totalorder %s34, 1
      %p414 = por %p412, %p413
      %p416 = scmp.ne.s32.totalorder %s401, %s415
      %p417 = scmp.eq.s32.totalorder %s34, 0
      %p418 = por %p416, %p417
      %s419 = ssub.s32 %s28, %s35
      %p420 = scmp.eq.s32.totalorder %s419, 0
      %s422 = sadd.s32 %s421, 1
      %s423 = scalar_select %p420, %s421, %s422
      %p426 = pneg %p420
      %p427 = scmp.eq.s32.totalorder %s28, 1
      %p428 = por %p426, %p427
      %p429 = scmp.ne.s32.totalorder %s421, %s424
      %p430 = scmp.eq.s32.totalorder %s28, 0
      %p431 = por %p429, %p430
      %p432 = scmp.ne.s32.totalorder %s421, %s424
      %p433 = scmp.eq.s32.totalorder %s33, 1
      %p434 = por %p432, %p433
      %p435 = scmp.ne.s32.totalorder %s424, %s425
      %p436 = scmp.eq.s32.totalorder %s33, 0
      %p437 = por %p435, %p436
      %p438 = scmp.ne.s32.totalorder %s424, %s425
      %p439 = scmp.eq.s32.totalorder %s34, 1
      %p440 = por %p438, %p439
      %p442 = scmp.ne.s32.totalorder %s425, %s441
      %p443 = scmp.eq.s32.totalorder %s34, 0
      %p444 = por %p442, %p443
      %p445 = scmp.le.s32.totalorder 1, %s28
      %p446 = scmp.lt.s32.totalorder %s28, 3
      %p447 = pnand %p445, %p446
      %p448 = pneg %p447
      // Predicated region
      $region9: #{separation_forward.1} parent=5 // pred_check
        _
      $region10: #{separation_forward.1} parent=5 // pred_check_branch
        %450 = sbr.rel (%p447) target = $region12
      $region11: #{separation_forward.1} parent=5 // pred_region
        %s451 = ssub.s32 %s28, 1
        // Predicated region
        $region13: #{separation_forward.1} parent=11 // pred_check
          %p452 = pneg %p49
        $region14: #{separation_forward.1} parent=11 // pred_check_branch
          %454 = sbr.rel (%p452) target = $region16
        $region15: #{separation_forward.1} parent=11 // pred_region
          %s456 = ssub.s32 16, 16
          %457 = vsyncadd [#allocation4], %s456
          %s459 = sshll.u32 %s0, 4
          %s460 = int_to_ptr.vmem [resolvable:$true] %s459
          %462 = dma.vmem_to_smem %s460, 16, [#allocation2], [#allocation4]
        $region16: #{separation_forward.1} parent=11 // pred_fallthru
          _
        // Predicated region
        $region17: #{separation_forward.1} parent=11 // pred_check
          %p463 = pneg %p96
        $region18: #{separation_forward.1} parent=11 // pred_check_branch
          %465 = sbr.rel (%p463) target = $region20
        $region19: #{separation_forward.1} parent=11 // pred_region
          _
        $region20: #{separation_forward.1} parent=11 // pred_fallthru
          _
        // Predicated region
        $region21: #{separation_forward.1} parent=11 // pred_check
          %p466 = pneg %p117
        $region22: #{separation_forward.1} parent=11 // pred_check_branch
          %468 = sbr.rel (%p466) target = $region24
        $region23: #{separation_forward.1} parent=11 // pred_region
          _
        $region24: #{separation_forward.1} parent=11 // pred_fallthru
          _
        // Predicated region
        $region25: #{separation_forward.1} parent=11 // pred_check
          %p469 = pneg %p138
        $region26: #{separation_forward.1} parent=11 // pred_check_branch
          %471 = sbr.rel (%p469) target = $region28
        $region27: #{separation_forward.1} parent=11 // pred_region
          _
        $region28: #{separation_forward.1} parent=11 // pred_fallthru
          _
        // Predicated region
        $region29: #{separation_forward.1} parent=11 // pred_check
          %p472 = pneg %p159
        $region30: #{separation_forward.1} parent=11 // pred_check_branch
          %474 = sbr.rel (%p472) target = $region32
        $region31: #{separation_forward.1} parent=11 // pred_region
          _
        $region32: #{separation_forward.1} parent=11 // pred_fallthru
          _
        // Predicated region
        $region33: #{separation_forward.1} parent=11 // pred_check
          %p475 = pneg %p180
        $region34: #{separation_forward.1} parent=11 // pred_check_branch
          %477 = sbr.rel (%p475) target = $region36
        $region35: #{separation_forward.1} parent=11 // pred_region
          _
        $region36: #{separation_forward.1} parent=11 // pred_fallthru
          _
        // Predicated region
        $region37: #{separation_forward.1} parent=11 // pred_check
          %p478 = pneg %p201
        $region38: #{separation_forward.1} parent=11 // pred_check_branch
          %480 = sbr.rel (%p478) target = $region40
        $region39: #{separation_forward.1} parent=11 // pred_region
          _
        $region40: #{separation_forward.1} parent=11 // pred_fallthru
          _
        // Predicated region
        $region41: #{separation_forward.1} parent=11 // pred_check
          %p481 = pneg %p222
        $region42: #{separation_forward.1} parent=11 // pred_check_branch
          %483 = sbr.rel (%p481) target = $region44
        $region43: #{separation_forward.1} parent=11 // pred_region
          _
        $region44: #{separation_forward.1} parent=11 // pred_fallthru
          _
        // Predicated region
        $region45: #{separation_forward.1} parent=11 // pred_check
          %p484 = pneg %p243
        $region46: #{separation_forward.1} parent=11 // pred_check_branch
          %486 = sbr.rel (%p484) target = $region48
        $region47: #{separation_forward.1} parent=11 // pred_region
          _
        $region48: #{separation_forward.1} parent=11 // pred_fallthru
          _
        // Predicated region
        $region49: #{separation_forward.1} parent=11 // pred_check
          %p487 = pneg %p264
        $region50: #{separation_forward.1} parent=11 // pred_check_branch
          %489 = sbr.rel (%p487) target = $region52
        $region51: #{separation_forward.1} parent=11 // pred_region
          _
        $region52: #{separation_forward.1} parent=11 // pred_fallthru
          _
        // Predicated region
        $region53: #{separation_forward.1} parent=11 // pred_check
          %p490 = pneg %p285
        $region54: #{separation_forward.1} parent=11 // pred_check_branch
          %492 = sbr.rel (%p490) target = $region56
        $region55: #{separation_forward.1} parent=11 // pred_region
          _
        $region56: #{separation_forward.1} parent=11 // pred_fallthru
          _
        // Predicated region
        $region57: #{separation_forward.1} parent=11 // pred_check
          %p493 = pneg %p306
        $region58: #{separation_forward.1} parent=11 // pred_check_branch
          %495 = sbr.rel (%p493) target = $region60
        $region59: #{separation_forward.1} parent=11 // pred_region
          _
        $region60: #{separation_forward.1} parent=11 // pred_fallthru
          _
        // Predicated region
        $region61: #{separation_forward.1} parent=11 // pred_check
          %p496 = pneg %p327
        $region62: #{separation_forward.1} parent=11 // pred_check_branch
          %498 = sbr.rel (%p496) target = $region64
        $region63: #{separation_forward.1} parent=11 // pred_region
          _
        $region64: #{separation_forward.1} parent=11 // pred_fallthru
          _
        // Predicated region
        $region65: #{separation_forward.1} parent=11 // pred_check
          %p499 = pneg %p348
        $region66: #{separation_forward.1} parent=11 // pred_check_branch
          %501 = sbr.rel (%p499) target = $region68
        $region67: #{separation_forward.1} parent=11 // pred_region
          _
        $region68: #{separation_forward.1} parent=11 // pred_fallthru
          _
        // Predicated region
        $region69: #{separation_forward.1} parent=11 // pred_check
          %p502 = pneg %p369
        $region70: #{separation_forward.1} parent=11 // pred_check_branch
          %504 = sbr.rel (%p502) target = $region72
        $region71: #{separation_forward.1} parent=11 // pred_region
          _
        $region72: #{separation_forward.1} parent=11 // pred_fallthru
          _
        // Predicated region
        $region73: #{separation_forward.1} parent=11 // pred_check
          %p505 = pneg %p390
        $region74: #{separation_forward.1} parent=11 // pred_check_branch
          %507 = sbr.rel (%p505) target = $region76
        $region75: #{separation_forward.1} parent=11 // pred_region
          _
        $region76: #{separation_forward.1} parent=11 // pred_fallthru
          _
        // Predicated region
        $region77: #{separation_forward.1} parent=11 // pred_check
          %p508 = pneg %p411
        $region78: #{separation_forward.1} parent=11 // pred_check_branch
          %510 = sbr.rel (%p508) target = $region80
        $region79: #{separation_forward.1} parent=11 // pred_region
          _
        $region80: #{separation_forward.1} parent=11 // pred_fallthru
          _
      $region12: #{separation_forward.1} parent=5 // pred_fallthru
        _
      %p511 = scmp.lt.s32.totalorder %s28, 2
      // Predicated region
      $region81: #{separation_forward.1} parent=5 // pred_check
        %p512 = pneg %p511
      $region82: #{separation_forward.1} parent=5 // pred_check_branch
        %514 = sbr.rel (%p512) target = $region84
      $region83: #{separation_forward.1} parent=5 // pred_region
        // Predicated region
        $region85: #{separation_forward.1} parent=83 // pred_check
          %p515 = pneg %p69
        $region86: #{separation_forward.1} parent=83 // pred_check_branch
          %517 = sbr.rel (%p515) target = $region88
        $region87: #{separation_forward.1} parent=83 // pred_region
          %p518 = scmp.lt.s32.totalorder %s28, 1
          %s519 = scalar_select %p518, %s28, 1
          %s520 = smul.addr %s519, 8
          %s521 = scalar_lea.vmem %s1, %s520
        $region88: #{separation_forward.1} parent=83 // pred_fallthru
          _
      $region84: #{separation_forward.1} parent=5 // pred_fallthru
        _
      %p522 = scmp.le.s32.totalorder 1, %s28
      %p523 = scmp.lt.s32.totalorder %s28, 3
      %p524 = pnand %p522, %p523
      %p525 = pneg %p524
      // Predicated region
      $region89: #{separation_forward.1} parent=5 // pred_check
        _
      $region90: #{separation_forward.1} parent=5 // pred_check_branch
        %527 = sbr.rel (%p524) target = $region92
      $region91: #{separation_forward.1} parent=5 // pred_region
        %s528 = ssub.s32 %s28, 1
        // Predicated region
        $region93: #{separation_forward.1} parent=91 // pred_check
          %p529 = pneg %p49
        $region94: #{separation_forward.1} parent=91 // pred_check_branch
          %531 = sbr.rel (%p529) target = $region96
        $region95: #{separation_forward.1} parent=91 // pred_region
          %532 = dma.done [#allocation4], 16
        $region96: #{separation_forward.1} parent=91 // pred_fallthru
          _
        %533 = sfence
        %p534 = pneg %p49
        %p535 = pneg %p46
        %p536 = scmp.lt.s32.totalorder %s33, 1
        %s537 = scalar_select %p536, %s33, 1
        %s538 = smul.addr %s537, 8
        %s539 = scalar_lea.vmem %s1, %s538
        %p540 = pneg %p75
        %p541 = pneg %p72
        %p542 = pneg %p96
        %p543 = pneg %p93
        %p544 = pneg %p117
        %p545 = pneg %p114
        %p546 = pneg %p138
        %p547 = pneg %p135
        %p548 = pneg %p159
        %p549 = pneg %p156
        %p550 = pneg %p180
        %p551 = pneg %p177
        %p552 = pneg %p201
        %p553 = pneg %p198
        %p554 = pneg %p222
        %p555 = pneg %p219
        %p556 = pneg %p243
        %p557 = pneg %p240
        %p558 = pneg %p264
        %p559 = pneg %p261
        %p560 = pneg %p285
        %p561 = pneg %p282
        %p562 = pneg %p306
        %p563 = pneg %p303
        %p564 = pneg %p327
        %p565 = pneg %p324
        %p566 = pneg %p348
        %p567 = pneg %p345
        %p568 = pneg %p369
        %p569 = pneg %p366
        %p570 = pneg %p390
        %p571 = pneg %p387
        %p572 = pneg %p411
        %p573 = pneg %p408
        %p574 = pneg %p437
        %p575 = pneg %p434
        %s576 = sand.u32 %s424, 1
        %s577 = scalar_lea.sflag [#allocation3], %s576
        %s578 = sand.u32 %s424, 1
        %s579 = smul.addr %s578, 8
        %s580 = scalar_lea.vmem [#allocation5], %s579
        %p581 = scmp.lt.s32.totalorder %s33, 1
        %s582 = scalar_select %p581, %s33, 1
        %s583 = smul.addr %s582, 8
        %s584 = scalar_lea.vmem %s1, %s583
        %v585 = vld [vmem:[%s584] sm:$0xff]
        %586 = vadd.xlane.f32.xlu0 %v585
        %v587 = vpop.xlane.xlu0 %586
        %v588 = vrot.slane %v587, 4
        %v589 = vadd.f32 %v587, %v588
        %v590 = vrot.slane %v589, 2
        %v591 = vadd.f32 %v589, %v590
        %v592 = vrot.slane %v591, 1
        %v593 = vadd.f32 %v591, %v592
        %v594 = vmul.f32 %v593, 0.0009765625
        %v595 = vsub.f32 %v585, %v594
        %v596 = vmul.f32 %v595, %v595
        %597 = vadd.xlane.f32.xlu0 %v596
        %v598 = vpop.xlane.xlu0 %597
        %v599 = vrot.slane %v598, 4
        %v600 = vadd.f32 %v598, %v599
        %v601 = vrot.slane %v600, 2
        %v602 = vadd.f32 %v600, %v601
        %v603 = vrot.slane %v602, 1
        %v604 = vadd.f32 %v602, %v603
        %v605 = vmul.f32 %v604, 0.0009765625
        %v606 = vadd.f32 %v605, 1e-05
        %v607 = vrsqrt.pop %v606
        %v608 = vmul.f32 %v595, %v607
        %v609 = vld [vmem:[%s2] sm:$0xff]
        %v610 = vmul.f32 %v608, %v609
        %v611 = vld [vmem:[%s3] sm:$0xff]
        %v612 = vadd.f32 %v610, %v611
        %v613 = vld [vmem:[%s4] sm:$0xff]
        %v614 = vld [vmem:[%s5] sm:$0xff]
        %616 = vset.pattern.permute.xlu0 0
        %617 = vperm.xlu0 %616, %v614
        %v618 = vpop.permute.xlu0 %617
        %vm620 = vcmask 64512
        %v622 = vsel %vm620, %v613, 0
        %624 = vmatprep.subr.mxu0 0.0
        %625 = vmatpush1.msra.mxu0 %v612
        %626 = vmatprep.subr.mxu0 0.0
        %627 = vmatpush1.msra.mxu0 0.0
        %628 = vmatprep.subr.mxu0 0.0
        %629 = vmatpush1.msra.mxu0 0.0
        %630 = vmatprep.subr.mxu0 0.0
        %631 = vmatpush1.msra.mxu0 0.0
        %632 = vmatprep.subr.mxu0 0.0
        %633 = vmatpush1.msra.mxu0 0.0
        %634 = vmatprep.subr.mxu0 0.0
        %635 = vmatpush1.msra.mxu0 0.0
        %636 = vmatprep.subr.mxu0 0.0
        %637 = vmatpush1.msra.mxu0 0.0
        %638 = vmatprep.subr.mxu0 0.0
        %639 = vmatpush1.msra.mxu0 0.0
        %640 = vmatprep.subr.mxu0 0.0
        %641 = vmatpush1.msra.mxu0 0.0
        %642 = vmatprep.subr.mxu0 0.0
        %643 = vmatpush1.msra.mxu0 0.0
        %644 = vmatprep.subr.mxu0 0.0
        %645 = vmatpush1.msra.mxu0 0.0
        %646 = vmatprep.subr.mxu0 0.0
        %647 = vmatpush1.msra.mxu0 0.0
        %648 = vmatprep.subr.mxu0 0.0
        %649 = vmatpush1.msra.mxu0 0.0
        %650 = vmatprep.subr.mxu0 0.0
        %651 = vmatpush1.msra.mxu0 0.0
        %652 = vmatprep.subr.mxu0 0.0
        %653 = vmatpush1.msra.mxu0 0.0
        %654 = vmatprep.subr.mxu0 0.0
        %655 = vmatpush1.msra.mxu0 0.0
        %656 = vmatprep.subr.mxu0 0.0
        %657 = vmatpush1.msra.mxu0 0.0
        %658 = vmatprep.subr.mxu0 0.0
        %659 = vmatpush1.msra.mxu0 0.0
        %660 = vmatprep.subr.mxu0 0.0
        %661 = vmatpush1.msra.mxu0 0.0
        %662 = vmatprep.subr.mxu0 0.0
        %663 = vmatpush1.msra.mxu0 0.0
        %664 = vmatprep.subr.mxu0 0.0
        %665 = vmatpush1.msra.mxu0 0.0
        %666 = vmatprep.subr.mxu0 0.0
        %667 = vmatpush1.msra.mxu0 0.0
        %668 = vmatprep.subr.mxu0 0.0
        %669 = vmatpush1.msra.mxu0 0.0
        %670 = vmatprep.subr.mxu0 0.0
        %671 = vmatpush1.msra.mxu0 0.0
        %672 = vmatprep.subr.mxu0 0.0
        %673 = vmatpush1.msra.mxu0 0.0
        %674 = vmatprep.subr.mxu0 0.0
        %675 = vmatpush1.msra.mxu0 0.0
        %676 = vmatprep.subr.mxu0 0.0
        %677 = vmatpush1.msra.mxu0 0.0
        %678 = vmatprep.subr.mxu0 0.0
        %679 = vmatpush1.msra.mxu0 0.0
        %680 = vmatprep.subr.mxu0 0.0
        %681 = vmatpush1.msra.mxu0 0.0
        %682 = vmatprep.subr.mxu0 0.0
        %683 = vmatpush1.msra.mxu0 0.0
        %684 = vmatprep.subr.mxu0 0.0
        %685 = vmatpush1.msra.mxu0 0.0
        %686 = vmatprep.subr.mxu0 0.0
        %687 = vmatpush1.msra.mxu0 0.0
        %688 = vmatprep.mubr.f32.mxu0 0.0
        %689 = vmatmul.mubr.f32.gmra.mrb[0].mxu0 %v622
        %v690 = vpop.f32.mrb[0].mxu0
        %v691 = vadd.f32 %v618, %v690
        %v692 = vpop.f32.mrb[0].mxu0
        %693 = vdwg.mxu0
        %v694 = vld [vmem:[%s16] sm:$0xff]
        %v695 = vld [vmem:[%s16 + $0x8] sm:$0xff]
        %v696 = vld [vmem:[%s16 + $0x10] sm:$0xff]
        %v697 = vld [vmem:[%s16 + $0x18] sm:$0xff]
        %v698 = vld [vmem:[%s16 + $0x20] sm:$0xff]
        %v699 = vld [vmem:[%s16 + $0x28] sm:$0xff]
        %v700 = vld [vmem:[%s16 + $0x30] sm:$0xff]
        %v701 = vld [vmem:[%s16 + $0x38] sm:$0xff]
        %v702 = vld [vmem:[%s16 + $0x40] sm:$0xff]
        %v703 = vld [vmem:[%s16 + $0x48] sm:$0xff]
        %v704 = vld [vmem:[%s16 + $0x50] sm:$0xff]
        %v705 = vld [vmem:[%s16 + $0x58] sm:$0xff]
        %v706 = vld [vmem:[%s16 + $0x60] sm:$0xff]
        %v707 = vld [vmem:[%s16 + $0x68] sm:$0xff]
        %v708 = vld [vmem:[%s16 + $0x70] sm:$0xff]
        %v709 = vld [vmem:[%s16 + $0x78] sm:$0xff]
        %v710 = vld [vmem:[%s17] sm:$0x1]
        %v711 = vlaneseq
        %v712 = vand.u32 %v711, 127
        %s713 = sld [smem:[#allocation2]]
        %s714 = sld [smem:[#allocation2 + $0x1]]
        %v715 = vld [vmem:[%s6] sm:$0xff]
        %v716 = vld [vmem:[%s6 + $0x8] sm:$0xff]
        %v717 = vld [vmem:[%s7] sm:$0xff]
        %v718 = vld [vmem:[%s7 + $0x8] sm:$0xff]
        %720 = vset.pattern.permute.xlu0 0
        %721 = vperm.xlu0 %720, %v717
        %v722 = vpop.permute.xlu0 %721
        %725 = vset.pattern.permute.xlu0 0
        %726 = vperm.xlu0 %725, %v718
        %v727 = vpop.permute.xlu0 %726
        %v730 = vsel %vm620, %v715, 0
        %v733 = vsel %vm620, %v716, 0
        %735 = vmatprep.subr.mxu0 0.0
        %736 = vmatpush1.msra.mxu0 %v691
        %737 = vmatprep.subr.mxu0 0.0
        %738 = vmatpush1.msra.mxu0 0.0
        %739 = vmatprep.subr.mxu0 0.0
        %740 = vmatpush1.msra.mxu0 0.0
        %741 = vmatprep.subr.mxu0 0.0
        %742 = vmatpush1.msra.mxu0 0.0
        %743 = vmatprep.subr.mxu0 0.0
        %744 = vmatpush1.msra.mxu0 0.0
        %745 = vmatprep.subr.mxu0 0.0
        %746 = vmatpush1.msra.mxu0 0.0
        %747 = vmatprep.subr.mxu0 0.0
        %748 = vmatpush1.msra.mxu0 0.0
        %749 = vmatprep.subr.mxu0 0.0
        %750 = vmatpush1.msra.mxu0 0.0
        %751 = vmatprep.subr.mxu0 0.0
        %752 = vmatpush1.msra.mxu0 0.0
        %753 = vmatprep.subr.mxu0 0.0
        %754 = vmatpush1.msra.mxu0 0.0
        %755 = vmatprep.subr.mxu0 0.0
        %756 = vmatpush1.msra.mxu0 0.0
        %757 = vmatprep.subr.mxu0 0.0
        %758 = vmatpush1.msra.mxu0 0.0
        %759 = vmatprep.subr.mxu0 0.0
        %760 = vmatpush1.msra.mxu0 0.0
        %761 = vmatprep.subr.mxu0 0.0
        %762 = vmatpush1.msra.mxu0 0.0
        %763 = vmatprep.subr.mxu0 0.0
        %764 = vmatpush1.msra.mxu0 0.0
        %765 = vmatprep.subr.mxu0 0.0
        %766 = vmatpush1.msra.mxu0 0.0
        %767 = vmatprep.subr.mxu0 0.0
        %768 = vmatpush1.msra.mxu0 0.0
        %769 = vmatprep.subr.mxu0 0.0
        %770 = vmatpush1.msra.mxu0 0.0
        %771 = vmatprep.subr.mxu0 0.0
        %772 = vmatpush1.msra.mxu0 0.0
        %773 = vmatprep.subr.mxu0 0.0
        %774 = vmatpush1.msra.mxu0 0.0
        %775 = vmatprep.subr.mxu0 0.0
        %776 = vmatpush1.msra.mxu0 0.0
        %777 = vmatprep.subr.mxu0 0.0
        %778 = vmatpush1.msra.mxu0 0.0
        %779 = vmatprep.subr.mxu0 0.0
        %780 = vmatpush1.msra.mxu0 0.0
        %781 = vmatprep.subr.mxu0 0.0
        %782 = vmatpush1.msra.mxu0 0.0
        %783 = vmatprep.subr.mxu0 0.0
        %784 = vmatpush1.msra.mxu0 0.0
        %785 = vmatprep.subr.mxu0 0.0
        %786 = vmatpush1.msra.mxu0 0.0
        %787 = vmatprep.subr.mxu0 0.0
        %788 = vmatpush1.msra.mxu0 0.0
        %789 = vmatprep.subr.mxu0 0.0
        %790 = vmatpush1.msra.mxu0 0.0
        %791 = vmatprep.subr.mxu0 0.0
        %792 = vmatpush1.msra.mxu0 0.0
        %793 = vmatprep.subr.mxu0 0.0
        %794 = vmatpush1.msra.mxu0 0.0
        %795 = vmatprep.subr.mxu0 0.0
        %796 = vmatpush1.msra.mxu0 0.0
        %797 = vmatprep.subr.mxu0 0.0
        %798 = vmatpush1.msra.mxu0 0.0
        %799 = vmatprep.mubr.f32.mxu0 0.0
        %800 = vmatmul.mubr.f32.gmra.mrb[0].mxu0 %v730
        %v801 = vpop.f32.mrb[0].mxu0
        %v802 = vadd.f32 %v722, %v801
        %v803 = vpop.f32.mrb[0].mxu0
        %804 = vmatprep.mubr.f32.mxu0 0.0
        %805 = vmatmul.mubr.f32.gmra.mrb[0].mxu0 %v733
        %v806 = vpop.f32.mrb[0].mxu0
        %v807 = vadd.f32 %v727, %v806
        %v808 = vpop.f32.mrb[0].mxu0
        %809 = vdwg.mxu0
        %vm810 = vcmp.ge.f32.partialorder %v802, 0.0
        %vm811 = vcmp.ge.f32.partialorder %v807, 0.0
        %v812 = vstv %s713
        %v813 = vmul.f32 %v812, %v802
        %v814 = vmul.f32 %v812, %v807
        %v815 = vsel %vm810, %v802, %v813
        %v816 = vsel %vm811, %v807, %v814
        %v817 = vadd.f32 %v815, %v816
        %v818 = vrot.slane %v817, 4
        %v819 = vadd.f32 %v817, %v818
        %v820 = vrot.slane %v819, 2
        %v821 = vadd.f32 %v819, %v820
        %v822 = vrot.slane %v821, 1
        %v823 = vadd.f32 %v821, %v822
        %v824 = vmul.f32 %v815, %v815
        %v825 = vmul.f32 %v816, %v816
        %v826 = vadd.f32 %v824, %v825
        %v827 = vrot.slane %v826, 4
        %v828 = vadd.f32 %v826, %v827
        %v829 = vrot.slane %v828, 2
        %v830 = vadd.f32 %v828, %v829
        %v831 = vrot.slane %v830, 1
        %v832 = vadd.f32 %v830, %v831
        %833 = vmatprep.subr.mxu0 0.0
        %834 = vmatpush1.msra.mxu0 %v694
        %835 = vmatprep.subr.mxu0 0.0
        %836 = vmatpush1.msra.mxu0 %v695
        %837 = vmatprep.subr.mxu0 0.0
        %838 = vmatpush1.msra.mxu0 %v696
        %839 = vmatprep.subr.mxu0 0.0
        %840 = vmatpush1.msra.mxu0 %v697
        %841 = vmatprep.subr.mxu0 0.0
        %842 = vmatpush1.msra.mxu0 %v698
        %843 = vmatprep.subr.mxu0 0.0
        %844 = vmatpush1.msra.mxu0 %v699
        %845 = vmatprep.subr.mxu0 0.0
        %846 = vmatpush1.msra.mxu0 %v700
        %847 = vmatprep.subr.mxu0 0.0
        %848 = vmatpush1.msra.mxu0 %v701
        %849 = vmatprep.subr.mxu0 0.0
        %850 = vmatpush1.msra.mxu0 %v702
        %851 = vmatprep.subr.mxu0 0.0
        %852 = vmatpush1.msra.mxu0 %v703
        %853 = vmatprep.subr.mxu0 0.0
        %854 = vmatpush1.msra.mxu0 %v704
        %855 = vmatprep.subr.mxu0 0.0
        %856 = vmatpush1.msra.mxu0 %v705
        %857 = vmatprep.subr.mxu0 0.0
        %858 = vmatpush1.msra.mxu0 %v706
        %859 = vmatprep.subr.mxu0 0.0
        %860 = vmatpush1.msra.mxu0 %v707
        %861 = vmatprep.subr.mxu0 0.0
        %862 = vmatpush1.msra.mxu0 %v708
        %863 = vmatprep.subr.mxu0 0.0
        %864 = vmatpush1.msra.mxu0 %v709
        %865 = vmatprep.subr.mxu0 0.0
        %866 = vmatpush1.msra.mxu0 0.0
        %867 = vmatprep.subr.mxu0 0.0
        %868 = vmatpush1.msra.mxu0 0.0
        %869 = vmatprep.subr.mxu0 0.0
        %870 = vmatpush1.msra.mxu0 0.0
        %871 = vmatprep.subr.mxu0 0.0
        %872 = vmatpush1.msra.mxu0 0.0
        %873 = vmatprep.subr.mxu0 0.0
        %874 = vmatpush1.msra.mxu0 0.0
        %875 = vmatprep.subr.mxu0 0.0
        %876 = vmatpush1.msra.mxu0 0.0
        %877 = vmatprep.subr.mxu0 0.0
        %878 = vmatpush1.msra.mxu0 0.0
        %879 = vmatprep.subr.mxu0 0.0
        %880 = vmatpush1.msra.mxu0 0.0
        %881 = vmatprep.subr.mxu0 0.0
        %882 = vmatpush1.msra.mxu0 0.0
        %883 = vmatprep.subr.mxu0 0.0
        %884 = vmatpush1.msra.mxu0 0.0
        %885 = vmatprep.subr.mxu0 0.0
        %886 = vmatpush1.msra.mxu0 0.0
        %887 = vmatprep.subr.mxu0 0.0
        %888 = vmatpush1.msra.mxu0 0.0
        %889 = vmatprep.subr.mxu0 0.0
        %890 = vmatpush1.msra.mxu0 0.0
        %891 = vmatprep.subr.mxu0 0.0
        %892 = vmatpush1.msra.mxu0 0.0
        %893 = vmatprep.subr.mxu0 0.0
        %894 = vmatpush1.msra.mxu0 0.0
        %895 = vmatprep.subr.mxu0 0.0
        %896 = vmatpush1.msra.mxu0 0.0
        %897 = vmatprep.mubr.f32.mxu0 0.0
        %898 = vmatmul.mubr.f32.gmra.mrb[0].mxu0 %v823
        %v899 = vpop.f32.mrb[0].mxu0
        %v900 = vadd.f32 0.0, %v899
        %v901 = vpop.f32.mrb[0].mxu0
        %902 = vdwg.mxu0
        %903 = vmatprep.subr.mxu0 0.0
        %904 = vmatpush1.msra.mxu0 %v694
        %905 = vmatprep.subr.mxu0 0.0
        %906 = vmatpush1.msra.mxu0 %v695
        %907 = vmatprep.subr.mxu0 0.0
        %908 = vmatpush1.msra.mxu0 %v696
        %909 = vmatprep.subr.mxu0 0.0
        %910 = vmatpush1.msra.mxu0 %v697
        %911 = vmatprep.subr.mxu0 0.0
        %912 = vmatpush1.msra.mxu0 %v698
        %913 = vmatprep.subr.mxu0 0.0
        %914 = vmatpush1.msra.mxu0 %v699
        %915 = vmatprep.subr.mxu0 0.0
        %916 = vmatpush1.msra.mxu0 %v700
        %917 = vmatprep.subr.mxu0 0.0
        %918 = vmatpush1.msra.mxu0 %v701
        %919 = vmatprep.subr.mxu0 0.0
        %920 = vmatpush1.msra.mxu0 %v702
        %921 = vmatprep.subr.mxu0 0.0
        %922 = vmatpush1.msra.mxu0 %v703
        %923 = vmatprep.subr.mxu0 0.0
        %924 = vmatpush1.msra.mxu0 %v704
        %925 = vmatprep.subr.mxu0 0.0
        %926 = vmatpush1.msra.mxu0 %v705
        %927 = vmatprep.subr.mxu0 0.0
        %928 = vmatpush1.msra.mxu0 %v706
        %929 = vmatprep.subr.mxu0 0.0
        %930 = vmatpush1.msra.mxu0 %v707
        %931 = vmatprep.subr.mxu0 0.0
        %932 = vmatpush1.msra.mxu0 %v708
        %933 = vmatprep.subr.mxu0 0.0
        %934 = vmatpush1.msra.mxu0 %v709
        %935 = vmatprep.subr.mxu0 0.0
        %936 = vmatpush1.msra.mxu0 0.0
        %937 = vmatprep.subr.mxu0 0.0
        %938 = vmatpush1.msra.mxu0 0.0
        %939 = vmatprep.subr.mxu0 0.0
        %940 = vmatpush1.msra.mxu0 0.0
        %941 = vmatprep.subr.mxu0 0.0
        %942 = vmatpush1.msra.mxu0 0.0
        %943 = vmatprep.subr.mxu0 0.0
        %944 = vmatpush1.msra.mxu0 0.0
        %945 = vmatprep.subr.mxu0 0.0
        %946 = vmatpush1.msra.mxu0 0.0
        %947 = vmatprep.subr.mxu0 0.0
        %948 = vmatpush1.msra.mxu0 0.0
        %949 = vmatprep.subr.mxu0 0.0
        %950 = vmatpush1.msra.mxu0 0.0
        %951 = vmatprep.subr.mxu0 0.0
        %952 = vmatpush1.msra.mxu0 0.0
        %953 = vmatprep.subr.mxu0 0.0
        %954 = vmatpush1.msra.mxu0 0.0
        %955 = vmatprep.subr.mxu0 0.0
        %956 = vmatpush1.msra.mxu0 0.0
        %957 = vmatprep.subr.mxu0 0.0
        %958 = vmatpush1.msra.mxu0 0.0
        %959 = vmatprep.subr.mxu0 0.0
        %960 = vmatpush1.msra.mxu0 0.0
        %961 = vmatprep.subr.mxu0 0.0
        %962 = vmatpush1.msra.mxu0 0.0
        %963 = vmatprep.subr.mxu0 0.0
        %964 = vmatpush1.msra.mxu0 0.0
        %965 = vmatprep.subr.mxu0 0.0
        %966 = vmatpush1.msra.mxu0 0.0
        %967 = vmatprep.mubr.f32.mxu0 0.0
        %968 = vmatmul.mubr.f32.gmra.mrb[0].mxu0 %v832
        %v969 = vpop.f32.mrb[0].mxu0
        %v970 = vadd.f32 0.0, %v969
        %v971 = vpop.f32.mrb[0].mxu0
        %972 = vdwg.mxu0
        %v973 = vmul.f32 %v900, %v710
        %v974 = vmul.f32 %v970, %v710
        %v975 = vmul.f32 %v973, %v973
        %v976 = vsub.f32 %v974, %v975
        %v977 = vlaneseq
        %v978 = vshrl.u32 %v977, 7
        %v979 = vsub.s32 0, %v978
        %v980 = vrot.slane %v973, %v979
        %v981 = vsub.f32 %v815, %v980
        %v982 = vsub.f32 %v816, %v980
        %v983 = vrsqrt.pop %v976
        %v984 = vlaneseq
        %v985 = vshrl.u32 %v984, 7
        %v986 = vsub.s32 0, %v985
        %v987 = vrot.slane %v983, %v986
        %v988 = vmul.f32 %v981, %v987
        %v989 = vmul.f32 %v982, %v987
        %v990 = vld [vmem:[%s8] sm:$0xff]
        %v991 = vld [vmem:[%s8 + $0x8] sm:$0xff]
        %v992 = vld [vmem:[%s9] sm:$0xff]
        %v993 = vld [vmem:[%s9 + $0x8] sm:$0xff]
        %994 = vrot.lane.b32.xlu0 %v988, 1
        %v995 = vpop.permute.xlu0 %994
        %996 = vrot.lane.b32.xlu0 %v989, 1
        %v997 = vpop.permute.xlu0 %996
        %vm998 = vcmp.ge.s32.totalorder %v712, 1
        %v999 = vsel %vm998, 1, 0
        %vm1000 = vcmp.eq.s32.totalorder %v999, 1
        %v1001 = vsel %vm1000, %v995, 0.0
        %v1002 = vsel %vm1000, %v997, 0.0
        %1004 = vset.pattern.permute.xlu0 0
        %1005 = vperm.xlu0 %1004, %v990
        %v1006 = vpop.permute.xlu0 %1005
        %1009 = vset.pattern.permute.xlu0 0
        %1010 = vperm.xlu0 %1009, %v991
        %v1011 = vpop.permute.xlu0 %1010
        %v1013 = vmul.f32 %v1001, %v1006
        %v1014 = vmul.f32 %v1002, %v1011
        %1015 = vset.pattern.permute.xlu0 1
        %1016 = vperm.xlu0 %1015, %v990
        %v1017 = vpop.permute.xlu0 %1016
        %1019 = vset.pattern.permute.xlu0 1
        %1020 = vperm.xlu0 %1019, %v991
        %v1021 = vpop.permute.xlu0 %1020
        %v1023 = vmul.f32 %v988, %v1017
        %v1024 = vmul.f32 %v989, %v1021
        %v1025 = vadd.f32 %v1013, %v1023
        %v1026 = vadd.f32 %v1014, %v1024
        %1027 = vrot.lane.b32.xlu0 %v988, 127
        %v1028 = vpop.permute.xlu0 %1027
        %1029 = vrot.lane.b32.xlu0 %v989, 127
        %v1030 = vpop.permute.xlu0 %1029
        %vm1031 = vcmp.lt.s32.totalorder %v712, 127
        %v1032 = vsel %vm1031, 1, 0
        %vm1033 = vcmp.eq.s32.totalorder %v1032, 1
        %v1034 = vsel %vm1033, %v1028, 0.0
        %v1035 = vsel %vm1033, %v1030, 0.0
        %1036 = vset.pattern.permute.xlu0 2
        %1037 = vperm.xlu0 %1036, %v990
        %v1038 = vpop.permute.xlu0 %1037
        %1040 = vset.pattern.permute.xlu0 2
        %1041 = vperm.xlu0 %1040, %v991
        %v1042 = vpop.permute.xlu0 %1041
        %v1044 = vmul.f32 %v1034, %v1038
        %v1045 = vmul.f32 %v1035, %v1042
        %v1046 = vadd.f32 %v1025, %v1044
        %v1047 = vadd.f32 %v1026, %v1045
        %1049 = vset.pattern.permute.xlu0 0
        %1050 = vperm.xlu0 %1049, %v992
        %v1051 = vpop.permute.xlu0 %1050
        %1054 = vset.pattern.permute.xlu0 0
        %1055 = vperm.xlu0 %1054, %v993
        %v1056 = vpop.permute.xlu0 %1055
        %v1058 = vadd.f32 %v1046, %v1051
        %v1059 = vadd.f32 %v1047, %v1056
        %vm1060 = vcmp.ge.f32.partialorder %v1058, 0.0
        %vm1061 = vcmp.ge.f32.partialorder %v1059, 0.0
        %v1062 = vstv %s714
        %v1063 = vmul.f32 %v1062, %v1058
        %v1064 = vmul.f32 %v1062, %v1059
        %v1065 = vsel %vm1060, %v1058, %v1063
        %v1066 = vsel %vm1061, %v1059, %v1064
        %v1067 = vadd.f32 %v1065, %v1066
        %v1068 = vrot.slane %v1067, 4
        %v1069 = vadd.f32 %v1067, %v1068
        %v1070 = vrot.slane %v1069, 2
        %v1071 = vadd.f32 %v1069, %v1070
        %v1072 = vrot.slane %v1071, 1
        %v1073 = vadd.f32 %v1071, %v1072
        %v1074 = vmul.f32 %v1065, %v1065
        %v1075 = vmul.f32 %v1066, %v1066
        %v1076 = vadd.f32 %v1074, %v1075
        %v1077 = vrot.slane %v1076, 4
        %v1078 = vadd.f32 %v1076, %v1077
        %v1079 = vrot.slane %v1078, 2
        %v1080 = vadd.f32 %v1078, %v1079
        %v1081 = vrot.slane %v1080, 1
        %v1082 = vadd.f32 %v1080, %v1081
        %1083 = vmatprep.subr.mxu0 0.0
        %1084 = vmatpush1.msra.mxu0 %v694
        %1085 = vmatprep.subr.mxu0 0.0
        %1086 = vmatpush1.msra.mxu0 %v695
        %1087 = vmatprep.subr.mxu0 0.0
        %1088 = vmatpush1.msra.mxu0 %v696
        %1089 = vmatprep.subr.mxu0 0.0
        %1090 = vmatpush1.msra.mxu0 %v697
        %1091 = vmatprep.subr.mxu0 0.0
        %1092 = vmatpush1.msra.mxu0 %v698
        %1093 = vmatprep.subr.mxu0 0.0
        %1094 = vmatpush1.msra.mxu0 %v699
        %1095 = vmatprep.subr.mxu0 0.0
        %1096 = vmatpush1.msra.mxu0 %v700
        %1097 = vmatprep.subr.mxu0 0.0
        %1098 = vmatpush1.msra.mxu0 %v701
        %1099 = vmatprep.subr.mxu0 0.0
        %1100 = vmatpush1.msra.mxu0 %v702
        %1101 = vmatprep.subr.mxu0 0.0
        %1102 = vmatpush1.msra.mxu0 %v703
        %1103 = vmatprep.subr.mxu0 0.0
        %1104 = vmatpush1.msra.mxu0 %v704
        %1105 = vmatprep.subr.mxu0 0.0
        %1106 = vmatpush1.msra.mxu0 %v705
        %1107 = vmatprep.subr.mxu0 0.0
        %1108 = vmatpush1.msra.mxu0 %v706
        %1109 = vmatprep.subr.mxu0 0.0
        %1110 = vmatpush1.msra.mxu0 %v707
        %1111 = vmatprep.subr.mxu0 0.0
        %1112 = vmatpush1.msra.mxu0 %v708
        %1113 = vmatprep.subr.mxu0 0.0
        %1114 = vmatpush1.msra.mxu0 %v709
        %1115 = vmatprep.subr.mxu0 0.0
        %1116 = vmatpush1.msra.mxu0 0.0
        %1117 = vmatprep.subr.mxu0 0.0
        %1118 = vmatpush1.msra.mxu0 0.0
        %1119 = vmatprep.subr.mxu0 0.0
        %1120 = vmatpush1.msra.mxu0 0.0
        %1121 = vmatprep.subr.mxu0 0.0
        %1122 = vmatpush1.msra.mxu0 0.0
        %1123 = vmatprep.subr.mxu0 0.0
        %1124 = vmatpush1.msra.mxu0 0.0
        %1125 = vmatprep.subr.mxu0 0.0
        %1126 = vmatpush1.msra.mxu0 0.0
        %1127 = vmatprep.subr.mxu0 0.0
        %1128 = vmatpush1.msra.mxu0 0.0
        %1129 = vmatprep.subr.mxu0 0.0
        %1130 = vmatpush1.msra.mxu0 0.0
        %1131 = vmatprep.subr.mxu0 0.0
        %1132 = vmatpush1.msra.mxu0 0.0
        %1133 = vmatprep.subr.mxu0 0.0
        %1134 = vmatpush1.msra.mxu0 0.0
        %1135 = vmatprep.subr.mxu0 0.0
        %1136 = vmatpush1.msra.mxu0 0.0
        %1137 = vmatprep.subr.mxu0 0.0
        %1138 = vmatpush1.msra.mxu0 0.0
        %1139 = vmatprep.subr.mxu0 0.0
        %1140 = vmatpush1.msra.mxu0 0.0
        %1141 = vmatprep.subr.mxu0 0.0
        %1142 = vmatpush1.msra.mxu0 0.0
        %1143 = vmatprep.subr.mxu0 0.0
        %1144 = vmatpush1.msra.mxu0 0.0
        %1145 = vmatprep.subr.mxu0 0.0
        %1146 = vmatpush1.msra.mxu0 0.0
        %1147 = vmatprep.mubr.f32.mxu0 0.0
        %1148 = vmatmul.mubr.f32.gmra.mrb[0].mxu0 %v1073
        %v1149 = vpop.f32.mrb[0].mxu0
        %v1150 = vadd.f32 0.0, %v1149
        %v1151 = vpop.f32.mrb[0].mxu0
        %1152 = vdwg.mxu0
        %1153 = vmatprep.subr.mxu0 0.0
        %1154 = vmatpush1.msra.mxu0 %v694
        %1155 = vmatprep.subr.mxu0 0.0
        %1156 = vmatpush1.msra.mxu0 %v695
        %1157 = vmatprep.subr.mxu0 0.0
        %1158 = vmatpush1.msra.mxu0 %v696
        %1159 = vmatprep.subr.mxu0 0.0
        %1160 = vmatpush1.msra.mxu0 %v697
        %1161 = vmatprep.subr.mxu0 0.0
        %1162 = vmatpush1.msra.mxu0 %v698
        %1163 = vmatprep.subr.mxu0 0.0
        %1164 = vmatpush1.msra.mxu0 %v699
        %1165 = vmatprep.subr.mxu0 0.0
        %1166 = vmatpush1.msra.mxu0 %v700
        %1167 = vmatprep.subr.mxu0 0.0
        %1168 = vmatpush1.msra.mxu0 %v701
        %1169 = vmatprep.subr.mxu0 0.0
        %1170 = vmatpush1.msra.mxu0 %v702
        %1171 = vmatprep.subr.mxu0 0.0
        %1172 = vmatpush1.msra.mxu0 %v703
        %1173 = vmatprep.subr.mxu0 0.0
        %1174 = vmatpush1.msra.mxu0 %v704
        %1175 = vmatprep.subr.mxu0 0.0
        %1176 = vmatpush1.msra.mxu0 %v705
        %1177 = vmatprep.subr.mxu0 0.0
        %1178 = vmatpush1.msra.mxu0 %v706
        %1179 = vmatprep.subr.mxu0 0.0
        %1180 = vmatpush1.msra.mxu0 %v707
        %1181 = vmatprep.subr.mxu0 0.0
        %1182 = vmatpush1.msra.mxu0 %v708
        %1183 = vmatprep.subr.mxu0 0.0
        %1184 = vmatpush1.msra.mxu0 %v709
        %1185 = vmatprep.subr.mxu0 0.0
        %1186 = vmatpush1.msra.mxu0 0.0
        %1187 = vmatprep.subr.mxu0 0.0
        %1188 = vmatpush1.msra.mxu0 0.0
        %1189 = vmatprep.subr.mxu0 0.0
        %1190 = vmatpush1.msra.mxu0 0.0
        %1191 = vmatprep.subr.mxu0 0.0
        %1192 = vmatpush1.msra.mxu0 0.0
        %1193 = vmatprep.subr.mxu0 0.0
        %1194 = vmatpush1.msra.mxu0 0.0
        %1195 = vmatprep.subr.mxu0 0.0
        %1196 = vmatpush1.msra.mxu0 0.0
        %1197 = vmatprep.subr.mxu0 0.0
        %1198 = vmatpush1.msra.mxu0 0.0
        %1199 = vmatprep.subr.mxu0 0.0
        %1200 = vmatpush1.msra.mxu0 0.0
        %1201 = vmatprep.subr.mxu0 0.0
        %1202 = vmatpush1.msra.mxu0 0.0
        %1203 = vmatprep.subr.mxu0 0.0
        %1204 = vmatpush1.msra.mxu0 0.0
        %1205 = vmatprep.subr.mxu0 0.0
        %1206 = vmatpush1.msra.mxu0 0.0
        %1207 = vmatprep.subr.mxu0 0.0
        %1208 = vmatpush1.msra.mxu0 0.0
        %1209 = vmatprep.subr.mxu0 0.0
        %1210 = vmatpush1.msra.mxu0 0.0
        %1211 = vmatprep.subr.mxu0 0.0
        %1212 = vmatpush1.msra.mxu0 0.0
        %1213 = vmatprep.subr.mxu0 0.0
        %1214 = vmatpush1.msra.mxu0 0.0
        %1215 = vmatprep.subr.mxu0 0.0
        %1216 = vmatpush1.msra.mxu0 0.0
        %1217 = vmatprep.mubr.f32.mxu0 0.0
        %1218 = vmatmul.mubr.f32.gmra.mrb[0].mxu0 %v1082
        %v1219 = vpop.f32.mrb[0].mxu0
        %v1220 = vadd.f32 0.0, %v1219
        %v1221 = vpop.f32.mrb[0].mxu0
        %1222 = vdwg.mxu0
        %v1223 = vmul.f32 %v1150, %v710
        %v1224 = vmul.f32 %v1220, %v710
        %v1225 = vmul.f32 %v1223, %v1223
        %v1226 = vsub.f32 %v1224, %v1225
        %v1227 = vlaneseq
        %v1228 = vshrl.u32 %v1227, 7
        %v1229 = vsub.s32 0, %v1228
        %v1230 = vrot.slane %v1223, %v1229
        %v1231 = vsub.f32 %v1065, %v1230
        %v1232 = vsub.f32 %v1066, %v1230
        %v1233 = vrsqrt.pop %v1226
        %v1234 = vlaneseq
        %v1235 = vshrl.u32 %v1234, 7
        %v1236 = vsub.s32 0, %v1235
        %v1237 = vrot.slane %v1233, %v1236
        %v1238 = vmul.f32 %v1231, %v1237
        %v1239 = vmul.f32 %v1232, %v1237
        %v1240 = vld [vmem:[%s10] sm:$0xff]
        %v1241 = vld [vmem:[%s11] sm:$0xff]
        %1243 = vset.pattern.permute.xlu0 0
        %1244 = vperm.xlu0 %1243, %v1241
        %v1245 = vpop.permute.xlu0 %1244
        %vm1247 = vcmask 130048
        %v1249 = vsel %vm1247, %v1240, 0
        %1251 = vmatprep.subr.mxu0 0.0
        %1252 = vmatpush1.msra.mxu0 %v1238
        %1253 = vmatprep.subr.mxu0 0.0
        %1254 = vmatpush1.msra.mxu0 %v1239
        %1255 = vmatprep.subr.mxu0 0.0
        %1256 = vmatpush1.msra.mxu0 0.0
        %1257 = vmatprep.subr.mxu0 0.0
        %1258 = vmatpush1.msra.mxu0 0.0
        %1259 = vmatprep.subr.mxu0 0.0
        %1260 = vmatpush1.msra.mxu0 0.0
        %1261 = vmatprep.subr.mxu0 0.0
        %1262 = vmatpush1.msra.mxu0 0.0
        %1263 = vmatprep.subr.mxu0 0.0
        %1264 = vmatpush1.msra.mxu0 0.0
        %1265 = vmatprep.subr.mxu0 0.0
        %1266 = vmatpush1.msra.mxu0 0.0
        %1267 = vmatprep.subr.mxu0 0.0
        %1268 = vmatpush1.msra.mxu0 0.0
        %1269 = vmatprep.subr.mxu0 0.0
        %1270 = vmatpush1.msra.mxu0 0.0
        %1271 = vmatprep.subr.mxu0 0.0
        %1272 = vmatpush1.msra.mxu0 0.0
        %1273 = vmatprep.subr.mxu0 0.0
        %1274 = vmatpush1.msra.mxu0 0.0
        %1275 = vmatprep.subr.mxu0 0.0
        %1276 = vmatpush1.msra.mxu0 0.0
        %1277 = vmatprep.subr.mxu0 0.0
        %1278 = vmatpush1.msra.mxu0 0.0
        %1279 = vmatprep.subr.mxu0 0.0
        %1280 = vmatpush1.msra.mxu0 0.0
        %1281 = vmatprep.subr.mxu0 0.0
        %1282 = vmatpush1.msra.mxu0 0.0
        %1283 = vmatprep.subr.mxu0 0.0
        %1284 = vmatpush1.msra.mxu0 0.0
        %1285 = vmatprep.subr.mxu0 0.0
        %1286 = vmatpush1.msra.mxu0 0.0
        %1287 = vmatprep.subr.mxu0 0.0
        %1288 = vmatpush1.msra.mxu0 0.0
        %1289 = vmatprep.subr.mxu0 0.0
        %1290 = vmatpush1.msra.mxu0 0.0
        %1291 = vmatprep.subr.mxu0 0.0
        %1292 = vmatpush1.msra.mxu0 0.0
        %1293 = vmatprep.subr.mxu0 0.0
        %1294 = vmatpush1.msra.mxu0 0.0
        %1295 = vmatprep.subr.mxu0 0.0
        %1296 = vmatpush1.msra.mxu0 0.0
        %1297 = vmatprep.subr.mxu0 0.0
        %1298 = vmatpush1.msra.mxu0 0.0
        %1299 = vmatprep.subr.mxu0 0.0
        %1300 = vmatpush1.msra.mxu0 0.0
        %1301 = vmatprep.subr.mxu0 0.0
        %1302 = vmatpush1.msra.mxu0 0.0
        %1303 = vmatprep.subr.mxu0 0.0
        %1304 = vmatpush1.msra.mxu0 0.0
        %1305 = vmatprep.subr.mxu0 0.0
        %1306 = vmatpush1.msra.mxu0 0.0
        %1307 = vmatprep.subr.mxu0 0.0
        %1308 = vmatpush1.msra.mxu0 0.0
        %1309 = vmatprep.subr.mxu0 0.0
        %1310 = vmatpush1.msra.mxu0 0.0
        %1311 = vmatprep.subr.mxu0 0.0
        %1312 = vmatpush1.msra.mxu0 0.0
        %1313 = vmatprep.subr.mxu0 0.0
        %1314 = vmatpush1.msra.mxu0 0.0
        %1315 = vmatprep.mubr.f32.mxu0 0.0
        %1316 = vmatmul.mubr.f32.gmra.mrb[0].mxu0 %v1249
        %v1317 = vpop.f32.mrb[0].mxu0
        %v1318 = vadd.f32 %v1245, %v1317
        %v1319 = vpop.f32.mrb[0].mxu0
        %1320 = vdwg.mxu0
        %v1321 = vadd.f32 %v1318, %v691
        %s1322 = sld [smem:[#allocation2 + $0x2]]
        %s1323 = sld [smem:[#allocation2 + $0x3]]
        %s1324 = scalar_lea.vmem %s6, 16
        %v1325 = vld [vmem:[%s1324] sm:$0xff]
        %v1326 = vld [vmem:[%s1324 + $0x8] sm:$0xff]
        %s1327 = scalar_lea.vmem %s7, 16
        %v1328 = vld [vmem:[%s1327] sm:$0xff]
        %v1329 = vld [vmem:[%s1327 + $0x8] sm:$0xff]
        %1331 = vset.pattern.permute.xlu0 0
        %1332 = vperm.xlu0 %1331, %v1328
        %v1333 = vpop.permute.xlu0 %1332
        %1336 = vset.pattern.permute.xlu0 0
        %1337 = vperm.xlu0 %1336, %v1329
        %v1338 = vpop.permute.xlu0 %1337
        %v1341 = vsel %vm620, %v1325, 0
        %v1344 = vsel %vm620, %v1326, 0
        %1346 = vmatprep.subr.mxu0 0.0
        %1347 = vmatpush1.msra.mxu0 %v1321
        %1348 = vmatprep.subr.mxu0 0.0
        %1349 = vmatpush1.msra.mxu0 0.0
        %1350 = vmatprep.subr.mxu0 0.0
        %1351 = vmatpush1.msra.mxu0 0.0
        %1352 = vmatprep.subr.mxu0 0.0
        %1353 = vmatpush1.msra.mxu0 0.0
        %1354 = vmatprep.subr.mxu0 0.0
        %1355 = vmatpush1.msra.mxu0 0.0
        %1356 = vmatprep.subr.mxu0 0.0
        %1357 = vmatpush1.msra.mxu0 0.0
        %1358 = vmatprep.subr.mxu0 0.0
        %1359 = vmatpush1.msra.mxu0 0.0
        %1360 = vmatprep.subr.mxu0 0.0
        %1361 = vmatpush1.msra.mxu0 0.0
        %1362 = vmatprep.subr.mxu0 0.0
        %1363 = vmatpush1.msra.mxu0 0.0
        %1364 = vmatprep.subr.mxu0 0.0
        %1365 = vmatpush1.msra.mxu0 0.0
        %1366 = vmatprep.subr.mxu0 0.0
        %1367 = vmatpush1.msra.mxu0 0.0
        %1368 = vmatprep.subr.mxu0 0.0
        %1369 = vmatpush1.msra.mxu0 0.0
        %1370 = vmatprep.subr.mxu0 0.0
        %1371 = vmatpush1.msra.mxu0 0.0
        %1372 = vmatprep.subr.mxu0 0.0
        %1373 = vmatpush1.msra.mxu0 0.0
        %1374 = vmatprep.subr.mxu0 0.0
        %1375 = vmatpush1.msra.mxu0 0.0
        %1376 = vmatprep.subr.mxu0 0.0
        %1377 = vmatpush1.msra.mxu0 0.0
        %1378 = vmatprep.subr.mxu0 0.0
        %1379 = vmatpush1.msra.mxu0 0.0
        %1380 = vmatprep.subr.mxu0 0.0
        %1381 = vmatpush1.msra.mxu0 0.0
        %1382 = vmatprep.subr.mxu0 0.0
        %1383 = vmatpush1.msra.mxu0 0.0
        %1384 = vmatprep.subr.mxu0 0.0
        %1385 = vmatpush1.msra.mxu0 0.0
        %1386 = vmatprep.subr.mxu0 0.0
        %1387 = vmatpush1.msra.mxu0 0.0
        %1388 = vmatprep.subr.mxu0 0.0
        %1389 = vmatpush1.msra.mxu0 0.0
        %1390 = vmatprep.subr.mxu0 0.0
        %1391 = vmatpush1.msra.mxu0 0.0
        %1392 = vmatprep.subr.mxu0 0.0
        %1393 = vmatpush1.msra.mxu0 0.0
        %1394 = vmatprep.subr.mxu0 0.0
        %1395 = vmatpush1.msra.mxu0 0.0
        %1396 = vmatprep.subr.mxu0 0.0
        %1397 = vmatpush1.msra.mxu0 0.0
        %1398 = vmatprep.subr.mxu0 0.0
        %1399 = vmatpush1.msra.mxu0 0.0
        %1400 = vmatprep.subr.mxu0 0.0
        %1401 = vmatpush1.msra.mxu0 0.0
        %1402 = vmatprep.subr.mxu0 0.0
        %1403 = vmatpush1.msra.mxu0 0.0
        %1404 = vmatprep.subr.mxu0 0.0
        %1405 = vmatpush1.msra.mxu0 0.0
        %1406 = vmatprep.subr.mxu0 0.0
        %1407 = vmatpush1.msra.mxu0 0.0
        %1408 = vmatprep.subr.mxu0 0.0
        %1409 = vmatpush1.msra.mxu0 0.0
        %1410 = vmatprep.mubr.f32.mxu0 0.0
        %1411 = vmatmul.mubr.f32.gmra.mrb[0].mxu0 %v1341
        %v1412 = vpop.f32.mrb[0].mxu0
        %v1413 = vadd.f32 %v1333, %v1412
        %v1414 = vpop.f32.mrb[0].mxu0
        %1415 = vmatprep.mubr.f32.mxu0 0.0
        %1416 = vmatmul.mubr.f32.gmra.mrb[0].mxu0 %v1344
        %v1417 = vpop.f32.mrb[0].mxu0
        %v1418 = vadd.f32 %v1338, %v1417
        %v1419 = vpop.f32.mrb[0].mxu0
        %1420 = vdwg.mxu0
        %vm1421 = vcmp.ge.f32.partialorder %v1413, 0.0
        %vm1422 = vcmp.ge.f32.partialorder %v1418, 0.0
        %v1423 = vstv %s1322
        %v1424 = vmul.f32 %v1423, %v1413
        %v1425 = vmul.f32 %v1423, %v1418
        %v1426 = vsel %vm1421, %v1413, %v1424
        %v1427 = vsel %vm1422, %v1418, %v1425
        %v1428 = vadd.f32 %v1426, %v1427
        %v1429 = vrot.slane %v1428, 4
        %v1430 = vadd.f32 %v1428, %v1429
        %v1431 = vrot.slane %v1430, 2
        %v1432 = vadd.f32 %v1430, %v1431
        %v1433 = vrot.slane %v1432, 1
        %v1434 = vadd.f32 %v1432, %v1433
        %v1435 = vmul.f32 %v1426, %v1426
        %v1436 = vmul.f32 %v1427, %v1427
        %v1437 = vadd.f32 %v1435, %v1436
        %v1438 = vrot.slane %v1437, 4
        %v1439 = vadd.f32 %v1437, %v1438
        %v1440 = vrot.slane %v1439, 2
        %v1441 = vadd.f32 %v1439, %v1440
        %v1442 = vrot.slane %v1441, 1
        %v1443 = vadd.f32 %v1441, %v1442
        %1444 = vmatprep.subr.mxu0 0.0
        %1445 = vmatpush1.msra.mxu0 %v694
        %1446 = vmatprep.subr.mxu0 0.0
        %1447 = vmatpush1.msra.mxu0 %v695
        %1448 = vmatprep.subr.mxu0 0.0
        %1449 = vmatpush1.msra.mxu0 %v696
        %1450 = vmatprep.subr.mxu0 0.0
        %1451 = vmatpush1.msra.mxu0 %v697
        %1452 = vmatprep.subr.mxu0 0.0
        %1453 = vmatpush1.msra.mxu0 %v698
        %1454 = vmatprep.subr.mxu0 0.0
        %1455 = vmatpush1.msra.mxu0 %v699
        %1456 = vmatprep.subr.mxu0 0.0
        %1457 = vmatpush1.msra.mxu0 %v700
        %1458 = vmatprep.subr.mxu0 0.0
        %1459 = vmatpush1.msra.mxu0 %v701
        %1460 = vmatprep.subr.mxu0 0.0
        %1461 = vmatpush1.msra.mxu0 %v702
        %1462 = vmatprep.subr.mxu0 0.0
        %1463 = vmatpush1.msra.mxu0 %v703
        %1464 = vmatprep.subr.mxu0 0.0
        %1465 = vmatpush1.msra.mxu0 %v704
        %1466 = vmatprep.subr.mxu0 0.0
        %1467 = vmatpush1.msra.mxu0 %v705
        %1468 = vmatprep.subr.mxu0 0.0
        %1469 = vmatpush1.msra.mxu0 %v706
        %1470 = vmatprep.subr.mxu0 0.0
        %1471 = vmatpush1.msra.mxu0 %v707
        %1472 = vmatprep.subr.mxu0 0.0
        %1473 = vmatpush1.msra.mxu0 %v708
        %1474 = vmatprep.subr.mxu0 0.0
        %1475 = vmatpush1.msra.mxu0 %v709
        %1476 = vmatprep.subr.mxu0 0.0
        %1477 = vmatpush1.msra.mxu0 0.0
        %1478 = vmatprep.subr.mxu0 0.0
        %1479 = vmatpush1.msra.mxu0 0.0
        %1480 = vmatprep.subr.mxu0 0.0
        %1481 = vmatpush1.msra.mxu0 0.0
        %1482 = vmatprep.subr.mxu0 0.0
        %1483 = vmatpush1.msra.mxu0 0.0
        %1484 = vmatprep.subr.mxu0 0.0
        %1485 = vmatpush1.msra.mxu0 0.0
        %1486 = vmatprep.subr.mxu0 0.0
        %1487 = vmatpush1.msra.mxu0 0.0
        %1488 = vmatprep.subr.mxu0 0.0
        %1489 = vmatpush1.msra.mxu0 0.0
        %1490 = vmatprep.subr.mxu0 0.0
        %1491 = vmatpush1.msra.mxu0 0.0
        %1492 = vmatprep.subr.mxu0 0.0
        %1493 = vmatpush1.msra.mxu0 0.0
        %1494 = vmatprep.subr.mxu0 0.0
        %1495 = vmatpush1.msra.mxu0 0.0
        %1496 = vmatprep.subr.mxu0 0.0
        %1497 = vmatpush1.msra.mxu0 0.0
        %1498 = vmatprep.subr.mxu0 0.0
        %1499 = vmatpush1.msra.mxu0 0.0
        %1500 = vmatprep.subr.mxu0 0.0
        %1501 = vmatpush1.msra.mxu0 0.0
        %1502 = vmatprep.subr.mxu0 0.0
        %1503 = vmatpush1.msra.mxu0 0.0
        %1504 = vmatprep.subr.mxu0 0.0
        %1505 = vmatpush1.msra.mxu0 0.0
        %1506 = vmatprep.subr.mxu0 0.0
        %1507 = vmatpush1.msra.mxu0 0.0
        %1508 = vmatprep.mubr.f32.mxu0 0.0
        %1509 = vmatmul.mubr.f32.gmra.mrb[0].mxu0 %v1434
        %v1510 = vpop.f32.mrb[0].mxu0
        %v1511 = vadd.f32 0.0, %v1510
        %v1512 = vpop.f32.mrb[0].mxu0
        %1513 = vdwg.mxu0
        %1514 = vmatprep.subr.mxu0 0.0
        %1515 = vmatpush1.msra.mxu0 %v694
        %1516 = vmatprep.subr.mxu0 0.0
        %1517 = vmatpush1.msra.mxu0 %v695
        %1518 = vmatprep.subr.mxu0 0.0
        %1519 = vmatpush1.msra.mxu0 %v696
        %1520 = vmatprep.subr.mxu0 0.0
        %1521 = vmatpush1.msra.mxu0 %v697
        %1522 = vmatprep.subr.mxu0 0.0
        %1523 = vmatpush1.msra.mxu0 %v698
        %1524 = vmatprep.subr.mxu0 0.0
        %1525 = vmatpush1.msra.mxu0 %v699
        %1526 = vmatprep.subr.mxu0 0.0
        %1527 = vmatpush1.msra.mxu0 %v700
        %1528 = vmatprep.subr.mxu0 0.0
        %1529 = vmatpush1.msra.mxu0 %v701
        %1530 = vmatprep.subr.mxu0 0.0
        %1531 = vmatpush1.msra.mxu0 %v702
        %1532 = vmatprep.subr.mxu0 0.0
        %1533 = vmatpush1.msra.mxu0 %v703
        %1534 = vmatprep.subr.mxu0 0.0
        %1535 = vmatpush1.msra.mxu0 %v704
        %1536 = vmatprep.subr.mxu0 0.0
        %1537 = vmatpush1.msra.mxu0 %v705
        %1538 = vmatprep.subr.mxu0 0.0
        %1539 = vmatpush1.msra.mxu0 %v706
        %1540 = vmatprep.subr.mxu0 0.0
        %1541 = vmatpush1.msra.mxu0 %v707
        %1542 = vmatprep.subr.mxu0 0.0
        %1543 = vmatpush1.msra.mxu0 %v708
        %1544 = vmatprep.subr.mxu0 0.0
        %1545 = vmatpush1.msra.mxu0 %v709
        %1546 = vmatprep.subr.mxu0 0.0
        %1547 = vmatpush1.msra.mxu0 0.0
        %1548 = vmatprep.subr.mxu0 0.0
        %1549 = vmatpush1.msra.mxu0 0.0
        %1550 = vmatprep.subr.mxu0 0.0
        %1551 = vmatpush1.msra.mxu0 0.0
        %1552 = vmatprep.subr.mxu0 0.0
        %1553 = vmatpush1.msra.mxu0 0.0
        %1554 = vmatprep.subr.mxu0 0.0
        %1555 = vmatpush1.msra.mxu0 0.0
        %1556 = vmatprep.subr.mxu0 0.0
        %1557 = vmatpush1.msra.mxu0 0.0
        %1558 = vmatprep.subr.mxu0 0.0
        %1559 = vmatpush1.msra.mxu0 0.0
        %1560 = vmatprep.subr.mxu0 0.0
        %1561 = vmatpush1.msra.mxu0 0.0
        %1562 = vmatprep.subr.mxu0 0.0
        %1563 = vmatpush1.msra.mxu0 0.0
        %1564 = vmatprep.subr.mxu0 0.0
        %1565 = vmatpush1.msra.mxu0 0.0
        %1566 = vmatprep.subr.mxu0 0.0
        %1567 = vmatpush1.msra.mxu0 0.0
        %1568 = vmatprep.subr.mxu0 0.0
        %1569 = vmatpush1.msra.mxu0 0.0
        %1570 = vmatprep.subr.mxu0 0.0
        %1571 = vmatpush1.msra.mxu0 0.0
        %1572 = vmatprep.subr.mxu0 0.0
        %1573 = vmatpush1.msra.mxu0 0.0
        %1574 = vmatprep.subr.mxu0 0.0
        %1575 = vmatpush1.msra.mxu0 0.0
        %1576 = vmatprep.subr.mxu0 0.0
        %1577 = vmatpush1.msra.mxu0 0.0
        %1578 = vmatprep.mubr.f32.mxu0 0.0
        %1579 = vmatmul.mubr.f32.gmra.mrb[0].mxu0 %v1443
        %v1580 = vpop.f32.mrb[0].mxu0
        %v1581 = vadd.f32 0.0, %v1580
        %v1582 = vpop.f32.mrb[0].mxu0
        %1583 = vdwg.mxu0
        %v1584 = vmul.f32 %v1511, %v710
        %v1585 = vmul.f32 %v1581, %v710
        %v1586 = vmul.f32 %v1584, %v1584
        %v1587 = vsub.f32 %v1585, %v1586
        %v1588 = vlaneseq
        %v1589 = vshrl.u32 %v1588, 7
        %v1590 = vsub.s32 0, %v1589
        %v1591 = vrot.slane %v1584, %v1590
        %v1592 = vsub.f32 %v1426, %v1591
        %v1593 = vsub.f32 %v1427, %v1591
        %v1594 = vrsqrt.pop %v1587
        %v1595 = vlaneseq
        %v1596 = vshrl.u32 %v1595, 7
        %v1597 = vsub.s32 0, %v1596
        %v1598 = vrot.slane %v1594, %v1597
        %v1599 = vmul.f32 %v1592, %v1598
        %v1600 = vmul.f32 %v1593, %v1598
        %s1601 = scalar_lea.vmem %s8, 16
        %v1602 = vld [vmem:[%s1601] sm:$0xff]
        %v1603 = vld [vmem:[%s1601 + $0x8] sm:$0xff]
        %s1604 = scalar_lea.vmem %s9, 16
        %v1605 = vld [vmem:[%s1604] sm:$0xff]
        %v1606 = vld [vmem:[%s1604 + $0x8] sm:$0xff]
        %1607 = vrot.lane.b32.xlu0 %v1599, 2
        %v1608 = vpop.permute.xlu0 %1607
        %1609 = vrot.lane.b32.xlu0 %v1600, 2
        %v1610 = vpop.permute.xlu0 %1609
        %vm1611 = vcmp.ge.s32.totalorder %v712, 2
        %v1612 = vsel %vm1611, 1, 0
        %vm1613 = vcmp.eq.s32.totalorder %v1612, 1
        %v1614 = vsel %vm1613, %v1608, 0.0
        %v1615 = vsel %vm1613, %v1610, 0.0
        %1617 = vset.pattern.permute.xlu0 0
        %1618 = vperm.xlu0 %1617, %v1602
        %v1619 = vpop.permute.xlu0 %1618
        %1622 = vset.pattern.permute.xlu0 0
        %1623 = vperm.xlu0 %1622, %v1603
        %v1624 = vpop.permute.xlu0 %1623
        %v1626 = vmul.f32 %v1614, %v1619
        %v1627 = vmul.f32 %v1615, %v1624
        %1628 = vset.pattern.permute.xlu0 1
        %1629 = vperm.xlu0 %1628, %v1602
        %v1630 = vpop.permute.xlu0 %1629
        %1632 = vset.pattern.permute.xlu0 1
        %1633 = vperm.xlu0 %1632, %v1603
        %v1634 = vpop.permute.xlu0 %1633
        %v1636 = vmul.f32 %v1599, %v1630
        %v1637 = vmul.f32 %v1600, %v1634
        %v1638 = vadd.f32 %v1626, %v1636
        %v1639 = vadd.f32 %v1627, %v1637
        %1640 = vrot.lane.b32.xlu0 %v1599, 126
        %v1641 = vpop.permute.xlu0 %1640
        %1642 = vrot.lane.b32.xlu0 %v1600, 126
        %v1643 = vpop.permute.xlu0 %1642
        %vm1644 = vcmp.lt.s32.totalorder %v712, 126
        %v1645 = vsel %vm1644, 1, 0
        %vm1646 = vcmp.eq.s32.totalorder %v1645, 1
        %v1647 = vsel %vm1646, %v1641, 0.0
        %v1648 = vsel %vm1646, %v1643, 0.0
        %1649 = vset.pattern.permute.xlu0 2
        %1650 = vperm.xlu0 %1649, %v1602
        %v1651 = vpop.permute.xlu0 %1650
        %1653 = vset.pattern.permute.xlu0 2
        %1654 = vperm.xlu0 %1653, %v1603
        %v1655 = vpop.permute.xlu0 %1654
        %v1657 = vmul.f32 %v1647, %v1651
        %v1658 = vmul.f32 %v1648, %v1655
        %v1659 = vadd.f32 %v1638, %v1657
        %v1660 = vadd.f32 %v1639, %v1658
        %1662 = vset.pattern.permute.xlu0 0
        %1663 = vperm.xlu0 %1662, %v1605
        %v1664 = vpop.permute.xlu0 %1663
        %1667 = vset.pattern.permute.xlu0 0
        %1668 = vperm.xlu0 %1667, %v1606
        %v1669 = vpop.permute.xlu0 %1668
        %v1671 = vadd.f32 %v1659, %v1664
        %v1672 = vadd.f32 %v1660, %v1669
        %vm1673 = vcmp.ge.f32.partialorder %v1671, 0.0
        %vm1674 = vcmp.ge.f32.partialorder %v1672, 0.0
        %v1675 = vstv %s1323
        %v1676 = vmul.f32 %v1675, %v1671
        %v1677 = vmul.f32 %v1675, %v1672
        %v1678 = vsel %vm1673, %v1671, %v1676
        %v1679 = vsel %vm1674, %v1672, %v1677
        %v1680 = vadd.f32 %v1678, %v1679
        %v1681 = vrot.slane %v1680, 4
        %v1682 = vadd.f32 %v1680, %v1681
        %v1683 = vrot.slane %v1682, 2
        %v1684 = vadd.f32 %v1682, %v1683
        %v1685 = vrot.slane %v1684, 1
        %v1686 = vadd.f32 %v1684, %v1685
        %v1687 = vmul.f32 %v1678, %v1678
        %v1688 = vmul.f32 %v1679, %v1679
        %v1689 = vadd.f32 %v1687, %v1688
        %v1690 = vrot.slane %v1689, 4
        %v1691 = vadd.f32 %v1689, %v1690
        %v1692 = vrot.slane %v1691, 2
        %v1693 = vadd.f32 %v1691, %v1692
        %v1694 = vrot.slane %v1693, 1
        %v1695 = vadd.f32 %v1693, %v1694
        %1696 = vmatprep.subr.mxu0 0.0
        %1697 = vmatpush1.msra.mxu0 %v694
        %1698 = vmatprep.subr.mxu0 0.0
        %1699 = vmatpush1.msra.mxu0 %v695
        %1700 = vmatprep.subr.mxu0 0.0
        %1701 = vmatpush1.msra.mxu0 %v696
        %1702 = vmatprep.subr.mxu0 0.0
        %1703 = vmatpush1.msra.mxu0 %v697
        %1704 = vmatprep.subr.mxu0 0.0
        %1705 = vmatpush1.msra.mxu0 %v698
        %1706 = vmatprep.subr.mxu0 0.0
        %1707 = vmatpush1.msra.mxu0 %v699
        %1708 = vmatprep.subr.mxu0 0.0
        %1709 = vmatpush1.msra.mxu0 %v700
        %1710 = vmatprep.subr.mxu0 0.0
        %1711 = vmatpush1.msra.mxu0 %v701
        %1712 = vmatprep.subr.mxu0 0.0
        %1713 = vmatpush1.msra.mxu0 %v702
        %1714 = vmatprep.subr.mxu0 0.0
        %1715 = vmatpush1.msra.mxu0 %v703
        %1716 = vmatprep.subr.mxu0 0.0
        %1717 = vmatpush1.msra.mxu0 %v704
        %1718 = vmatprep.subr.mxu0 0.0
        %1719 = vmatpush1.msra.mxu0 %v705
        %1720 = vmatprep.subr.mxu0 0.0
        %1721 = vmatpush1.msra.mxu0 %v706
        %1722 = vmatprep.subr.mxu0 0.0
        %1723 = vmatpush1.msra.mxu0 %v707
        %1724 = vmatprep.subr.mxu0 0.0
        %1725 = vmatpush1.msra.mxu0 %v708
        %1726 = vmatprep.subr.mxu0 0.0
        %1727 = vmatpush1.msra.mxu0 %v709
        %1728 = vmatprep.subr.mxu0 0.0
        %1729 = vmatpush1.msra.mxu0 0.0
        %1730 = vmatprep.subr.mxu0 0.0
        %1731 = vmatpush1.msra.mxu0 0.0
        %1732 = vmatprep.subr.mxu0 0.0
        %1733 = vmatpush1.msra.mxu0 0.0
        %1734 = vmatprep.subr.mxu0 0.0
        %1735 = vmatpush1.msra.mxu0 0.0
        %1736 = vmatprep.subr.mxu0 0.0
        %1737 = vmatpush1.msra.mxu0 0.0
        %1738 = vmatprep.subr.mxu0 0.0
        %1739 = vmatpush1.msra.mxu0 0.0
        %1740 = vmatprep.subr.mxu0 0.0
        %1741 = vmatpush1.msra.mxu0 0.0
        %1742 = vmatprep.subr.mxu0 0.0
        %1743 = vmatpush1.msra.mxu0 0.0
        %1744 = vmatprep.subr.mxu0 0.0
        %1745 = vmatpush1.msra.mxu0 0.0
        %1746 = vmatprep.subr.mxu0 0.0
        %1747 = vmatpush1.msra.mxu0 0.0
        %1748 = vmatprep.subr.mxu0 0.0
        %1749 = vmatpush1.msra.mxu0 0.0
        %1750 = vmatprep.subr.mxu0 0.0
        %1751 = vmatpush1.msra.mxu0 0.0
        %1752 = vmatprep.subr.mxu0 0.0
        %1753 = vmatpush1.msra.mxu0 0.0
        %1754 = vmatprep.subr.mxu0 0.0
        %1755 = vmatpush1.msra.mxu0 0.0
        %1756 = vmatprep.subr.mxu0 0.0
        %1757 = vmatpush1.msra.mxu0 0.0
        %1758 = vmatprep.subr.mxu0 0.0
        %1759 = vmatpush1.msra.mxu0 0.0
        %1760 = vmatprep.mubr.f32.mxu0 0.0
        %1761 = vmatmul.mubr.f32.gmra.mrb[0].mxu0 %v1686
        %v1762 = vpop.f32.mrb[0].mxu0
        %v1763 = vadd.f32 0.0, %v1762
        %v1764 = vpop.f32.mrb[0].mxu0
        %1765 = vdwg.mxu0
        %1766 = vmatprep.subr.mxu0 0.0
        %1767 = vmatpush1.msra.mxu0 %v694
        %1768 = vmatprep.subr.mxu0 0.0
        %1769 = vmatpush1.msra.mxu0 %v695
        %1770 = vmatprep.subr.mxu0 0.0
        %1771 = vmatpush1.msra.mxu0 %v696
        %1772 = vmatprep.subr.mxu0 0.0
        %1773 = vmatpush1.msra.mxu0 %v697
        %1774 = vmatprep.subr.mxu0 0.0
        %1775 = vmatpush1.msra.mxu0 %v698
        %1776 = vmatprep.subr.mxu0 0.0
        %1777 = vmatpush1.msra.mxu0 %v699
        %1778 = vmatprep.subr.mxu0 0.0
        %1779 = vmatpush1.msra.mxu0 %v700
        %1780 = vmatprep.subr.mxu0 0.0
        %1781 = vmatpush1.msra.mxu0 %v701
        %1782 = vmatprep.subr.mxu0 0.0
        %1783 = vmatpush1.msra.mxu0 %v702
        %1784 = vmatprep.subr.mxu0 0.0
        %1785 = vmatpush1.msra.mxu0 %v703
        %1786 = vmatprep.subr.mxu0 0.0
        %1787 = vmatpush1.msra.mxu0 %v704
        %1788 = vmatprep.subr.mxu0 0.0
        %1789 = vmatpush1.msra.mxu0 %v705
        %1790 = vmatprep.subr.mxu0 0.0
        %1791 = vmatpush1.msra.mxu0 %v706
        %1792 = vmatprep.subr.mxu0 0.0
        %1793 = vmatpush1.msra.mxu0 %v707
        %1794 = vmatprep.subr.mxu0 0.0
        %1795 = vmatpush1.msra.mxu0 %v708
        %1796 = vmatprep.subr.mxu0 0.0
        %1797 = vmatpush1.msra.mxu0 %v709
        %1798 = vmatprep.subr.mxu0 0.0
        %1799 = vmatpush1.msra.mxu0 0.0
        %1800 = vmatprep.subr.mxu0 0.0
        %1801 = vmatpush1.msra.mxu0 0.0
        %1802 = vmatprep.subr.mxu0 0.0
        %1803 = vmatpush1.msra.mxu0 0.0
        %1804 = vmatprep.subr.mxu0 0.0
        %1805 = vmatpush1.msra.mxu0 0.0
        %1806 = vmatprep.subr.mxu0 0.0
        %1807 = vmatpush1.msra.mxu0 0.0
        %1808 = vmatprep.subr.mxu0 0.0
        %1809 = vmatpush1.msra.mxu0 0.0
        %1810 = vmatprep.subr.mxu0 0.0
        %1811 = vmatpush1.msra.mxu0 0.0
        %1812 = vmatprep.subr.mxu0 0.0
        %1813 = vmatpush1.msra.mxu0 0.0
        %1814 = vmatprep.subr.mxu0 0.0
        %1815 = vmatpush1.msra.mxu0 0.0
        %1816 = vmatprep.subr.mxu0 0.0
        %1817 = vmatpush1.msra.mxu0 0.0
        %1818 = vmatprep.subr.mxu0 0.0
        %1819 = vmatpush1.msra.mxu0 0.0
        %1820 = vmatprep.subr.mxu0 0.0
        %1821 = vmatpush1.msra.mxu0 0.0
        %1822 = vmatprep.subr.mxu0 0.0
        %1823 = vmatpush1.msra.mxu0 0.0
        %1824 = vmatprep.subr.mxu0 0.0
        %1825 = vmatpush1.msra.mxu0 0.0
        %1826 = vmatprep.subr.mxu0 0.0
        %1827 = vmatpush1.msra.mxu0 0.0
        %1828 = vmatprep.subr.mxu0 0.0
        %1829 = vmatpush1.msra.mxu0 0.0
        %1830 = vmatprep.mubr.f32.mxu0 0.0
        %1831 = vmatmul.mubr.f32.gmra.mrb[0].mxu0 %v1695
        %v1832 = vpop.f32.mrb[0].mxu0
        %v1833 = vadd.f32 0.0, %v1832
        %v1834 = vpop.f32.mrb[0].mxu0
        %1835 = vdwg.mxu0
        %v1836 = vmul.f32 %v1763, %v710
        %v1837 = vmul.f32 %v1833, %v710
        %v1838 = vmul.f32 %v1836, %v1836
        %v1839 = vsub.f32 %v1837, %v1838
        %v1840 = vlaneseq
        %v1841 = vshrl.u32 %v1840, 7
        %v1842 = vsub.s32 0, %v1841
        %v1843 = vrot.slane %v1836, %v1842
        %v1844 = vsub.f32 %v1678, %v1843
        %v1845 = vsub.f32 %v1679, %v1843
        %v1846 = vrsqrt.pop %v1839
        %v1847 = vlaneseq
        %v1848 = vshrl.u32 %v1847, 7
        %v1849 = vsub.s32 0, %v1848
        %v1850 = vrot.slane %v1846, %v1849
        %v1851 = vmul.f32 %v1844, %v1850
        %v1852 = vmul.f32 %v1845, %v1850
        %s1853 = scalar_lea.vmem %s10, 8
        %v1854 = vld [vmem:[%s1853] sm:$0xff]
        %s1855 = scalar_lea.vmem %s11, 8
        %v1856 = vld [vmem:[%s1855] sm:$0xff]
        %1858 = vset.pattern.permute.xlu0 0
        %1859 = vperm.xlu0 %1858, %v1856
        %v1860 = vpop.permute.xlu0 %1859
        %v1863 = vsel %vm1247, %v1854, 0
        %1865 = vmatprep.subr.mxu0 0.0
        %1866 = vmatpush1.msra.mxu0 %v1851
        %1867 = vmatprep.subr.mxu0 0.0
        %1868 = vmatpush1.msra.mxu0 %v1852
        %1869 = vmatprep.subr.mxu0 0.0
        %1870 = vmatpush1.msra.mxu0 0.0
        %1871 = vmatprep.subr.mxu0 0.0
        %1872 = vmatpush1.msra.mxu0 0.0
        %1873 = vmatprep.subr.mxu0 0.0
        %1874 = vmatpush1.msra.mxu0 0.0
        %1875 = vmatprep.subr.mxu0 0.0
        %1876 = vmatpush1.msra.mxu0 0.0
        %1877 = vmatprep.subr.mxu0 0.0
        %1878 = vmatpush1.msra.mxu0 0.0
        %1879 = vmatprep.subr.mxu0 0.0
        %1880 = vmatpush1.msra.mxu0 0.0
        %1881 = vmatprep.subr.mxu0 0.0
        %1882 = vmatpush1.msra.mxu0 0.0
        %1883 = vmatprep.subr.mxu0 0.0
        %1884 = vmatpush1.msra.mxu0 0.0
        %1885 = vmatprep.subr.mxu0 0.0
        %1886 = vmatpush1.msra.mxu0 0.0
        %1887 = vmatprep.subr.mxu0 0.0
        %1888 = vmatpush1.msra.mxu0 0.0
        %1889 = vmatprep.subr.mxu0 0.0
        %1890 = vmatpush1.msra.mxu0 0.0
        %1891 = vmatprep.subr.mxu0 0.0
        %1892 = vmatpush1.msra.mxu0 0.0
        %1893 = vmatprep.subr.mxu0 0.0
        %1894 = vmatpush1.msra.mxu0 0.0
        %1895 = vmatprep.subr.mxu0 0.0
        %1896 = vmatpush1.msra.mxu0 0.0
        %1897 = vmatprep.subr.mxu0 0.0
        %1898 = vmatpush1.msra.mxu0 0.0
        %1899 = vmatprep.subr.mxu0 0.0
        %1900 = vmatpush1.msra.mxu0 0.0
        %1901 = vmatprep.subr.mxu0 0.0
        %1902 = vmatpush1.msra.mxu0 0.0
        %1903 = vmatprep.subr.mxu0 0.0
        %1904 = vmatpush1.msra.mxu0 0.0
        %1905 = vmatprep.subr.mxu0 0.0
        %1906 = vmatpush1.msra.mxu0 0.0
        %1907 = vmatprep.subr.mxu0 0.0
        %1908 = vmatpush1.msra.mxu0 0.0
        %1909 = vmatprep.subr.mxu0 0.0
        %1910 = vmatpush1.msra.mxu0 0.0
        %1911 = vmatprep.subr.mxu0 0.0
        %1912 = vmatpush1.msra.mxu0 0.0
        %1913 = vmatprep.subr.mxu0 0.0
        %1914 = vmatpush1.msra.mxu0 0.0
        %1915 = vmatprep.subr.mxu0 0.0
        %1916 = vmatpush1.msra.mxu0 0.0
        %1917 = vmatprep.subr.mxu0 0.0
        %1918 = vmatpush1.msra.mxu0 0.0
        %1919 = vmatprep.subr.mxu0 0.0
        %1920 = vmatpush1.msra.mxu0 0.0
        %1921 = vmatprep.subr.mxu0 0.0
        %1922 = vmatpush1.msra.mxu0 0.0
        %1923 = vmatprep.subr.mxu0 0.0
        %1924 = vmatpush1.msra.mxu0 0.0
        %1925 = vmatprep.subr.mxu0 0.0
        %1926 = vmatpush1.msra.mxu0 0.0
        %1927 = vmatprep.subr.mxu0 0.0
        %1928 = vmatpush1.msra.mxu0 0.0
        %1929 = vmatprep.mubr.f32.mxu0 0.0
        %1930 = vmatmul.mubr.f32.gmra.mrb[0].mxu0 %v1863
        %v1931 = vpop.f32.mrb[0].mxu0
        %v1932 = vadd.f32 %v1860, %v1931
        %v1933 = vpop.f32.mrb[0].mxu0
        %1934 = vdwg.mxu0
        %v1935 = vadd.f32 %v1932, %v1321
        %1936 = vmatprep.subr.mxu0 0.0
        %1937 = vmatpush1.msra.mxu0 %v1935
        %1938 = vmatprep.subr.mxu0 0.0
        %1939 = vmatpush1.msra.mxu0 0.0
        %1940 = vmatprep.subr.mxu0 0.0
        %1941 = vmatpush1.msra.mxu0 0.0
        %1942 = vmatprep.subr.mxu0 0.0
        %1943 = vmatpush1.msra.mxu0 0.0
        %1944 = vmatprep.subr.mxu0 0.0
        %1945 = vmatpush1.msra.mxu0 0.0
        %1946 = vmatprep.subr.mxu0 0.0
        %1947 = vmatpush1.msra.mxu0 0.0
        %1948 = vmatprep.subr.mxu0 0.0
        %1949 = vmatpush1.msra.mxu0 0.0
        %1950 = vmatprep.subr.mxu0 0.0
        %1951 = vmatpush1.msra.mxu0 0.0
        %1952 = vmatprep.subr.mxu0 0.0
        %1953 = vmatpush1.msra.mxu0 0.0
        %1954 = vmatprep.subr.mxu0 0.0
        %1955 = vmatpush1.msra.mxu0 0.0
        %1956 = vmatprep.subr.mxu0 0.0
        %1957 = vmatpush1.msra.mxu0 0.0
        %1958 = vmatprep.subr.mxu0 0.0
        %1959 = vmatpush1.msra.mxu0 0.0
        %1960 = vmatprep.subr.mxu0 0.0
        %1961 = vmatpush1.msra.mxu0 0.0
        %1962 = vmatprep.subr.mxu0 0.0
        %1963 = vmatpush1.msra.mxu0 0.0
        %1964 = vmatprep.subr.mxu0 0.0
        %1965 = vmatpush1.msra.mxu0 0.0
        %1966 = vmatprep.subr.mxu0 0.0
        %1967 = vmatpush1.msra.mxu0 0.0
        %1968 = vmatprep.subr.mxu0 0.0
        %1969 = vmatpush1.msra.mxu0 0.0
        %1970 = vmatprep.subr.mxu0 0.0
        %1971 = vmatpush1.msra.mxu0 0.0
        %1972 = vmatprep.subr.mxu0 0.0
        %1973 = vmatpush1.msra.mxu0 0.0
        %1974 = vmatprep.subr.mxu0 0.0
        %1975 = vmatpush1.msra.mxu0 0.0
        %1976 = vmatprep.subr.mxu0 0.0
        %1977 = vmatpush1.msra.mxu0 0.0
        %1978 = vmatprep.subr.mxu0 0.0
        %1979 = vmatpush1.msra.mxu0 0.0
        %1980 = vmatprep.subr.mxu0 0.0
        %1981 = vmatpush1.msra.mxu0 0.0
        %1982 = vmatprep.subr.mxu0 0.0
        %1983 = vmatpush1.msra.mxu0 0.0
        %1984 = vmatprep.subr.mxu0 0.0
        %1985 = vmatpush1.msra.mxu0 0.0
        %1986 = vmatprep.subr.mxu0 0.0
        %1987 = vmatpush1.msra.mxu0 0.0
        %1988 = vmatprep.subr.mxu0 0.0
        %1989 = vmatpush1.msra.mxu0 0.0
        %1990 = vmatprep.subr.mxu0 0.0
        %1991 = vmatpush1.msra.mxu0 0.0
        %1992 = vmatprep.subr.mxu0 0.0
        %1993 = vmatpush1.msra.mxu0 0.0
        %1994 = vmatprep.subr.mxu0 0.0
        %1995 = vmatpush1.msra.mxu0 0.0
        %1996 = vmatprep.subr.mxu0 0.0
        %1997 = vmatpush1.msra.mxu0 0.0
        %1998 = vmatprep.subr.mxu0 0.0
        %1999 = vmatpush1.msra.mxu0 0.0
        %2000 = vmatprep.mubr.f32.mxu0 0.0
        %2001 = vmatmul.mubr.f32.gmra.mrb[0].mxu0 %v730
        %v2002 = vpop.f32.mrb[0].mxu0
        %v2003 = vadd.f32 %v722, %v2002
        %v2004 = vpop.f32.mrb[0].mxu0
        %2005 = vmatprep.mubr.f32.mxu0 0.0
        %2006 = vmatmul.mubr.f32.gmra.mrb[0].mxu0 %v733
        %v2007 = vpop.f32.mrb[0].mxu0
        %v2008 = vadd.f32 %v727, %v2007
        %v2009 = vpop.f32.mrb[0].mxu0
        %2010 = vdwg.mxu0
        %vm2011 = vcmp.ge.f32.partialorder %v2003, 0.0
        %vm2012 = vcmp.ge.f32.partialorder %v2008, 0.0
        %v2013 = vmul.f32 %v812, %v2003
        %v2014 = vmul.f32 %v812, %v2008
        %v2015 = vsel %vm2011, %v2003, %v2013
        %v2016 = vsel %vm2012, %v2008, %v2014
        %v2017 = vadd.f32 %v2015, %v2016
        %v2018 = vrot.slane %v2017, 4
        %v2019 = vadd.f32 %v2017, %v2018
        %v2020 = vrot.slane %v2019, 2
        %v2021 = vadd.f32 %v2019, %v2020
        %v2022 = vrot.slane %v2021, 1
        %v2023 = vadd.f32 %v2021, %v2022
        %v2024 = vmul.f32 %v2015, %v2015
        %v2025 = vmul.f32 %v2016, %v2016
        %v2026 = vadd.f32 %v2024, %v2025
        %v2027 = vrot.slane %v2026, 4
        %v2028 = vadd.f32 %v2026, %v2027
        %v2029 = vrot.slane %v2028, 2
        %v2030 = vadd.f32 %v2028, %v2029
        %v2031 = vrot.slane %v2030, 1
        %v2032 = vadd.f32 %v2030, %v2031
        %2033 = vmatprep.subr.mxu0 0.0
        %2034 = vmatpush1.msra.mxu0 %v694
        %2035 = vmatprep.subr.mxu0 0.0
        %2036 = vmatpush1.msra.mxu0 %v695
        %2037 = vmatprep.subr.mxu0 0.0
        %2038 = vmatpush1.msra.mxu0 %v696
        %2039 = vmatprep.subr.mxu0 0.0
        %2040 = vmatpush1.msra.mxu0 %v697
        %2041 = vmatprep.subr.mxu0 0.0
        %2042 = vmatpush1.msra.mxu0 %v698
        %2043 = vmatprep.subr.mxu0 0.0
        %2044 = vmatpush1.msra.mxu0 %v699
        %2045 = vmatprep.subr.mxu0 0.0
        %2046 = vmatpush1.msra.mxu0 %v700
        %2047 = vmatprep.subr.mxu0 0.0
        %2048 = vmatpush1.msra.mxu0 %v701
        %2049 = vmatprep.subr.mxu0 0.0
        %2050 = vmatpush1.msra.mxu0 %v702
        %2051 = vmatprep.subr.mxu0 0.0
        %2052 = vmatpush1.msra.mxu0 %v703
        %2053 = vmatprep.subr.mxu0 0.0
        %2054 = vmatpush1.msra.mxu0 %v704
        %2055 = vmatprep.subr.mxu0 0.0
        %2056 = vmatpush1.msra.mxu0 %v705
        %2057 = vmatprep.subr.mxu0 0.0
        %2058 = vmatpush1.msra.mxu0 %v706
        %2059 = vmatprep.subr.mxu0 0.0
        %2060 = vmatpush1.msra.mxu0 %v707
        %2061 = vmatprep.subr.mxu0 0.0
        %2062 = vmatpush1.msra.mxu0 %v708
        %2063 = vmatprep.subr.mxu0 0.0
        %2064 = vmatpush1.msra.mxu0 %v709
        %2065 = vmatprep.subr.mxu0 0.0
        %2066 = vmatpush1.msra.mxu0 0.0
        %2067 = vmatprep.subr.mxu0 0.0
        %2068 = vmatpush1.msra.mxu0 0.0
        %2069 = vmatprep.subr.mxu0 0.0
        %2070 = vmatpush1.msra.mxu0 0.0
        %2071 = vmatprep.subr.mxu0 0.0
        %2072 = vmatpush1.msra.mxu0 0.0
        %2073 = vmatprep.subr.mxu0 0.0
        %2074 = vmatpush1.msra.mxu0 0.0
        %2075 = vmatprep.subr.mxu0 0.0
        %2076 = vmatpush1.msra.mxu0 0.0
        %2077 = vmatprep.subr.mxu0 0.0
        %2078 = vmatpush1.msra.mxu0 0.0
        %2079 = vmatprep.subr.mxu0 0.0
        %2080 = vmatpush1.msra.mxu0 0.0
        %2081 = vmatprep.subr.mxu0 0.0
        %2082 = vmatpush1.msra.mxu0 0.0
        %2083 = vmatprep.subr.mxu0 0.0
        %2084 = vmatpush1.msra.mxu0 0.0
        %2085 = vmatprep.subr.mxu0 0.0
        %2086 = vmatpush1.msra.mxu0 0.0
        %2087 = vmatprep.subr.mxu0 0.0
        %2088 = vmatpush1.msra.mxu0 0.0
        %2089 = vmatprep.subr.mxu0 0.0
        %2090 = vmatpush1.msra.mxu0 0.0
        %2091 = vmatprep.subr.mxu0 0.0
        %2092 = vmatpush1.msra.mxu0 0.0
        %2093 = vmatprep.subr.mxu0 0.0
        %2094 = vmatpush1.msra.mxu0 0.0
        %2095 = vmatprep.subr.mxu0 0.0
        %2096 = vmatpush1.msra.mxu0 0.0
        %2097 = vmatprep.mubr.f32.mxu0 0.0
        %2098 = vmatmul.mubr.f32.gmra.mrb[0].mxu0 %v2023
        %v2099 = vpop.f32.mrb[0].mxu0
        %v2100 = vadd.f32 0.0, %v2099
        %v2101 = vpop.f32.mrb[0].mxu0
        %2102 = vdwg.mxu0
        %2103 = vmatprep.subr.mxu0 0.0
        %2104 = vmatpush1.msra.mxu0 %v694
        %2105 = vmatprep.subr.mxu0 0.0
        %2106 = vmatpush1.msra.mxu0 %v695
        %2107 = vmatprep.subr.mxu0 0.0
        %2108 = vmatpush1.msra.mxu0 %v696
        %2109 = vmatprep.subr.mxu0 0.0
        %2110 = vmatpush1.msra.mxu0 %v697
        %2111 = vmatprep.subr.mxu0 0.0
        %2112 = vmatpush1.msra.mxu0 %v698
        %2113 = vmatprep.subr.mxu0 0.0
        %2114 = vmatpush1.msra.mxu0 %v699
        %2115 = vmatprep.subr.mxu0 0.0
        %2116 = vmatpush1.msra.mxu0 %v700
        %2117 = vmatprep.subr.mxu0 0.0
        %2118 = vmatpush1.msra.mxu0 %v701
        %2119 = vmatprep.subr.mxu0 0.0
        %2120 = vmatpush1.msra.mxu0 %v702
        %2121 = vmatprep.subr.mxu0 0.0
        %2122 = vmatpush1.msra.mxu0 %v703
        %2123 = vmatprep.subr.mxu0 0.0
        %2124 = vmatpush1.msra.mxu0 %v704
        %2125 = vmatprep.subr.mxu0 0.0
        %2126 = vmatpush1.msra.mxu0 %v705
        %2127 = vmatprep.subr.mxu0 0.0
        %2128 = vmatpush1.msra.mxu0 %v706
        %2129 = vmatprep.subr.mxu0 0.0
        %2130 = vmatpush1.msra.mxu0 %v707
        %2131 = vmatprep.subr.mxu0 0.0
        %2132 = vmatpush1.msra.mxu0 %v708
        %2133 = vmatprep.subr.mxu0 0.0
        %2134 = vmatpush1.msra.mxu0 %v709
        %2135 = vmatprep.subr.mxu0 0.0
        %2136 = vmatpush1.msra.mxu0 0.0
        %2137 = vmatprep.subr.mxu0 0.0
        %2138 = vmatpush1.msra.mxu0 0.0
        %2139 = vmatprep.subr.mxu0 0.0
        %2140 = vmatpush1.msra.mxu0 0.0
        %2141 = vmatprep.subr.mxu0 0.0
        %2142 = vmatpush1.msra.mxu0 0.0
        %2143 = vmatprep.subr.mxu0 0.0
        %2144 = vmatpush1.msra.mxu0 0.0
        %2145 = vmatprep.subr.mxu0 0.0
        %2146 = vmatpush1.msra.mxu0 0.0
        %2147 = vmatprep.subr.mxu0 0.0
        %2148 = vmatpush1.msra.mxu0 0.0
        %2149 = vmatprep.subr.mxu0 0.0
        %2150 = vmatpush1.msra.mxu0 0.0
        %2151 = vmatprep.subr.mxu0 0.0
        %2152 = vmatpush1.msra.mxu0 0.0
        %2153 = vmatprep.subr.mxu0 0.0
        %2154 = vmatpush1.msra.mxu0 0.0
        %2155 = vmatprep.subr.mxu0 0.0
        %2156 = vmatpush1.msra.mxu0 0.0
        %2157 = vmatprep.subr.mxu0 0.0
        %2158 = vmatpush1.msra.mxu0 0.0
        %2159 = vmatprep.subr.mxu0 0.0
        %2160 = vmatpush1.msra.mxu0 0.0
        %2161 = vmatprep.subr.mxu0 0.0
        %2162 = vmatpush1.msra.mxu0 0.0
        %2163 = vmatprep.subr.mxu0 0.0
        %2164 = vmatpush1.msra.mxu0 0.0
        %2165 = vmatprep.subr.mxu0 0.0
        %2166 = vmatpush1.msra.mxu0 0.0
        %2167 = vmatprep.mubr.f32.mxu0 0.0
        %2168 = vmatmul.mubr.f32.gmra.mrb[0].mxu0 %v2032
        %v2169 = vpop.f32.mrb[0].mxu0
        %v2170 = vadd.f32 0.0, %v2169
        %v2171 = vpop.f32.mrb[0].mxu0
        %2172 = vdwg.mxu0
        %v2173 = vmul.f32 %v2100, %v710
        %v2174 = vmul.f32 %v2170, %v710
        %v2175 = vmul.f32 %v2173, %v2173
        %v2176 = vsub.f32 %v2174, %v2175
        %v2177 = vlaneseq
        %v2178 = vshrl.u32 %v2177, 7
        %v2179 = vsub.s32 0, %v2178
        %v2180 = vrot.slane %v2173, %v2179
        %v2181 = vsub.f32 %v2015, %v2180
        %v2182 = vsub.f32 %v2016, %v2180
        %v2183 = vrsqrt.pop %v2176
        %v2184 = vlaneseq
        %v2185 = vshrl.u32 %v2184, 7
        %v2186 = vsub.s32 0, %v2185
        %v2187 = vrot.slane %v2183, %v2186
        %v2188 = vmul.f32 %v2181, %v2187
        %v2189 = vmul.f32 %v2182, %v2187
        %2190 = vrot.lane.b32.xlu0 %v2188, 1
        %v2191 = vpop.permute.xlu0 %2190
        %2192 = vrot.lane.b32.xlu0 %v2189, 1
        %v2193 = vpop.permute.xlu0 %2192
        %v2194 = vsel %vm1000, %v2191, 0.0
        %v2195 = vsel %vm1000, %v2193, 0.0
        %v2196 = vmul.f32 %v2194, %v1006
        %v2197 = vmul.f32 %v2195, %v1011
        %v2198 = vmul.f32 %v2188, %v1017
        %v2199 = vmul.f32 %v2189, %v1021
        %v2200 = vadd.f32 %v2196, %v2198
        %v2201 = vadd.f32 %v2197, %v2199
        %2202 = vrot.lane.b32.xlu0 %v2188, 127
        %v2203 = vpop.permute.xlu0 %2202
        %2204 = vrot.lane.b32.xlu0 %v2189, 127
        %v2205 = vpop.permute.xlu0 %2204
        %v2206 = vsel %vm1033, %v2203, 0.0
        %v2207 = vsel %vm1033, %v2205, 0.0
        %v2208 = vmul.f32 %v2206, %v1038
        %v2209 = vmul.f32 %v2207, %v1042
        %v2210 = vadd.f32 %v2200, %v2208
        %v2211 = vadd.f32 %v2201, %v2209
        %v2212 = vadd.f32 %v2210, %v1051
        %v2213 = vadd.f32 %v2211, %v1056
        %vm2214 = vcmp.ge.f32.partialorder %v2212, 0.0
        %vm2215 = vcmp.ge.f32.partialorder %v2213, 0.0
        %v2216 = vmul.f32 %v1062, %v2212
        %v2217 = vmul.f32 %v1062, %v2213
        %v2218 = vsel %vm2214, %v2212, %v2216
        %v2219 = vsel %vm2215, %v2213, %v2217
        %v2220 = vadd.f32 %v2218, %v2219
        %v2221 = vrot.slane %v2220, 4
        %v2222 = vadd.f32 %v2220, %v2221
        %v2223 = vrot.slane %v2222, 2
        %v2224 = vadd.f32 %v2222, %v2223
        %v2225 = vrot.slane %v2224, 1
        %v2226 = vadd.f32 %v2224, %v2225
        %v2227 = vmul.f32 %v2218, %v2218
        %v2228 = vmul.f32 %v2219, %v2219
        %v2229 = vadd.f32 %v2227, %v2228
        %v2230 = vrot.slane %v2229, 4
        %v2231 = vadd.f32 %v2229, %v2230
        %v2232 = vrot.slane %v2231, 2
        %v2233 = vadd.f32 %v2231, %v2232
        %v2234 = vrot.slane %v2233, 1
        %v2235 = vadd.f32 %v2233, %v2234
        %2236 = vmatprep.subr.mxu0 0.0
        %2237 = vmatpush1.msra.mxu0 %v694
        %2238 = vmatprep.subr.mxu0 0.0
        %2239 = vmatpush1.msra.mxu0 %v695
        %2240 = vmatprep.subr.mxu0 0.0
        %2241 = vmatpush1.msra.mxu0 %v696
        %2242 = vmatprep.subr.mxu0 0.0
        %2243 = vmatpush1.msra.mxu0 %v697
        %2244 = vmatprep.subr.mxu0 0.0
        %2245 = vmatpush1.msra.mxu0 %v698
        %2246 = vmatprep.subr.mxu0 0.0
        %2247 = vmatpush1.msra.mxu0 %v699
        %2248 = vmatprep.subr.mxu0 0.0
        %2249 = vmatpush1.msra.mxu0 %v700
        %2250 = vmatprep.subr.mxu0 0.0
        %2251 = vmatpush1.msra.mxu0 %v701
        %2252 = vmatprep.subr.mxu0 0.0
        %2253 = vmatpush1.msra.mxu0 %v702
        %2254 = vmatprep.subr.mxu0 0.0
        %2255 = vmatpush1.msra.mxu0 %v703
        %2256 = vmatprep.subr.mxu0 0.0
        %2257 = vmatpush1.msra.mxu0 %v704
        %2258 = vmatprep.subr.mxu0 0.0
        %2259 = vmatpush1.msra.mxu0 %v705
        %2260 = vmatprep.subr.mxu0 0.0
        %2261 = vmatpush1.msra.mxu0 %v706
        %2262 = vmatprep.subr.mxu0 0.0
        %2263 = vmatpush1.msra.mxu0 %v707
        %2264 = vmatprep.subr.mxu0 0.0
        %2265 = vmatpush1.msra.mxu0 %v708
        %2266 = vmatprep.subr.mxu0 0.0
        %2267 = vmatpush1.msra.mxu0 %v709
        %2268 = vmatprep.subr.mxu0 0.0
        %2269 = vmatpush1.msra.mxu0 0.0
        %2270 = vmatprep.subr.mxu0 0.0
        %2271 = vmatpush1.msra.mxu0 0.0
        %2272 = vmatprep.subr.mxu0 0.0
        %2273 = vmatpush1.msra.mxu0 0.0
        %2274 = vmatprep.subr.mxu0 0.0
        %2275 = vmatpush1.msra.mxu0 0.0
        %2276 = vmatprep.subr.mxu0 0.0
        %2277 = vmatpush1.msra.mxu0 0.0
        %2278 = vmatprep.subr.mxu0 0.0
        %2279 = vmatpush1.msra.mxu0 0.0
        %2280 = vmatprep.subr.mxu0 0.0
        %2281 = vmatpush1.msra.mxu0 0.0
        %2282 = vmatprep.subr.mxu0 0.0
        %2283 = vmatpush1.msra.mxu0 0.0
        %2284 = vmatprep.subr.mxu0 0.0
        %2285 = vmatpush1.msra.mxu0 0.0
        %2286 = vmatprep.subr.mxu0 0.0
        %2287 = vmatpush1.msra.mxu0 0.0
        %2288 = vmatprep.subr.mxu0 0.0
        %2289 = vmatpush1.msra.mxu0 0.0
        %2290 = vmatprep.subr.mxu0 0.0
        %2291 = vmatpush1.msra.mxu0 0.0
        %2292 = vmatprep.subr.mxu0 0.0
        %2293 = vmatpush1.msra.mxu0 0.0
        %2294 = vmatprep.subr.mxu0 0.0
        %2295 = vmatpush1.msra.mxu0 0.0
        %2296 = vmatprep.subr.mxu0 0.0
        %2297 = vmatpush1.msra.mxu0 0.0
        %2298 = vmatprep.subr.mxu0 0.0
        %2299 = vmatpush1.msra.mxu0 0.0
        %2300 = vmatprep.mubr.f32.mxu0 0.0
        %2301 = vmatmul.mubr.f32.gmra.mrb[0].mxu0 %v2226
        %v2302 = vpop.f32.mrb[0].mxu0
        %v2303 = vadd.f32 0.0, %v2302
        %v2304 = vpop.f32.mrb[0].mxu0
        %2305 = vdwg.mxu0
        %2306 = vmatprep.subr.mxu0 0.0
        %2307 = vmatpush1.msra.mxu0 %v694
        %2308 = vmatprep.subr.mxu0 0.0
        %2309 = vmatpush1.msra.mxu0 %v695
        %2310 = vmatprep.subr.mxu0 0.0
        %2311 = vmatpush1.msra.mxu0 %v696
        %2312 = vmatprep.subr.mxu0 0.0
        %2313 = vmatpush1.msra.mxu0 %v697
        %2314 = vmatprep.subr.mxu0 0.0
        %2315 = vmatpush1.msra.mxu0 %v698
        %2316 = vmatprep.subr.mxu0 0.0
        %2317 = vmatpush1.msra.mxu0 %v699
        %2318 = vmatprep.subr.mxu0 0.0
        %2319 = vmatpush1.msra.mxu0 %v700
        %2320 = vmatprep.subr.mxu0 0.0
        %2321 = vmatpush1.msra.mxu0 %v701
        %2322 = vmatprep.subr.mxu0 0.0
        %2323 = vmatpush1.msra.mxu0 %v702
        %2324 = vmatprep.subr.mxu0 0.0
        %2325 = vmatpush1.msra.mxu0 %v703
        %2326 = vmatprep.subr.mxu0 0.0
        %2327 = vmatpush1.msra.mxu0 %v704
        %2328 = vmatprep.subr.mxu0 0.0
        %2329 = vmatpush1.msra.mxu0 %v705
        %2330 = vmatprep.subr.mxu0 0.0
        %2331 = vmatpush1.msra.mxu0 %v706
        %2332 = vmatprep.subr.mxu0 0.0
        %2333 = vmatpush1.msra.mxu0 %v707
        %2334 = vmatprep.subr.mxu0 0.0
        %2335 = vmatpush1.msra.mxu0 %v708
        %2336 = vmatprep.subr.mxu0 0.0
        %2337 = vmatpush1.msra.mxu0 %v709
        %2338 = vmatprep.subr.mxu0 0.0
        %2339 = vmatpush1.msra.mxu0 0.0
        %2340 = vmatprep.subr.mxu0 0.0
        %2341 = vmatpush1.msra.mxu0 0.0
        %2342 = vmatprep.subr.mxu0 0.0
        %2343 = vmatpush1.msra.mxu0 0.0
        %2344 = vmatprep.subr.mxu0 0.0
        %2345 = vmatpush1.msra.mxu0 0.0
        %2346 = vmatprep.subr.mxu0 0.0
        %2347 = vmatpush1.msra.mxu0 0.0
        %2348 = vmatprep.subr.mxu0 0.0
        %2349 = vmatpush1.msra.mxu0 0.0
        %2350 = vmatprep.subr.mxu0 0.0
        %2351 = vmatpush1.msra.mxu0 0.0
        %2352 = vmatprep.subr.mxu0 0.0
        %2353 = vmatpush1.msra.mxu0 0.0
        %2354 = vmatprep.subr.mxu0 0.0
        %2355 = vmatpush1.msra.mxu0 0.0
        %2356 = vmatprep.subr.mxu0 0.0
        %2357 = vmatpush1.msra.mxu0 0.0
        %2358 = vmatprep.subr.mxu0 0.0
        %2359 = vmatpush1.msra.mxu0 0.0
        %2360 = vmatprep.subr.mxu0 0.0
        %2361 = vmatpush1.msra.mxu0 0.0
        %2362 = vmatprep.subr.mxu0 0.0
        %2363 = vmatpush1.msra.mxu0 0.0
        %2364 = vmatprep.subr.mxu0 0.0
        %2365 = vmatpush1.msra.mxu0 0.0
        %2366 = vmatprep.subr.mxu0 0.0
        %2367 = vmatpush1.msra.mxu0 0.0
        %2368 = vmatprep.subr.mxu0 0.0
        %2369 = vmatpush1.msra.mxu0 0.0
        %2370 = vmatprep.mubr.f32.mxu0 0.0
        %2371 = vmatmul.mubr.f32.gmra.mrb[0].mxu0 %v2235
        %v2372 = vpop.f32.mrb[0].mxu0
        %v2373 = vadd.f32 0.0, %v2372
        %v2374 = vpop.f32.mrb[0].mxu0
        %2375 = vdwg.mxu0
        %v2376 = vmul.f32 %v2303, %v710
        %v2377 = vmul.f32 %v2373, %v710
        %v2378 = vmul.f32 %v2376, %v2376
        %v2379 = vsub.f32 %v2377, %v2378
        %v2380 = vlaneseq
        %v2381 = vshrl.u32 %v2380, 7
        %v2382 = vsub.s32 0, %v2381
        %v2383 = vrot.slane %v2376, %v2382
        %v2384 = vsub.f32 %v2218, %v2383
        %v2385 = vsub.f32 %v2219, %v2383
        %v2386 = vrsqrt.pop %v2379
        %v2387 = vlaneseq
        %v2388 = vshrl.u32 %v2387, 7
        %v2389 = vsub.s32 0, %v2388
        %v2390 = vrot.slane %v2386, %v2389
        %v2391 = vmul.f32 %v2384, %v2390
        %v2392 = vmul.f32 %v2385, %v2390
        %2393 = vmatprep.subr.mxu0 0.0
        %2394 = vmatpush1.msra.mxu0 %v2391
        %2395 = vmatprep.subr.mxu0 0.0
        %2396 = vmatpush1.msra.mxu0 %v2392
        %2397 = vmatprep.subr.mxu0 0.0
        %2398 = vmatpush1.msra.mxu0 0.0
        %2399 = vmatprep.subr.mxu0 0.0
        %2400 = vmatpush1.msra.mxu0 0.0
        %2401 = vmatprep.subr.mxu0 0.0
        %2402 = vmatpush1.msra.mxu0 0.0
        %2403 = vmatprep.subr.mxu0 0.0
        %2404 = vmatpush1.msra.mxu0 0.0
        %2405 = vmatprep.subr.mxu0 0.0
        %2406 = vmatpush1.msra.mxu0 0.0
        %2407 = vmatprep.subr.mxu0 0.0
        %2408 = vmatpush1.msra.mxu0 0.0
        %2409 = vmatprep.subr.mxu0 0.0
        %2410 = vmatpush1.msra.mxu0 0.0
        %2411 = vmatprep.subr.mxu0 0.0
        %2412 = vmatpush1.msra.mxu0 0.0
        %2413 = vmatprep.subr.mxu0 0.0
        %2414 = vmatpush1.msra.mxu0 0.0
        %2415 = vmatprep.subr.mxu0 0.0
        %2416 = vmatpush1.msra.mxu0 0.0
        %2417 = vmatprep.subr.mxu0 0.0
        %2418 = vmatpush1.msra.mxu0 0.0
        %2419 = vmatprep.subr.mxu0 0.0
        %2420 = vmatpush1.msra.mxu0 0.0
        %2421 = vmatprep.subr.mxu0 0.0
        %2422 = vmatpush1.msra.mxu0 0.0
        %2423 = vmatprep.subr.mxu0 0.0
        %2424 = vmatpush1.msra.mxu0 0.0
        %2425 = vmatprep.subr.mxu0 0.0
        %2426 = vmatpush1.msra.mxu0 0.0
        %2427 = vmatprep.subr.mxu0 0.0
        %2428 = vmatpush1.msra.mxu0 0.0
        %2429 = vmatprep.subr.mxu0 0.0
        %2430 = vmatpush1.msra.mxu0 0.0
        %2431 = vmatprep.subr.mxu0 0.0
        %2432 = vmatpush1.msra.mxu0 0.0
        %2433 = vmatprep.subr.mxu0 0.0
        %2434 = vmatpush1.msra.mxu0 0.0
        %2435 = vmatprep.subr.mxu0 0.0
        %2436 = vmatpush1.msra.mxu0 0.0
        %2437 = vmatprep.subr.mxu0 0.0
        %2438 = vmatpush1.msra.mxu0 0.0
        %2439 = vmatprep.subr.mxu0 0.0
        %2440 = vmatpush1.msra.mxu0 0.0
        %2441 = vmatprep.subr.mxu0 0.0
        %2442 = vmatpush1.msra.mxu0 0.0
        %2443 = vmatprep.subr.mxu0 0.0
        %2444 = vmatpush1.msra.mxu0 0.0
        %2445 = vmatprep.subr.mxu0 0.0
        %2446 = vmatpush1.msra.mxu0 0.0
        %2447 = vmatprep.subr.mxu0 0.0
        %2448 = vmatpush1.msra.mxu0 0.0
        %2449 = vmatprep.subr.mxu0 0.0
        %2450 = vmatpush1.msra.mxu0 0.0
        %2451 = vmatprep.subr.mxu0 0.0
        %2452 = vmatpush1.msra.mxu0 0.0
        %2453 = vmatprep.subr.mxu0 0.0
        %2454 = vmatpush1.msra.mxu0 0.0
        %2455 = vmatprep.subr.mxu0 0.0
        %2456 = vmatpush1.msra.mxu0 0.0
        %2457 = vmatprep.mubr.f32.mxu0 0.0
        %2458 = vmatmul.mubr.f32.gmra.mrb[0].mxu0 %v1249
        %v2459 = vpop.f32.mrb[0].mxu0
        %v2460 = vadd.f32 %v1245, %v2459
        %v2461 = vpop.f32.mrb[0].mxu0
        %2462 = vdwg.mxu0
        %v2463 = vadd.f32 %v2460, %v1935
        %v2464 = vld [vmem:[%s12] sm:$0xff]
        %v2465 = vld [vmem:[%s13] sm:$0xff]
        %2467 = vset.pattern.permute.xlu0 0
        %2468 = vperm.xlu0 %2467, %v2465
        %v2469 = vpop.permute.xlu0 %2468
        %v2472 = vsel %vm1247, %v2464, 0
        %2474 = vmatprep.subr.mxu0 0.0
        %2475 = vmatpush1.msra.mxu0 %v2391
        %2476 = vmatprep.subr.mxu0 0.0
        %2477 = vmatpush1.msra.mxu0 %v2392
        %2478 = vmatprep.subr.mxu0 0.0
        %2479 = vmatpush1.msra.mxu0 0.0
        %2480 = vmatprep.subr.mxu0 0.0
        %2481 = vmatpush1.msra.mxu0 0.0
        %2482 = vmatprep.subr.mxu0 0.0
        %2483 = vmatpush1.msra.mxu0 0.0
        %2484 = vmatprep.subr.mxu0 0.0
        %2485 = vmatpush1.msra.mxu0 0.0
        %2486 = vmatprep.subr.mxu0 0.0
        %2487 = vmatpush1.msra.mxu0 0.0
        %2488 = vmatprep.subr.mxu0 0.0
        %2489 = vmatpush1.msra.mxu0 0.0
        %2490 = vmatprep.subr.mxu0 0.0
        %2491 = vmatpush1.msra.mxu0 0.0
        %2492 = vmatprep.subr.mxu0 0.0
        %2493 = vmatpush1.msra.mxu0 0.0
        %2494 = vmatprep.subr.mxu0 0.0
        %2495 = vmatpush1.msra.mxu0 0.0
        %2496 = vmatprep.subr.mxu0 0.0
        %2497 = vmatpush1.msra.mxu0 0.0
        %2498 = vmatprep.subr.mxu0 0.0
        %2499 = vmatpush1.msra.mxu0 0.0
        %2500 = vmatprep.subr.mxu0 0.0
        %2501 = vmatpush1.msra.mxu0 0.0
        %2502 = vmatprep.subr.mxu0 0.0
        %2503 = vmatpush1.msra.mxu0 0.0
        %2504 = vmatprep.subr.mxu0 0.0
        %2505 = vmatpush1.msra.mxu0 0.0
        %2506 = vmatprep.subr.mxu0 0.0
        %2507 = vmatpush1.msra.mxu0 0.0
        %2508 = vmatprep.subr.mxu0 0.0
        %2509 = vmatpush1.msra.mxu0 0.0
        %2510 = vmatprep.subr.mxu0 0.0
        %2511 = vmatpush1.msra.mxu0 0.0
        %2512 = vmatprep.subr.mxu0 0.0
        %2513 = vmatpush1.msra.mxu0 0.0
        %2514 = vmatprep.subr.mxu0 0.0
        %2515 = vmatpush1.msra.mxu0 0.0
        %2516 = vmatprep.subr.mxu0 0.0
        %2517 = vmatpush1.msra.mxu0 0.0
        %2518 = vmatprep.subr.mxu0 0.0
        %2519 = vmatpush1.msra.mxu0 0.0
        %2520 = vmatprep.subr.mxu0 0.0
        %2521 = vmatpush1.msra.mxu0 0.0
        %2522 = vmatprep.subr.mxu0 0.0
        %2523 = vmatpush1.msra.mxu0 0.0
        %2524 = vmatprep.subr.mxu0 0.0
        %2525 = vmatpush1.msra.mxu0 0.0
        %2526 = vmatprep.subr.mxu0 0.0
        %2527 = vmatpush1.msra.mxu0 0.0
        %2528 = vmatprep.subr.mxu0 0.0
        %2529 = vmatpush1.msra.mxu0 0.0
        %2530 = vmatprep.subr.mxu0 0.0
        %2531 = vmatpush1.msra.mxu0 0.0
        %2532 = vmatprep.subr.mxu0 0.0
        %2533 = vmatpush1.msra.mxu0 0.0
        %2534 = vmatprep.subr.mxu0 0.0
        %2535 = vmatpush1.msra.mxu0 0.0
        %2536 = vmatprep.subr.mxu0 0.0
        %2537 = vmatpush1.msra.mxu0 0.0
        %2538 = vmatprep.mubr.f32.mxu0 0.0
        %2539 = vmatmul.mubr.f32.gmra.mrb[0].mxu0 %v2472
        %v2540 = vpop.f32.mrb[0].mxu0
        %v2541 = vadd.f32 %v2469, %v2540
        %v2542 = vpop.f32.mrb[0].mxu0
        %2543 = vdwg.mxu0
        %2544 = vmatprep.subr.mxu0 0.0
        %2545 = vmatpush1.msra.mxu0 %v2463
        %2546 = vmatprep.subr.mxu0 0.0
        %2547 = vmatpush1.msra.mxu0 0.0
        %2548 = vmatprep.subr.mxu0 0.0
        %2549 = vmatpush1.msra.mxu0 0.0
        %2550 = vmatprep.subr.mxu0 0.0
        %2551 = vmatpush1.msra.mxu0 0.0
        %2552 = vmatprep.subr.mxu0 0.0
        %2553 = vmatpush1.msra.mxu0 0.0
        %2554 = vmatprep.subr.mxu0 0.0
        %2555 = vmatpush1.msra.mxu0 0.0
        %2556 = vmatprep.subr.mxu0 0.0
        %2557 = vmatpush1.msra.mxu0 0.0
        %2558 = vmatprep.subr.mxu0 0.0
        %2559 = vmatpush1.msra.mxu0 0.0
        %2560 = vmatprep.subr.mxu0 0.0
        %2561 = vmatpush1.msra.mxu0 0.0
        %2562 = vmatprep.subr.mxu0 0.0
        %2563 = vmatpush1.msra.mxu0 0.0
        %2564 = vmatprep.subr.mxu0 0.0
        %2565 = vmatpush1.msra.mxu0 0.0
        %2566 = vmatprep.subr.mxu0 0.0
        %2567 = vmatpush1.msra.mxu0 0.0
        %2568 = vmatprep.subr.mxu0 0.0
        %2569 = vmatpush1.msra.mxu0 0.0
        %2570 = vmatprep.subr.mxu0 0.0
        %2571 = vmatpush1.msra.mxu0 0.0
        %2572 = vmatprep.subr.mxu0 0.0
        %2573 = vmatpush1.msra.mxu0 0.0
        %2574 = vmatprep.subr.mxu0 0.0
        %2575 = vmatpush1.msra.mxu0 0.0
        %2576 = vmatprep.subr.mxu0 0.0
        %2577 = vmatpush1.msra.mxu0 0.0
        %2578 = vmatprep.subr.mxu0 0.0
        %2579 = vmatpush1.msra.mxu0 0.0
        %2580 = vmatprep.subr.mxu0 0.0
        %2581 = vmatpush1.msra.mxu0 0.0
        %2582 = vmatprep.subr.mxu0 0.0
        %2583 = vmatpush1.msra.mxu0 0.0
        %2584 = vmatprep.subr.mxu0 0.0
        %2585 = vmatpush1.msra.mxu0 0.0
        %2586 = vmatprep.subr.mxu0 0.0
        %2587 = vmatpush1.msra.mxu0 0.0
        %2588 = vmatprep.subr.mxu0 0.0
        %2589 = vmatpush1.msra.mxu0 0.0
        %2590 = vmatprep.subr.mxu0 0.0
        %2591 = vmatpush1.msra.mxu0 0.0
        %2592 = vmatprep.subr.mxu0 0.0
        %2593 = vmatpush1.msra.mxu0 0.0
        %2594 = vmatprep.subr.mxu0 0.0
        %2595 = vmatpush1.msra.mxu0 0.0
        %2596 = vmatprep.subr.mxu0 0.0
        %2597 = vmatpush1.msra.mxu0 0.0
        %2598 = vmatprep.subr.mxu0 0.0
        %2599 = vmatpush1.msra.mxu0 0.0
        %2600 = vmatprep.subr.mxu0 0.0
        %2601 = vmatpush1.msra.mxu0 0.0
        %2602 = vmatprep.subr.mxu0 0.0
        %2603 = vmatpush1.msra.mxu0 0.0
        %2604 = vmatprep.subr.mxu0 0.0
        %2605 = vmatpush1.msra.mxu0 0.0
        %2606 = vmatprep.subr.mxu0 0.0
        %2607 = vmatpush1.msra.mxu0 0.0
        %2608 = vmatprep.mubr.f32.mxu0 0.0
        %2609 = vmatmul.mubr.f32.gmra.mrb[0].mxu0 %v1341
        %v2610 = vpop.f32.mrb[0].mxu0
        %v2611 = vadd.f32 %v1333, %v2610
        %v2612 = vpop.f32.mrb[0].mxu0
        %2613 = vmatprep.mubr.f32.mxu0 0.0
        %2614 = vmatmul.mubr.f32.gmra.mrb[0].mxu0 %v1344
        %v2615 = vpop.f32.mrb[0].mxu0
        %v2616 = vadd.f32 %v1338, %v2615
        %v2617 = vpop.f32.mrb[0].mxu0
        %2618 = vdwg.mxu0
        %vm2619 = vcmp.ge.f32.partialorder %v2611, 0.0
        %vm2620 = vcmp.ge.f32.partialorder %v2616, 0.0
        %v2621 = vmul.f32 %v1423, %v2611
        %v2622 = vmul.f32 %v1423, %v2616
        %v2623 = vsel %vm2619, %v2611, %v2621
        %v2624 = vsel %vm2620, %v2616, %v2622
        %v2625 = vadd.f32 %v2623, %v2624
        %v2626 = vrot.slane %v2625, 4
        %v2627 = vadd.f32 %v2625, %v2626
        %v2628 = vrot.slane %v2627, 2
        %v2629 = vadd.f32 %v2627, %v2628
        %v2630 = vrot.slane %v2629, 1
        %v2631 = vadd.f32 %v2629, %v2630
        %v2632 = vmul.f32 %v2623, %v2623
        %v2633 = vmul.f32 %v2624, %v2624
        %v2634 = vadd.f32 %v2632, %v2633
        %v2635 = vrot.slane %v2634, 4
        %v2636 = vadd.f32 %v2634, %v2635
        %v2637 = vrot.slane %v2636, 2
        %v2638 = vadd.f32 %v2636, %v2637
        %v2639 = vrot.slane %v2638, 1
        %v2640 = vadd.f32 %v2638, %v2639
        %2641 = vmatprep.subr.mxu0 0.0
        %2642 = vmatpush1.msra.mxu0 %v694
        %2643 = vmatprep.subr.mxu0 0.0
        %2644 = vmatpush1.msra.mxu0 %v695
        %2645 = vmatprep.subr.mxu0 0.0
        %2646 = vmatpush1.msra.mxu0 %v696
        %2647 = vmatprep.subr.mxu0 0.0
        %2648 = vmatpush1.msra.mxu0 %v697
        %2649 = vmatprep.subr.mxu0 0.0
        %2650 = vmatpush1.msra.mxu0 %v698
        %2651 = vmatprep.subr.mxu0 0.0
        %2652 = vmatpush1.msra.mxu0 %v699
        %2653 = vmatprep.subr.mxu0 0.0
        %2654 = vmatpush1.msra.mxu0 %v700
        %2655 = vmatprep.subr.mxu0 0.0
        %2656 = vmatpush1.msra.mxu0 %v701
        %2657 = vmatprep.subr.mxu0 0.0
        %2658 = vmatpush1.msra.mxu0 %v702
        %2659 = vmatprep.subr.mxu0 0.0
        %2660 = vmatpush1.msra.mxu0 %v703
        %2661 = vmatprep.subr.mxu0 0.0
        %2662 = vmatpush1.msra.mxu0 %v704
        %2663 = vmatprep.subr.mxu0 0.0
        %2664 = vmatpush1.msra.mxu0 %v705
        %2665 = vmatprep.subr.mxu0 0.0
        %2666 = vmatpush1.msra.mxu0 %v706
        %2667 = vmatprep.subr.mxu0 0.0
        %2668 = vmatpush1.msra.mxu0 %v707
        %2669 = vmatprep.subr.mxu0 0.0
        %2670 = vmatpush1.msra.mxu0 %v708
        %2671 = vmatprep.subr.mxu0 0.0
        %2672 = vmatpush1.msra.mxu0 %v709
        %2673 = vmatprep.subr.mxu0 0.0
        %2674 = vmatpush1.msra.mxu0 0.0
        %2675 = vmatprep.subr.mxu0 0.0
        %2676 = vmatpush1.msra.mxu0 0.0
        %2677 = vmatprep.subr.mxu0 0.0
        %2678 = vmatpush1.msra.mxu0 0.0
        %2679 = vmatprep.subr.mxu0 0.0
        %2680 = vmatpush1.msra.mxu0 0.0
        %2681 = vmatprep.subr.mxu0 0.0
        %2682 = vmatpush1.msra.mxu0 0.0
        %2683 = vmatprep.subr.mxu0 0.0
        %2684 = vmatpush1.msra.mxu0 0.0
        %2685 = vmatprep.subr.mxu0 0.0
        %2686 = vmatpush1.msra.mxu0 0.0
        %2687 = vmatprep.subr.mxu0 0.0
        %2688 = vmatpush1.msra.mxu0 0.0
        %2689 = vmatprep.subr.mxu0 0.0
        %2690 = vmatpush1.msra.mxu0 0.0
        %2691 = vmatprep.subr.mxu0 0.0
        %2692 = vmatpush1.msra.mxu0 0.0
        %2693 = vmatprep.subr.mxu0 0.0
        %2694 = vmatpush1.msra.mxu0 0.0
        %2695 = vmatprep.subr.mxu0 0.0
        %2696 = vmatpush1.msra.mxu0 0.0
        %2697 = vmatprep.subr.mxu0 0.0
        %2698 = vmatpush1.msra.mxu0 0.0
        %2699 = vmatprep.subr.mxu0 0.0
        %2700 = vmatpush1.msra.mxu0 0.0
        %2701 = vmatprep.subr.mxu0 0.0
        %2702 = vmatpush1.msra.mxu0 0.0
        %2703 = vmatprep.subr.mxu0 0.0
        %2704 = vmatpush1.msra.mxu0 0.0
        %2705 = vmatprep.mubr.f32.mxu0 0.0
        %2706 = vmatmul.mubr.f32.gmra.mrb[0].mxu0 %v2631
        %v2707 = vpop.f32.mrb[0].mxu0
        %v2708 = vadd.f32 0.0, %v2707
        %v2709 = vpop.f32.mrb[0].mxu0
        %2710 = vdwg.mxu0
        %2711 = vmatprep.subr.mxu0 0.0
        %2712 = vmatpush1.msra.mxu0 %v694
        %2713 = vmatprep.subr.mxu0 0.0
        %2714 = vmatpush1.msra.mxu0 %v695
        %2715 = vmatprep.subr.mxu0 0.0
        %2716 = vmatpush1.msra.mxu0 %v696
        %2717 = vmatprep.subr.mxu0 0.0
        %2718 = vmatpush1.msra.mxu0 %v697
        %2719 = vmatprep.subr.mxu0 0.0
        %2720 = vmatpush1.msra.mxu0 %v698
        %2721 = vmatprep.subr.mxu0 0.0
        %2722 = vmatpush1.msra.mxu0 %v699
        %2723 = vmatprep.subr.mxu0 0.0
        %2724 = vmatpush1.msra.mxu0 %v700
        %2725 = vmatprep.subr.mxu0 0.0
        %2726 = vmatpush1.msra.mxu0 %v701
        %2727 = vmatprep.subr.mxu0 0.0
        %2728 = vmatpush1.msra.mxu0 %v702
        %2729 = vmatprep.subr.mxu0 0.0
        %2730 = vmatpush1.msra.mxu0 %v703
        %2731 = vmatprep.subr.mxu0 0.0
        %2732 = vmatpush1.msra.mxu0 %v704
        %2733 = vmatprep.subr.mxu0 0.0
        %2734 = vmatpush1.msra.mxu0 %v705
        %2735 = vmatprep.subr.mxu0 0.0
        %2736 = vmatpush1.msra.mxu0 %v706
        %2737 = vmatprep.subr.mxu0 0.0
        %2738 = vmatpush1.msra.mxu0 %v707
        %2739 = vmatprep.subr.mxu0 0.0
        %2740 = vmatpush1.msra.mxu0 %v708
        %2741 = vmatprep.subr.mxu0 0.0
        %2742 = vmatpush1.msra.mxu0 %v709
        %2743 = vmatprep.subr.mxu0 0.0
        %2744 = vmatpush1.msra.mxu0 0.0
        %2745 = vmatprep.subr.mxu0 0.0
        %2746 = vmatpush1.msra.mxu0 0.0
        %2747 = vmatprep.subr.mxu0 0.0
        %2748 = vmatpush1.msra.mxu0 0.0
        %2749 = vmatprep.subr.mxu0 0.0
        %2750 = vmatpush1.msra.mxu0 0.0
        %2751 = vmatprep.subr.mxu0 0.0
        %2752 = vmatpush1.msra.mxu0 0.0
        %2753 = vmatprep.subr.mxu0 0.0
        %2754 = vmatpush1.msra.mxu0 0.0
        %2755 = vmatprep.subr.mxu0 0.0
        %2756 = vmatpush1.msra.mxu0 0.0
        %2757 = vmatprep.subr.mxu0 0.0
        %2758 = vmatpush1.msra.mxu0 0.0
        %2759 = vmatprep.subr.mxu0 0.0
        %2760 = vmatpush1.msra.mxu0 0.0
        %2761 = vmatprep.subr.mxu0 0.0
        %2762 = vmatpush1.msra.mxu0 0.0
        %2763 = vmatprep.subr.mxu0 0.0
        %2764 = vmatpush1.msra.mxu0 0.0
        %2765 = vmatprep.subr.mxu0 0.0
        %2766 = vmatpush1.msra.mxu0 0.0
        %2767 = vmatprep.subr.mxu0 0.0
        %2768 = vmatpush1.msra.mxu0 0.0
        %2769 = vmatprep.subr.mxu0 0.0
        %2770 = vmatpush1.msra.mxu0 0.0
        %2771 = vmatprep.subr.mxu0 0.0
        %2772 = vmatpush1.msra.mxu0 0.0
        %2773 = vmatprep.subr.mxu0 0.0
        %2774 = vmatpush1.msra.mxu0 0.0
        %2775 = vmatprep.mubr.f32.mxu0 0.0
        %2776 = vmatmul.mubr.f32.gmra.mrb[0].mxu0 %v2640
        %v2777 = vpop.f32.mrb[0].mxu0
        %v2778 = vadd.f32 0.0, %v2777
        %v2779 = vpop.f32.mrb[0].mxu0
        %2780 = vdwg.mxu0
        %v2781 = vmul.f32 %v2708, %v710
        %v2782 = vmul.f32 %v2778, %v710
        %v2783 = vmul.f32 %v2781, %v2781
        %v2784 = vsub.f32 %v2782, %v2783
        %v2785 = vlaneseq
        %v2786 = vshrl.u32 %v2785, 7
        %v2787 = vsub.s32 0, %v2786
        %v2788 = vrot.slane %v2781, %v2787
        %v2789 = vsub.f32 %v2623, %v2788
        %v2790 = vsub.f32 %v2624, %v2788
        %v2791 = vrsqrt.pop %v2784
        %v2792 = vlaneseq
        %v2793 = vshrl.u32 %v2792, 7
        %v2794 = vsub.s32 0, %v2793
        %v2795 = vrot.slane %v2791, %v2794
        %v2796 = vmul.f32 %v2789, %v2795
        %v2797 = vmul.f32 %v2790, %v2795
        %2798 = vrot.lane.b32.xlu0 %v2796, 2
        %v2799 = vpop.permute.xlu0 %2798
        %2800 = vrot.lane.b32.xlu0 %v2797, 2
        %v2801 = vpop.permute.xlu0 %2800
        %v2802 = vsel %vm1613, %v2799, 0.0
        %v2803 = vsel %vm1613, %v2801, 0.0
        %v2804 = vmul.f32 %v2802, %v1619
        %v2805 = vmul.f32 %v2803, %v1624
        %v2806 = vmul.f32 %v2796, %v1630
        %v2807 = vmul.f32 %v2797, %v1634
        %v2808 = vadd.f32 %v2804, %v2806
        %v2809 = vadd.f32 %v2805, %v2807
        %2810 = vrot.lane.b32.xlu0 %v2796, 126
        %v2811 = vpop.permute.xlu0 %2810
        %2812 = vrot.lane.b32.xlu0 %v2797, 126
        %v2813 = vpop.permute.xlu0 %2812
        %v2814 = vsel %vm1646, %v2811, 0.0
        %v2815 = vsel %vm1646, %v2813, 0.0
        %v2816 = vmul.f32 %v2814, %v1651
        %v2817 = vmul.f32 %v2815, %v1655
        %v2818 = vadd.f32 %v2808, %v2816
        %v2819 = vadd.f32 %v2809, %v2817
        %v2820 = vadd.f32 %v2818, %v1664
        %v2821 = vadd.f32 %v2819, %v1669
        %vm2822 = vcmp.ge.f32.partialorder %v2820, 0.0
        %vm2823 = vcmp.ge.f32.partialorder %v2821, 0.0
        %v2824 = vmul.f32 %v1675, %v2820
        %v2825 = vmul.f32 %v1675, %v2821
        %v2826 = vsel %vm2822, %v2820, %v2824
        %v2827 = vsel %vm2823, %v2821, %v2825
        %v2828 = vadd.f32 %v2826, %v2827
        %v2829 = vrot.slane %v2828, 4
        %v2830 = vadd.f32 %v2828, %v2829
        %v2831 = vrot.slane %v2830, 2
        %v2832 = vadd.f32 %v2830, %v2831
        %v2833 = vrot.slane %v2832, 1
        %v2834 = vadd.f32 %v2832, %v2833
        %v2835 = vmul.f32 %v2826, %v2826
        %v2836 = vmul.f32 %v2827, %v2827
        %v2837 = vadd.f32 %v2835, %v2836
        %v2838 = vrot.slane %v2837, 4
        %v2839 = vadd.f32 %v2837, %v2838
        %v2840 = vrot.slane %v2839, 2
        %v2841 = vadd.f32 %v2839, %v2840
        %v2842 = vrot.slane %v2841, 1
        %v2843 = vadd.f32 %v2841, %v2842
        %2844 = vmatprep.subr.mxu0 0.0
        %2845 = vmatpush1.msra.mxu0 %v694
        %2846 = vmatprep.subr.mxu0 0.0
        %2847 = vmatpush1.msra.mxu0 %v695
        %2848 = vmatprep.subr.mxu0 0.0
        %2849 = vmatpush1.msra.mxu0 %v696
        %2850 = vmatprep.subr.mxu0 0.0
        %2851 = vmatpush1.msra.mxu0 %v697
        %2852 = vmatprep.subr.mxu0 0.0
        %2853 = vmatpush1.msra.mxu0 %v698
        %2854 = vmatprep.subr.mxu0 0.0
        %2855 = vmatpush1.msra.mxu0 %v699
        %2856 = vmatprep.subr.mxu0 0.0
        %2857 = vmatpush1.msra.mxu0 %v700
        %2858 = vmatprep.subr.mxu0 0.0
        %2859 = vmatpush1.msra.mxu0 %v701
        %2860 = vmatprep.subr.mxu0 0.0
        %2861 = vmatpush1.msra.mxu0 %v702
        %2862 = vmatprep.subr.mxu0 0.0
        %2863 = vmatpush1.msra.mxu0 %v703
        %2864 = vmatprep.subr.mxu0 0.0
        %2865 = vmatpush1.msra.mxu0 %v704
        %2866 = vmatprep.subr.mxu0 0.0
        %2867 = vmatpush1.msra.mxu0 %v705
        %2868 = vmatprep.subr.mxu0 0.0
        %2869 = vmatpush1.msra.mxu0 %v706
        %2870 = vmatprep.subr.mxu0 0.0
        %2871 = vmatpush1.msra.mxu0 %v707
        %2872 = vmatprep.subr.mxu0 0.0
        %2873 = vmatpush1.msra.mxu0 %v708
        %2874 = vmatprep.subr.mxu0 0.0
        %2875 = vmatpush1.msra.mxu0 %v709
        %2876 = vmatprep.subr.mxu0 0.0
        %2877 = vmatpush1.msra.mxu0 0.0
        %2878 = vmatprep.subr.mxu0 0.0
        %2879 = vmatpush1.msra.mxu0 0.0
        %2880 = vmatprep.subr.mxu0 0.0
        %2881 = vmatpush1.msra.mxu0 0.0
        %2882 = vmatprep.subr.mxu0 0.0
        %2883 = vmatpush1.msra.mxu0 0.0
        %2884 = vmatprep.subr.mxu0 0.0
        %2885 = vmatpush1.msra.mxu0 0.0
        %2886 = vmatprep.subr.mxu0 0.0
        %2887 = vmatpush1.msra.mxu0 0.0
        %2888 = vmatprep.subr.mxu0 0.0
        %2889 = vmatpush1.msra.mxu0 0.0
        %2890 = vmatprep.subr.mxu0 0.0
        %2891 = vmatpush1.msra.mxu0 0.0
        %2892 = vmatprep.subr.mxu0 0.0
        %2893 = vmatpush1.msra.mxu0 0.0
        %2894 = vmatprep.subr.mxu0 0.0
        %2895 = vmatpush1.msra.mxu0 0.0
        %2896 = vmatprep.subr.mxu0 0.0
        %2897 = vmatpush1.msra.mxu0 0.0
        %2898 = vmatprep.subr.mxu0 0.0
        %2899 = vmatpush1.msra.mxu0 0.0
        %2900 = vmatprep.subr.mxu0 0.0
        %2901 = vmatpush1.msra.mxu0 0.0
        %2902 = vmatprep.subr.mxu0 0.0
        %2903 = vmatpush1.msra.mxu0 0.0
        %2904 = vmatprep.subr.mxu0 0.0
        %2905 = vmatpush1.msra.mxu0 0.0
        %2906 = vmatprep.subr.mxu0 0.0
        %2907 = vmatpush1.msra.mxu0 0.0
        %2908 = vmatprep.mubr.f32.mxu0 0.0
        %2909 = vmatmul.mubr.f32.gmra.mrb[0].mxu0 %v2834
        %v2910 = vpop.f32.mrb[0].mxu0
        %v2911 = vadd.f32 0.0, %v2910
        %v2912 = vpop.f32.mrb[0].mxu0
        %2913 = vdwg.mxu0
        %2914 = vmatprep.subr.mxu0 0.0
        %2915 = vmatpush1.msra.mxu0 %v694
        %2916 = vmatprep.subr.mxu0 0.0
        %2917 = vmatpush1.msra.mxu0 %v695
        %2918 = vmatprep.subr.mxu0 0.0
        %2919 = vmatpush1.msra.mxu0 %v696
        %2920 = vmatprep.subr.mxu0 0.0
        %2921 = vmatpush1.msra.mxu0 %v697
        %2922 = vmatprep.subr.mxu0 0.0
        %2923 = vmatpush1.msra.mxu0 %v698
        %2924 = vmatprep.subr.mxu0 0.0
        %2925 = vmatpush1.msra.mxu0 %v699
        %2926 = vmatprep.subr.mxu0 0.0
        %2927 = vmatpush1.msra.mxu0 %v700
        %2928 = vmatprep.subr.mxu0 0.0
        %2929 = vmatpush1.msra.mxu0 %v701
        %2930 = vmatprep.subr.mxu0 0.0
        %2931 = vmatpush1.msra.mxu0 %v702
        %2932 = vmatprep.subr.mxu0 0.0
        %2933 = vmatpush1.msra.mxu0 %v703
        %2934 = vmatprep.subr.mxu0 0.0
        %2935 = vmatpush1.msra.mxu0 %v704
        %2936 = vmatprep.subr.mxu0 0.0
        %2937 = vmatpush1.msra.mxu0 %v705
        %2938 = vmatprep.subr.mxu0 0.0
        %2939 = vmatpush1.msra.mxu0 %v706
        %2940 = vmatprep.subr.mxu0 0.0
        %2941 = vmatpush1.msra.mxu0 %v707
        %2942 = vmatprep.subr.mxu0 0.0
        %2943 = vmatpush1.msra.mxu0 %v708
        %2944 = vmatprep.subr.mxu0 0.0
        %2945 = vmatpush1.msra.mxu0 %v709
        %2946 = vmatprep.subr.mxu0 0.0
        %2947 = vmatpush1.msra.mxu0 0.0
        %2948 = vmatprep.subr.mxu0 0.0
        %2949 = vmatpush1.msra.mxu0 0.0
        %2950 = vmatprep.subr.mxu0 0.0
        %2951 = vmatpush1.msra.mxu0 0.0
        %2952 = vmatprep.subr.mxu0 0.0
        %2953 = vmatpush1.msra.mxu0 0.0
        %2954 = vmatprep.subr.mxu0 0.0
        %2955 = vmatpush1.msra.mxu0 0.0
        %2956 = vmatprep.subr.mxu0 0.0
        %2957 = vmatpush1.msra.mxu0 0.0
        %2958 = vmatprep.subr.mxu0 0.0
        %2959 = vmatpush1.msra.mxu0 0.0
        %2960 = vmatprep.subr.mxu0 0.0
        %2961 = vmatpush1.msra.mxu0 0.0
        %2962 = vmatprep.subr.mxu0 0.0
        %2963 = vmatpush1.msra.mxu0 0.0
        %2964 = vmatprep.subr.mxu0 0.0
        %2965 = vmatpush1.msra.mxu0 0.0
        %2966 = vmatprep.subr.mxu0 0.0
        %2967 = vmatpush1.msra.mxu0 0.0
        %2968 = vmatprep.subr.mxu0 0.0
        %2969 = vmatpush1.msra.mxu0 0.0
        %2970 = vmatprep.subr.mxu0 0.0
        %2971 = vmatpush1.msra.mxu0 0.0
        %2972 = vmatprep.subr.mxu0 0.0
        %2973 = vmatpush1.msra.mxu0 0.0
        %2974 = vmatprep.subr.mxu0 0.0
        %2975 = vmatpush1.msra.mxu0 0.0
        %2976 = vmatprep.subr.mxu0 0.0
        %2977 = vmatpush1.msra.mxu0 0.0
        %2978 = vmatprep.mubr.f32.mxu0 0.0
        %2979 = vmatmul.mubr.f32.gmra.mrb[0].mxu0 %v2843
        %v2980 = vpop.f32.mrb[0].mxu0
        %v2981 = vadd.f32 0.0, %v2980
        %v2982 = vpop.f32.mrb[0].mxu0
        %2983 = vdwg.mxu0
        %v2984 = vmul.f32 %v2911, %v710
        %v2985 = vmul.f32 %v2981, %v710
        %v2986 = vmul.f32 %v2984, %v2984
        %v2987 = vsub.f32 %v2985, %v2986
        %v2988 = vlaneseq
        %v2989 = vshrl.u32 %v2988, 7
        %v2990 = vsub.s32 0, %v2989
        %v2991 = vrot.slane %v2984, %v2990
        %v2992 = vsub.f32 %v2826, %v2991
        %v2993 = vsub.f32 %v2827, %v2991
        %v2994 = vrsqrt.pop %v2987
        %v2995 = vlaneseq
        %v2996 = vshrl.u32 %v2995, 7
        %v2997 = vsub.s32 0, %v2996
        %v2998 = vrot.slane %v2994, %v2997
        %v2999 = vmul.f32 %v2992, %v2998
        %v3000 = vmul.f32 %v2993, %v2998
        %s3001 = scalar_lea.vmem %s12, 8
        %v3002 = vld [vmem:[%s3001] sm:$0xff]
        %s3003 = scalar_lea.vmem %s13, 8
        %v3004 = vld [vmem:[%s3003] sm:$0xff]
        %3006 = vset.pattern.permute.xlu0 0
        %3007 = vperm.xlu0 %3006, %v3004
        %v3008 = vpop.permute.xlu0 %3007
        %v3011 = vsel %vm1247, %v3002, 0
        %3013 = vmatprep.subr.mxu0 0.0
        %3014 = vmatpush1.msra.mxu0 %v2999
        %3015 = vmatprep.subr.mxu0 0.0
        %3016 = vmatpush1.msra.mxu0 %v3000
        %3017 = vmatprep.subr.mxu0 0.0
        %3018 = vmatpush1.msra.mxu0 0.0
        %3019 = vmatprep.subr.mxu0 0.0
        %3020 = vmatpush1.msra.mxu0 0.0
        %3021 = vmatprep.subr.mxu0 0.0
        %3022 = vmatpush1.msra.mxu0 0.0
        %3023 = vmatprep.subr.mxu0 0.0
        %3024 = vmatpush1.msra.mxu0 0.0
        %3025 = vmatprep.subr.mxu0 0.0
        %3026 = vmatpush1.msra.mxu0 0.0
        %3027 = vmatprep.subr.mxu0 0.0
        %3028 = vmatpush1.msra.mxu0 0.0
        %3029 = vmatprep.subr.mxu0 0.0
        %3030 = vmatpush1.msra.mxu0 0.0
        %3031 = vmatprep.subr.mxu0 0.0
        %3032 = vmatpush1.msra.mxu0 0.0
        %3033 = vmatprep.subr.mxu0 0.0
        %3034 = vmatpush1.msra.mxu0 0.0
        %3035 = vmatprep.subr.mxu0 0.0
        %3036 = vmatpush1.msra.mxu0 0.0
        %3037 = vmatprep.subr.mxu0 0.0
        %3038 = vmatpush1.msra.mxu0 0.0
        %3039 = vmatprep.subr.mxu0 0.0
        %3040 = vmatpush1.msra.mxu0 0.0
        %3041 = vmatprep.subr.mxu0 0.0
        %3042 = vmatpush1.msra.mxu0 0.0
        %3043 = vmatprep.subr.mxu0 0.0
        %3044 = vmatpush1.msra.mxu0 0.0
        %3045 = vmatprep.subr.mxu0 0.0
        %3046 = vmatpush1.msra.mxu0 0.0
        %3047 = vmatprep.subr.mxu0 0.0
        %3048 = vmatpush1.msra.mxu0 0.0
        %3049 = vmatprep.subr.mxu0 0.0
        %3050 = vmatpush1.msra.mxu0 0.0
        %3051 = vmatprep.subr.mxu0 0.0
        %3052 = vmatpush1.msra.mxu0 0.0
        %3053 = vmatprep.subr.mxu0 0.0
        %3054 = vmatpush1.msra.mxu0 0.0
        %3055 = vmatprep.subr.mxu0 0.0
        %3056 = vmatpush1.msra.mxu0 0.0
        %3057 = vmatprep.subr.mxu0 0.0
        %3058 = vmatpush1.msra.mxu0 0.0
        %3059 = vmatprep.subr.mxu0 0.0
        %3060 = vmatpush1.msra.mxu0 0.0
        %3061 = vmatprep.subr.mxu0 0.0
        %3062 = vmatpush1.msra.mxu0 0.0
        %3063 = vmatprep.subr.mxu0 0.0
        %3064 = vmatpush1.msra.mxu0 0.0
        %3065 = vmatprep.subr.mxu0 0.0
        %3066 = vmatpush1.msra.mxu0 0.0
        %3067 = vmatprep.subr.mxu0 0.0
        %3068 = vmatpush1.msra.mxu0 0.0
        %3069 = vmatprep.subr.mxu0 0.0
        %3070 = vmatpush1.msra.mxu0 0.0
        %3071 = vmatprep.subr.mxu0 0.0
        %3072 = vmatpush1.msra.mxu0 0.0
        %3073 = vmatprep.subr.mxu0 0.0
        %3074 = vmatpush1.msra.mxu0 0.0
        %3075 = vmatprep.subr.mxu0 0.0
        %3076 = vmatpush1.msra.mxu0 0.0
        %3077 = vmatprep.mubr.f32.mxu0 0.0
        %3078 = vmatmul.mubr.f32.gmra.mrb[0].mxu0 %v3011
        %v3079 = vpop.f32.mrb[0].mxu0
        %v3080 = vadd.f32 %v3008, %v3079
        %v3081 = vpop.f32.mrb[0].mxu0
        %3082 = vdwg.mxu0
        %v3083 = vadd.f32 %v2541, %v3080
        %s3084 = sld [smem:[#allocation2 + $0x4]]
        %vm3085 = vcmp.ge.f32.partialorder %v3083, 0.0
        %v3086 = vstv %s3084
        %v3087 = vmul.f32 %v3086, %v3083
        %v3088 = vsel %vm3085, %v3083, %v3087
        %v3089 = vld [vmem:[%s14] sm:$0xff]
        %v3090 = vld [vmem:[%s15] sm:$0xff]
        %3092 = vset.pattern.permute.xlu0 0
        %3093 = vperm.xlu0 %3092, %v3090
        %v3094 = vpop.permute.xlu0 %3093
        %v3097 = vsel %vm620, %v3089, 0
        %3099 = vmatprep.subr.mxu0 0.0
        %3100 = vmatpush1.msra.mxu0 %v3088
        %3101 = vmatprep.subr.mxu0 0.0
        %3102 = vmatpush1.msra.mxu0 0.0
        %3103 = vmatprep.subr.mxu0 0.0
        %3104 = vmatpush1.msra.mxu0 0.0
        %3105 = vmatprep.subr.mxu0 0.0
        %3106 = vmatpush1.msra.mxu0 0.0
        %3107 = vmatprep.subr.mxu0 0.0
        %3108 = vmatpush1.msra.mxu0 0.0
        %3109 = vmatprep.subr.mxu0 0.0
        %3110 = vmatpush1.msra.mxu0 0.0
        %3111 = vmatprep.subr.mxu0 0.0
        %3112 = vmatpush1.msra.mxu0 0.0
        %3113 = vmatprep.subr.mxu0 0.0
        %3114 = vmatpush1.msra.mxu0 0.0
        %3115 = vmatprep.subr.mxu0 0.0
        %3116 = vmatpush1.msra.mxu0 0.0
        %3117 = vmatprep.subr.mxu0 0.0
        %3118 = vmatpush1.msra.mxu0 0.0
        %3119 = vmatprep.subr.mxu0 0.0
        %3120 = vmatpush1.msra.mxu0 0.0
        %3121 = vmatprep.subr.mxu0 0.0
        %3122 = vmatpush1.msra.mxu0 0.0
        %3123 = vmatprep.subr.mxu0 0.0
        %3124 = vmatpush1.msra.mxu0 0.0
        %3125 = vmatprep.subr.mxu0 0.0
        %3126 = vmatpush1.msra.mxu0 0.0
        %3127 = vmatprep.subr.mxu0 0.0
        %3128 = vmatpush1.msra.mxu0 0.0
        %3129 = vmatprep.subr.mxu0 0.0
        %3130 = vmatpush1.msra.mxu0 0.0
        %3131 = vmatprep.subr.mxu0 0.0
        %3132 = vmatpush1.msra.mxu0 0.0
        %3133 = vmatprep.subr.mxu0 0.0
        %3134 = vmatpush1.msra.mxu0 0.0
        %3135 = vmatprep.subr.mxu0 0.0
        %3136 = vmatpush1.msra.mxu0 0.0
        %3137 = vmatprep.subr.mxu0 0.0
        %3138 = vmatpush1.msra.mxu0 0.0
        %3139 = vmatprep.subr.mxu0 0.0
        %3140 = vmatpush1.msra.mxu0 0.0
        %3141 = vmatprep.subr.mxu0 0.0
        %3142 = vmatpush1.msra.mxu0 0.0
        %3143 = vmatprep.subr.mxu0 0.0
        %3144 = vmatpush1.msra.mxu0 0.0
        %3145 = vmatprep.subr.mxu0 0.0
        %3146 = vmatpush1.msra.mxu0 0.0
        %3147 = vmatprep.subr.mxu0 0.0
        %3148 = vmatpush1.msra.mxu0 0.0
        %3149 = vmatprep.subr.mxu0 0.0
        %3150 = vmatpush1.msra.mxu0 0.0
        %3151 = vmatprep.subr.mxu0 0.0
        %3152 = vmatpush1.msra.mxu0 0.0
        %3153 = vmatprep.subr.mxu0 0.0
        %3154 = vmatpush1.msra.mxu0 0.0
        %3155 = vmatprep.subr.mxu0 0.0
        %3156 = vmatpush1.msra.mxu0 0.0
        %3157 = vmatprep.subr.mxu0 0.0
        %3158 = vmatpush1.msra.mxu0 0.0
        %3159 = vmatprep.subr.mxu0 0.0
        %3160 = vmatpush1.msra.mxu0 0.0
        %3161 = vmatprep.subr.mxu0 0.0
        %3162 = vmatpush1.msra.mxu0 0.0
        %3163 = vmatprep.mubr.f32.mxu0 0.0
        %3164 = vmatmul.mubr.f32.gmra.mrb[0].mxu0 %v3097
        %v3165 = vpop.f32.mrb[0].mxu0
        %v3166 = vadd.f32 %v3094, %v3165
        %v3167 = vpop.f32.mrb[0].mxu0
        %3168 = vdwg.mxu0
        %v3169 = vsub.f32 0.0, %v3166
        %v3170 = vmul.f32 %v3169, 1.442695
        %v3171 = vpow.pop %v3170
        %v3172 = vadd.f32 %v3171, 1.0
        %v3173 = vrcp.pop %v3172
        %v3174 = vmul.f32 1.0, %v3173
        %v3175 = vmul.f32 %v585, %v3174
        %3176 = vst [vmem:[%s580] sm:$0xff] %v3175
        %s3177 = sand.u32 %s424, 1
        %s3178 = scalar_lea.sflag [#allocation3], %s3177
        %s3179 = sand.u32 %s424, 1
        %s3180 = smul.addr %s3179, 8
        %s3181 = scalar_lea.vmem [#allocation5], %s3180
        // Predicated region
        $region97: #{separation_forward.1} parent=91 // pred_check
          %p3182 = pneg %p434
        $region98: #{separation_forward.1} parent=91 // pred_check_branch
          %3184 = sbr.rel (%p3182) target = $region100
        $region99: #{separation_forward.1} parent=91 // pred_region
          %s3186 = ssub.s32 128, 128
          %3187 = vsyncadd %s3178, %s3186
          %s3188 = smul.addr %s33, 128
          %s3189 = scalar_lea.hbm %s18, %s3188
          %s3191 = sshll.u32 %s3181, 4
          %s3192 = int_to_ptr.vmem [resolvable:$true] %s3191
          %3194 = dma.vmem_to_hbm [thread:$0]  %s3192, 128, %s3189, %s3178
        $region100: #{separation_forward.1} parent=91 // pred_fallthru
          _
      $region92: #{separation_forward.1} parent=5 // pred_fallthru
        _
      %p3195 = scmp.le.s32.totalorder 2, %s28
      // Predicated region
      $region101: #{separation_forward.1} parent=5 // pred_check
        %p3196 = pneg %p3195
      $region102: #{separation_forward.1} parent=5 // pred_check_branch
        %3198 = sbr.rel (%p3196) target = $region104
      $region103: #{separation_forward.1} parent=5 // pred_region
        %s3199 = ssub.s32 %s28, 2
        // Predicated region
        $region105: #{separation_forward.1} parent=103 // pred_check
          %p3200 = pneg %p440
        $region106: #{separation_forward.1} parent=103 // pred_check_branch
          %3202 = sbr.rel (%p3200) target = $region108
        $region107: #{separation_forward.1} parent=103 // pred_region
          %s3203 = sand.u32 %s425, 1
          %s3204 = scalar_lea.sflag [#allocation3], %s3203
          %s3205 = sand.u32 %s425, 1
          %s3206 = smul.addr %s3205, 8
          %s3207 = scalar_lea.vmem [#allocation5], %s3206
          %3208 = dma.done %s3204, 128
        $region108: #{separation_forward.1} parent=103 // pred_fallthru
          _
      $region104: #{separation_forward.1} parent=5 // pred_fallthru
        _
    $region6: #{separation_forward.1} parent=1 // loop_footer
      %s32 = sadd.s32 1, %s28
    $region7: #{separation_forward.1} parent=1 // loop_footer_branch
      %27 = sbr.rel target = $region3
    $region8: #{separation_forward.1} parent=1 // loop_exit
      _
    %3209 = vsyncpa [#allocation3], 1
    %s3210 = scalar_lea.sflag [#allocation3], 1
    %3211 = vsyncpa %s3210, 1
    %3212 = vsyncpa [#allocation4], 1
    %s3213 = scalar_lea.sflag [#allocation4], 1
    %3214 = vsyncpa %s3213, 1

</llo_original>
